<compile_context>
chip_gen: v6e
topology: v6e:2x2x1
jax: 0.10.0
libtpu: 0.0.40
codegen_flags: <defaults>
</compile_context>

<pallas_src>
import functools

import numpy as np
import jax
import jax.numpy as jnp
from jax.experimental import pallas as pl
from jax.experimental.pallas import tpu as pltpu


def _dcl_heads_kernel(x_ref, w_ref, m_ref, s_ref, bvec_ref, out_ref,
                      *, tb, npad, mask_off, hw4):
    """Fused DCL heads for a tile of TB images.

    x_ref    : (TB*HW, C)    feature rows (channels-last) for TB images
    w_ref    : (C, NPAD)     fused weight [classifier | swap | w_mask x HW4 | 0-pad]
    m_ref    : (TB*HW, NPAD) per-lane reduction weights:
                             1/HW on head lanes, 2x2-pool weights on mask lanes
    s_ref    : (TB, TB*HW)   block-diagonal per-image segment-sum matrix
    bvec_ref : (1, NPAD)     Convmask bias on the mask lanes, 0 elsewhere
    out_ref  : (TB, NPAD)    packed lane-dense per-image output:
                             [cls | swap | tanh(avgpool2(mask)) | pad]
    """
    # One big MXU pass: per-pixel scores for all heads.  The 1x1-conv mask
    # response is replicated across HW4 lanes so each pooled mask value lands
    # in its own lane after the segment reduction below.
    y = jnp.dot(x_ref[...], w_ref[...],
                preferred_element_type=jnp.float32)          # (TB*HW, NPAD) f32

    # Per-lane reduction weights (VPU) + per-image segment sum (tiny MXU
    # matmul): head lanes get the global average pool, mask lanes get the
    # 2x2/stride-2 average pool.  Result is one lane-dense (TB, NPAD) slab.
    g = y * m_ref[...]                                       # (TB*HW, NPAD)
    z = jnp.dot(s_ref[...], g,
                preferred_element_type=jnp.float32)          # (TB, NPAD)

    # (+bias, tanh) epilogue only on the mask lanes.
    lane = jax.lax.broadcasted_iota(jnp.int32, (tb, npad), 1)
    is_mask = (lane >= mask_off) & (lane < mask_off + hw4)
    out_ref[...] = jnp.where(is_mask, jnp.tanh(z + bvec_ref[...]), z)


def _make_pool2_rows(H, W):
    """(HW4, HW) matrix implementing nn.AvgPool2d(2, stride=2), floor mode."""
    H2, W2 = H // 2, W // 2
    pool = np.zeros((H2 * W2, H * W), np.float32)
    for i in range(H2):
        for j in range(W2):
            q = i * W2 + j
            for di in range(2):
                for dj in range(2):
                    pool[q, (2 * i + di) * W + (2 * j + dj)] = 0.25
    return pool


def _choose_batch_tile(B, bytes_per_img, vmem_budget=16 * 1024 * 1024):
    """Batch tile: 8-aligned (keeps the (TB, 128) output block sublane-aligned),
    divides B, double-buffered feature DMA fits the VMEM budget, and leaves
    >= 2 grid steps when possible so v7x's two TensorCores both get work."""
    cands = [tb for tb in (32, 16, 8)
             if B % tb == 0 and 2 * tb * bytes_per_img <= vmem_budget]
    for tb in cands:
        if B // tb >= 2:
            return tb
    if cands:
        return cands[-1]
    # TODO(synk): batches not divisible by 8 fall back to a single grid step.
    return B


def main_model_forward(feat_nhwc, w_cls, w_swap, w_mask, b_mask):
    """MainModel.forward (use_dcl=True) starting from backbone features.

    feat_nhwc : (B, H, W, C) backbone feature map, channels-last, native dtype
                (f32 or bf16 -- it is fed to the kernel WITHOUT a wrapper cast).
    w_cls     : (numcls, C)  classifier weight       (Linear, no bias)
    w_swap    : (NS, C)      classifier_swap weight  (Linear, no bias)
    w_mask    : (1, C, 1, 1) Convmask 1x1 conv weight
    b_mask    : (1,)         Convmask bias
    Returns [classifier_out (B,numcls), classifier_swap_out (B,NS), mask (B,HW4)].
    """
    B, H, W, C = feat_nhwc.shape
    HW = H * W
    H2, W2 = H // 2, W // 2
    HW4 = H2 * W2
    NC = w_cls.shape[0]
    NS = w_swap.shape[0]
    mask_off = NC + NS
    n_lanes = mask_off + HW4
    NPAD = ((n_lanes + 127) // 128) * 128        # packed output width (>= 128)

    itemsize = jnp.dtype(feat_nhwc.dtype).itemsize
    TB = _choose_batch_tile(B, HW * C * itemsize)
    grid = (B // TB,)

    # Features: reshape only (free, contiguous).  No dtype cast here -- a
    # wrapper-side cast would add a full extra HBM pass on the dominant input.
    x2d = feat_nhwc.reshape(B * HW, C)

    # Fused weight (C, NPAD): [classifier | swap | w_mask replicated HW4x | 0].
    w_m_col = w_mask.reshape(C, 1).astype(jnp.float32)
    w_all = jnp.concatenate(
        [jnp.transpose(w_cls).astype(jnp.float32),
         jnp.transpose(w_swap).astype(jnp.float32),
         jnp.tile(w_m_col, (1, HW4))], axis=1)
    w_all = jnp.pad(w_all, ((0, 0), (0, NPAD - n_lanes))).astype(feat_nhwc.dtype)

    # Per-lane reduction weights M (TB*HW, NPAD): global-average on head lanes,
    # 2x2/stride-2 pool (floor mode) on mask lanes.  Host-built constant.
    pool = _make_pool2_rows(H, W)                         # (HW4, HW)
    m_img = np.zeros((HW, NPAD), np.float32)
    m_img[:, :mask_off] = 1.0 / HW
    m_img[:, mask_off:mask_off + HW4] = pool.T
    m_tiled = jnp.asarray(np.tile(m_img, (TB, 1)))        # (TB*HW, NPAD)

    # Block-diagonal per-image segment-sum matrix S (TB, TB*HW).
    s_mat = jnp.asarray(np.kron(np.eye(TB, dtype=np.float32),
                                np.ones((1, HW), np.float32)))

    # Convmask bias broadcast into the mask lanes (pool weights sum to 1, so
    # adding the bias after pooling is exact).
    bvec = jnp.zeros((1, NPAD), jnp.float32)
    bvec = bvec.at[:, mask_off:mask_off + HW4].set(b_mask.reshape(1, 1))

    kernel = functools.partial(_dcl_heads_kernel, tb=TB, npad=NPAD,
                               mask_off=mask_off, hw4=HW4)

    flops = 2 * B * HW * C * NPAD + 2 * B * TB * HW * NPAD
    bytes_acc = (B * HW * C * itemsize + C * NPAD * itemsize
                 + TB * HW * NPAD * 4 + TB * TB * HW * 4
                 + NPAD * 4 + B * NPAD * 4)

    out = pl.pallas_call(
        kernel,
        out_shape=jax.ShapeDtypeStruct((B, NPAD), jnp.float32),
        grid_spec=pltpu.PrefetchScalarGridSpec(
            num_scalar_prefetch=0,
            grid=grid,
            in_specs=[
                pl.BlockSpec((TB * HW, C), lambda b: (b, 0)),      # features
                pl.BlockSpec((C, NPAD), lambda b: (0, 0)),         # fused weight
                pl.BlockSpec((TB * HW, NPAD), lambda b: (0, 0)),   # reduce weights
                pl.BlockSpec((TB, TB * HW), lambda b: (0, 0)),     # segment sum
                pl.BlockSpec((1, NPAD), lambda b: (0, 0)),         # mask bias row
            ],
            out_specs=pl.BlockSpec((TB, NPAD), lambda b: (b, 0)),
        ),
        compiler_params=pltpu.CompilerParams(
            dimension_semantics=("parallel",),
            vmem_limit_bytes=32 * 1024 * 1024),
        cost_estimate=pl.CostEstimate(
            flops=int(flops),
            transcendentals=int(B * NPAD),
            bytes_accessed=int(bytes_acc)),
    )(x2d, w_all, m_tiled, s_mat, bvec)

    return [out[:, :NC], out[:, NC:mask_off], out[:, mask_off:mask_off + HW4]]


def _reference(feat_nhwc, w_cls, w_swap, w_mask, b_mask):
    """float64 numpy reference of the same forward (correctness oracle)."""
    x = np.asarray(feat_nhwc, np.float64)
    wc = np.asarray(w_cls, np.float64)
    ws = np.asarray(w_swap, np.float64)
    wm = np.asarray(w_mask, np.float64).reshape(-1)
    b = np.asarray(b_mask, np.float64)[0]
    B, H, W, C = x.shape
    pooled = x.mean(axis=(1, 2))
    cls_out = pooled @ wc.T
    swap_out = pooled @ ws.T
    m = np.einsum('bhwc,c->bhw', x, wm) + b
    H2, W2 = H // 2, W // 2
    m = m[:, :2 * H2, :2 * W2].reshape(B, H2, 2, W2, 2).mean(axis=(2, 4))
    m = np.tanh(m).reshape(B, -1)
    return [cls_out, swap_out, m]


if __name__ == "__main__":
    # Backbone feature map: B=16, H=W=8, C=2048 (resnet50-style, channels-last);
    # numcls=10, cls_2 swap head = 2.  B=16 exercises the batch-blocked grid
    # (TB=8 -> 2 grid steps, both v7x TensorCores active).
    B, H, W, C = 16, 8, 8, 2048
    NUM_CLASSES, NUM_SWAP = 10, 2

    key = jax.random.PRNGKey(0)
    k_feat, k_cls, k_swap, k_mw, k_mb = jax.random.split(key, 5)
    feat = jax.random.normal(k_feat, (B, H, W, C), dtype=jnp.float32)
    w_cls = 0.02 * jax.random.normal(k_cls, (NUM_CLASSES, C), dtype=jnp.float32)
    w_swap = 0.02 * jax.random.normal(k_swap, (NUM_SWAP, C), dtype=jnp.float32)
    w_mask = 0.02 * jax.random.normal(k_mw, (1, C, 1, 1), dtype=jnp.float32)
    b_mask = 0.1 * jax.random.normal(k_mb, (1,), dtype=jnp.float32)

    refs = _reference(feat, w_cls, w_swap, w_mask, b_mask)

    # float32 path: tight-ish tolerance so lane-packing / index-map bugs
    # (which would be O(1) wrong) cannot hide.
    outs = main_model_forward(feat, w_cls, w_swap, w_mask, b_mask)
    outs = [np.asarray(jax.block_until_ready(o)) for o in outs]
    assert outs[0].shape == (B, NUM_CLASSES)
    assert outs[1].shape == (B, NUM_SWAP)
    assert outs[2].shape == (B, (H // 2) * (W // 2))
    for o, r in zip(outs, refs):
        np.testing.assert_allclose(o, r, rtol=1e-2, atol=1e-2)

    # bfloat16 feature path: simulates the backbone emitting bf16 directly
    # (halves the dominant HBM read; MXU-native on v6e/v7x).  The cast below
    # only exists to fabricate that input for the demo.
    feat16 = feat.astype(jnp.bfloat16)
    outs16 = main_model_forward(feat16, w_cls, w_swap, w_mask, b_mask)
    outs16 = [np.asarray(jax.block_until_ready(o)) for o in outs16]
    for o, r in zip(outs16, refs):
        np.testing.assert_allclose(o, r, rtol=5e-2, atol=5e-2)

    print("KERNEL_OK")
</pallas_src>

<mosaic_0001>
module attributes {stable_mosaic.version = 11 : i64} {
  func.func @_dcl_heads_kernel(%arg0: i32, %arg1: memref<512x2048xf32, #tpu.memory_space<vmem>>, %arg2: memref<2048x128xf32, #tpu.memory_space<vmem>>, %arg3: memref<512x128xf32, #tpu.memory_space<vmem>>, %arg4: memref<8x512xf32, #tpu.memory_space<vmem>>, %arg5: memref<1x128xf32, #tpu.memory_space<vmem>>, %arg6: memref<8x128xf32, #tpu.memory_space<vmem>>) attributes {dimension_semantics = [#tpu.dimension_semantics<parallel>], iteration_bounds = array<i64: 2>, scalar_prefetch = 0 : i64, scratch_operands = 0 : i64, tpu.core_type = #tpu.core_type<tc>, window_params = [{transform_indices = @transform_0, window_bounds = array<i64: 512, 2048>}, {pipeline_mode = #tpu.pipeline_mode<synchronous>, transform_indices = @transform_1, window_bounds = array<i64: 2048, 128>}, {pipeline_mode = #tpu.pipeline_mode<synchronous>, transform_indices = @transform_2, window_bounds = array<i64: 512, 128>}, {pipeline_mode = #tpu.pipeline_mode<synchronous>, transform_indices = @transform_3, window_bounds = array<i64: 8, 512>}, {pipeline_mode = #tpu.pipeline_mode<synchronous>, transform_indices = @transform_4, window_bounds = array<i64: 1, 128>}, {transform_indices = @transform_5, window_bounds = array<i64: 8, 128>}]} {
    %c0 = arith.constant 0 : index
    %c0_0 = arith.constant 0 : index
    %0 = vector.load %arg1[%c0, %c0_0] : memref<512x2048xf32, #tpu.memory_space<vmem>>, vector<512x2048xf32>
    %c0_1 = arith.constant 0 : index
    %c0_2 = arith.constant 0 : index
    %1 = vector.load %arg2[%c0_1, %c0_2] : memref<2048x128xf32, #tpu.memory_space<vmem>>, vector<2048x128xf32>
    %cst = arith.constant dense<0.000000e+00> : vector<512x128xf32>
    %2 = tpu.matmul %0, %1, %cst {dimension_numbers = #tpu.dot_dimension_numbers<[1], [0], [0], [1], [0, 0, 1, 1], [], []>} : vector<512x2048xf32>, vector<2048x128xf32>, vector<512x128xf32> -> vector<512x128xf32>
    %c0_3 = arith.constant 0 : index
    %c0_4 = arith.constant 0 : index
    %3 = vector.load %arg3[%c0_3, %c0_4] : memref<512x128xf32, #tpu.memory_space<vmem>>, vector<512x128xf32>
    %4 = arith.mulf %2, %3 : vector<512x128xf32>
    %c0_5 = arith.constant 0 : index
    %c0_6 = arith.constant 0 : index
    %5 = vector.load %arg4[%c0_5, %c0_6] : memref<8x512xf32, #tpu.memory_space<vmem>>, vector<8x512xf32>
    %cst_7 = arith.constant dense<0.000000e+00> : vector<8x128xf32>
    %6 = tpu.matmul %5, %4, %cst_7 {dimension_numbers = #tpu.dot_dimension_numbers<[1], [0], [0], [1], [0, 0, 1, 1], [], []>} : vector<8x512xf32>, vector<512x128xf32>, vector<8x128xf32> -> vector<8x128xf32>
    %7 = tpu.iota {dimensions = array<i32: 1>} : vector<8x128xi32>
    %c12_i32 = arith.constant 12 : i32
    %8 = vector.broadcast %c12_i32 : i32 to vector<8x128xi32>
    %9 = arith.cmpi sge, %7, %8 : vector<8x128xi32>
    %c28_i32 = arith.constant 28 : i32
    %10 = vector.broadcast %c28_i32 : i32 to vector<8x128xi32>
    %11 = arith.cmpi slt, %7, %10 : vector<8x128xi32>
    %12 = arith.andi %9, %11 : vector<8x128xi1>
    %c0_8 = arith.constant 0 : index
    %c0_9 = arith.constant 0 : index
    %13 = vector.load %arg5[%c0_8, %c0_9] : memref<1x128xf32, #tpu.memory_space<vmem>>, vector<1x128xf32>
    %14 = vector.broadcast %13 : vector<1x128xf32> to vector<8x128xf32>
    %15 = arith.addf %6, %14 : vector<8x128xf32>
    %16 = math.tanh %15 : vector<8x128xf32>
    %17 = arith.select %12, %16, %6 : vector<8x128xi1>, vector<8x128xf32>
    %c0_10 = arith.constant 0 : index
    %c0_11 = arith.constant 0 : index
    %18 = vector.load %arg6[%c0_10, %c0_11] : memref<8x128xf32, #tpu.memory_space<vmem>>, vector<8x128xf32>
    tpu.vector_store %arg6[%c0_10, %c0_11], %17 {strides = array<i32>} : memref<8x128xf32, #tpu.memory_space<vmem>>, vector<8x128xf32>,
    return
  }
  func.func @transform_0(%arg0: i32) -> (i32, i32) {
    %c0_i32 = arith.constant 0 : i32
    %c0_i32_0 = arith.constant 0 : i32
    return %arg0, %c0_i32 : i32, i32
  }
  func.func @transform_1(%arg0: i32) -> (i32, i32) {
    %c0_i32 = arith.constant 0 : i32
    %c0_i32_0 = arith.constant 0 : i32
    %c0_i32_1 = arith.constant 0 : i32
    return %c0_i32, %c0_i32_0 : i32, i32
  }
  func.func @transform_2(%arg0: i32) -> (i32, i32) {
    %c0_i32 = arith.constant 0 : i32
    %c0_i32_0 = arith.constant 0 : i32
    %c0_i32_1 = arith.constant 0 : i32
    return %c0_i32, %c0_i32_0 : i32, i32
  }
  func.func @transform_3(%arg0: i32) -> (i32, i32) {
    %c0_i32 = arith.constant 0 : i32
    %c0_i32_0 = arith.constant 0 : i32
    %c0_i32_1 = arith.constant 0 : i32
    return %c0_i32, %c0_i32_0 : i32, i32
  }
  func.func @transform_4(%arg0: i32) -> (i32, i32) {
    %c0_i32 = arith.constant 0 : i32
    %c0_i32_0 = arith.constant 0 : i32
    %c0_i32_1 = arith.constant 0 : i32
    return %c0_i32, %c0_i32_0 : i32, i32
  }
  func.func @transform_5(%arg0: i32) -> (i32, i32) {
    %c0_i32 = arith.constant 0 : i32
    %c0_i32_0 = arith.constant 0 : i32
    return %arg0, %c0_i32 : i32, i32
  }
}

</mosaic_0001>

<llo_original>
// kernel: tpu_custom_call.1
$region0: #{tpu_custom_call.1}
  #allocation0 [shape = 'u32[]', space=smem, size = 0x4, offset = 0x4, fixed_abs, tag = 'smem constant byte address 0x4 - core index']
  #allocation1 [shape = 'u32[144,128]{1,0:T(1,128)}', space=vmem, size = 0x12000, scoped, tag = 'internal scratch']
  %s0 = inlined_call_operand.hbm [shape: f32[1024,2048], index: 0, kind: input, shape index: {}]
  %s1 = inlined_call_operand.hbm [shape: f32[2048,128], index: 1, kind: input, shape index: {}]
  %s2 = inlined_call_operand.hbm [shape: f32[512,128], index: 2, kind: input, shape index: {}]
  %s3 = inlined_call_operand.hbm [shape: f32[8,512], index: 3, kind: input, shape index: {}]
  %s4 = inlined_call_operand.hbm [shape: f32[1,128], index: 4, kind: input, shape index: {}]
  %s5 = inlined_call_operand.hbm [shape: f32[16,128], index: 5, kind: output, shape index: {}]
  %s6 = sld [smem:[#allocation0]]
  $region73: #{tpu_custom_call.1} parent=0
    _
  %s8 = ssub.s32 1, %s6
  %s9 = scalar_select 0, %s8, %s6
  $region1: #{tpu_custom_call.1} parent=0
    #allocation2 [shape = 'u8[8388608]{0}', space=vmem, size = 0x800000, scoped, tag = 'input window, operand 0']
    #allocation3 [shape = 's32[2]{0}', space=sflag, size = 0x8, scoped, tag = 'scoped memory for tpu_custom_call.1']
    #allocation4 [shape = 's32[2]{0}', space=sflag, size = 0x8, scoped, tag = 'scoped memory for tpu_custom_call.1']
    #allocation5 [shape = 'u8[1048576]{0}', space=vmem, size = 0x100000, scoped, tag = 'input window, operand 1, single buffered']
    #allocation6 [shape = 's32[1]{0}', space=sflag, size = 0x4, scoped, tag = 'scoped memory for tpu_custom_call.1']
    #allocation7 [shape = 'u8[262144]{0}', space=vmem, size = 0x40000, scoped, tag = 'input window, operand 2, single buffered']
    #allocation8 [shape = 'u8[16384]{0}', space=vmem, size = 0x4000, scoped, tag = 'input window, operand 3, single buffered']
    #allocation9 [shape = 's32[1]{0}', space=sflag, size = 0x4, scoped, tag = 'scoped memory for tpu_custom_call.1']
    #allocation10 [shape = 'u8[512]{0}', space=vmem, size = 0x400, scoped, tag = 'input window, operand 4, single buffered']
    #allocation11 [shape = 'u8[8192]{0}', space=vmem, size = 0x2000, scoped, tag = 'output window, operand 0']
    %10 = vsyncpa [#allocation3], 0
    %s11 = scalar_lea.sflag [#allocation3], 1
    %12 = vsyncpa %s11, 0
    %13 = vsyncpa [#allocation6], 0
    %14 = vsyncpa [#allocation9], 0
    %15 = vsyncpa [#allocation4], 0
    %s16 = scalar_lea.sflag [#allocation4], 1
    %17 = vsyncpa %s16, 0
    loop: start=0, step=1, limit=4
    $region2: #{tpu_custom_call.1} parent=1 // loop_pre_header
      _
    $region3: #{tpu_custom_call.1} parent=1 // loop_header
      %s19 = sphi 0, %s23
      %p20 = scmp.ge.s32.totalorder %s19, 4
      %s29 = sphi 0, %s31
      %s32 = sphi 0, %s29
      %s33 = sphi 0, %s32
      %s49 = sphi 0, %s33
      %s53 = sphi 0, %s53
      %s55 = sphi 0, %s53
      %s56 = sphi 0, %s55
      %s70 = sphi 0, %s56
      %s74 = sphi 0, %s74
      %s76 = sphi 0, %s74
      %s77 = sphi 0, %s76
      %s91 = sphi 0, %s77
      %s95 = sphi 0, %s95
      %s97 = sphi 0, %s95
      %s98 = sphi 0, %s97
      %s112 = sphi 0, %s98
      %s116 = sphi 0, %s116
      %s118 = sphi 0, %s116
      %s119 = sphi 0, %s118
      %s133 = sphi 0, %s119
      %s139 = sphi 0, %s141
      %s142 = sphi 0, %s139
      %s143 = sphi 0, %s142
      %s159 = sphi 0, %s143
    $region4: #{tpu_custom_call.1} parent=1 // loop_header_branch
      %22 = sbr.rel (%p20) target = $region8
    $region5: #{tpu_custom_call.1} parent=1 // loop_body
      %s24 = ssub.s32 %s19, 1
      %s25 = ssub.s32 %s19, 2
      %s26 = sadd.s32 %s19, 1
      %s27 = ssub.s32 %s19, %s26
      %p28 = scmp.eq.s32.totalorder %s27, 0
      %s30 = sadd.s32 %s29, 1
      %s31 = scalar_select %p28, %s29, %s30
      %p34 = pneg %p28
      %p35 = scmp.eq.s32.totalorder %s19, 1
      %p36 = por %p34, %p35
      %p37 = scmp.ne.s32.totalorder %s29, %s32
      %p38 = scmp.eq.s32.totalorder %s19, 0
      %p39 = por %p37, %p38
      %p40 = scmp.ne.s32.totalorder %s29, %s32
      %p41 = scmp.eq.s32.totalorder %s24, 1
      %p42 = por %p40, %p41
      %p43 = scmp.ne.s32.totalorder %s32, %s33
      %p44 = scmp.eq.s32.totalorder %s24, 0
      %p45 = por %p43, %p44
      %p46 = scmp.ne.s32.totalorder %s32, %s33
      %p47 = scmp.eq.s32.totalorder %s25, 1
      %p48 = por %p46, %p47
      %p50 = scmp.ne.s32.totalorder %s33, %s49
      %p51 = scmp.eq.s32.totalorder %s25, 0
      %p52 = por %p50, %p51
      %s54 = sadd.s32 %s53, 1
      %p57 = scmp.eq.s32.totalorder %s19, 1
      %p58 = scmp.ne.s32.totalorder %s53, %s55
      %p59 = scmp.eq.s32.totalorder %s19, 0
      %p60 = por %p58, %p59
      %p61 = scmp.ne.s32.totalorder %s53, %s55
      %p62 = scmp.eq.s32.totalorder %s24, 1
      %p63 = por %p61, %p62
      %p64 = scmp.ne.s32.totalorder %s55, %s56
      %p65 = scmp.eq.s32.totalorder %s24, 0
      %p66 = por %p64, %p65
      %p67 = scmp.ne.s32.totalorder %s55, %s56
      %p68 = scmp.eq.s32.totalorder %s25, 1
      %p69 = por %p67, %p68
      %p71 = scmp.ne.s32.totalorder %s56, %s70
      %p72 = scmp.eq.s32.totalorder %s25, 0
      %p73 = por %p71, %p72
      %s75 = sadd.s32 %s74, 1
      %p78 = scmp.eq.s32.totalorder %s19, 1
      %p79 = scmp.ne.s32.totalorder %s74, %s76
      %p80 = scmp.eq.s32.totalorder %s19, 0
      %p81 = por %p79, %p80
      %p82 = scmp.ne.s32.totalorder %s74, %s76
      %p83 = scmp.eq.s32.totalorder %s24, 1
      %p84 = por %p82, %p83
      %p85 = scmp.ne.s32.totalorder %s76, %s77
      %p86 = scmp.eq.s32.totalorder %s24, 0
      %p87 = por %p85, %p86
      %p88 = scmp.ne.s32.totalorder %s76, %s77
      %p89 = scmp.eq.s32.totalorder %s25, 1
      %p90 = por %p88, %p89
      %p92 = scmp.ne.s32.totalorder %s77, %s91
      %p93 = scmp.eq.s32.totalorder %s25, 0
      %p94 = por %p92, %p93
      %s96 = sadd.s32 %s95, 1
      %p99 = scmp.eq.s32.totalorder %s19, 1
      %p100 = scmp.ne.s32.totalorder %s95, %s97
      %p101 = scmp.eq.s32.totalorder %s19, 0
      %p102 = por %p100, %p101
      %p103 = scmp.ne.s32.totalorder %s95, %s97
      %p104 = scmp.eq.s32.totalorder %s24, 1
      %p105 = por %p103, %p104
      %p106 = scmp.ne.s32.totalorder %s97, %s98
      %p107 = scmp.eq.s32.totalorder %s24, 0
      %p108 = por %p106, %p107
      %p109 = scmp.ne.s32.totalorder %s97, %s98
      %p110 = scmp.eq.s32.totalorder %s25, 1
      %p111 = por %p109, %p110
      %p113 = scmp.ne.s32.totalorder %s98, %s112
      %p114 = scmp.eq.s32.totalorder %s25, 0
      %p115 = por %p113, %p114
      %s117 = sadd.s32 %s116, 1
      %p120 = scmp.eq.s32.totalorder %s19, 1
      %p121 = scmp.ne.s32.totalorder %s116, %s118
      %p122 = scmp.eq.s32.totalorder %s19, 0
      %p123 = por %p121, %p122
      %p124 = scmp.ne.s32.totalorder %s116, %s118
      %p125 = scmp.eq.s32.totalorder %s24, 1
      %p126 = por %p124, %p125
      %p127 = scmp.ne.s32.totalorder %s118, %s119
      %p128 = scmp.eq.s32.totalorder %s24, 0
      %p129 = por %p127, %p128
      %p130 = scmp.ne.s32.totalorder %s118, %s119
      %p131 = scmp.eq.s32.totalorder %s25, 1
      %p132 = por %p130, %p131
      %p134 = scmp.ne.s32.totalorder %s119, %s133
      %p135 = scmp.eq.s32.totalorder %s25, 0
      %p136 = por %p134, %p135
      %s137 = ssub.s32 %s19, %s26
      %p138 = scmp.eq.s32.totalorder %s137, 0
      %s140 = sadd.s32 %s139, 1
      %s141 = scalar_select %p138, %s139, %s140
      %p144 = pneg %p138
      %p145 = scmp.eq.s32.totalorder %s19, 1
      %p146 = por %p144, %p145
      %p147 = scmp.ne.s32.totalorder %s139, %s142
      %p148 = scmp.eq.s32.totalorder %s19, 0
      %p149 = por %p147, %p148
      %p150 = scmp.ne.s32.totalorder %s139, %s142
      %p151 = scmp.eq.s32.totalorder %s24, 1
      %p152 = por %p150, %p151
      %p153 = scmp.ne.s32.totalorder %s142, %s143
      %p154 = scmp.eq.s32.totalorder %s24, 0
      %p155 = por %p153, %p154
      %p156 = scmp.ne.s32.totalorder %s142, %s143
      %p157 = scmp.eq.s32.totalorder %s25, 1
      %p158 = por %p156, %p157
      %p160 = scmp.ne.s32.totalorder %s143, %s159
      %p161 = scmp.eq.s32.totalorder %s25, 0
      %p162 = por %p160, %p161
      %p163 = scmp.le.s32.totalorder 1, %s19
      %p164 = scmp.lt.s32.totalorder %s19, 3
      %p165 = pnand %p163, %p164
      %p166 = pneg %p165
      // Predicated region
      $region9: #{tpu_custom_call.1} parent=5 // pred_check
        _
      $region10: #{tpu_custom_call.1} parent=5 // pred_check_branch
        %168 = sbr.rel (%p165) target = $region12
      $region11: #{tpu_custom_call.1} parent=5 // pred_region
        %s169 = ssub.s32 %s19, 1
        // Predicated region
        $region13: #{tpu_custom_call.1} parent=11 // pred_check
          %p170 = pneg %p66
        $region14: #{tpu_custom_call.1} parent=11 // pred_check_branch
          %172 = sbr.rel (%p170) target = $region16
        $region15: #{tpu_custom_call.1} parent=11 // pred_region
          %s174 = ssub.s32 32768, 32768
          %175 = vsyncadd [#allocation6], %s174
          %s176 = sshll.u32 [#allocation5], 4
          %s177 = int_to_ptr.vmem [resolvable:$true] %s176
          %182 = dma.hbm_to_vmem [thread:$0]  %s1, 32768, %s177, [#allocation6], 128, 128, 8
        $region16: #{tpu_custom_call.1} parent=11 // pred_fallthru
          _
        // Predicated region
        $region17: #{tpu_custom_call.1} parent=11 // pred_check
          %p183 = pneg %p87
        $region18: #{tpu_custom_call.1} parent=11 // pred_check_branch
          %185 = sbr.rel (%p183) target = $region20
        $region19: #{tpu_custom_call.1} parent=11 // pred_region
          %s187 = ssub.s32 8192, 8192
          %188 = vsyncadd [#allocation6], %s187
          %s189 = sshll.u32 [#allocation7], 4
          %s190 = int_to_ptr.vmem [resolvable:$true] %s189
          %195 = dma.hbm_to_vmem [thread:$0]  %s2, 8192, %s190, [#allocation6], 128, 128, 8
        $region20: #{tpu_custom_call.1} parent=11 // pred_fallthru
          _
        // Predicated region
        $region21: #{tpu_custom_call.1} parent=11 // pred_check
          %p196 = pneg %p108
        $region22: #{tpu_custom_call.1} parent=11 // pred_check_branch
          %198 = sbr.rel (%p196) target = $region24
        $region23: #{tpu_custom_call.1} parent=11 // pred_region
          %s200 = ssub.s32 512, 512
          %201 = vsyncadd [#allocation9], %s200
          %s203 = sshll.u32 [#allocation8], 4
          %s204 = int_to_ptr.vmem [resolvable:$true] %s203
          %206 = dma.hbm_to_vmem [thread:$0]  %s3, 512, %s204, [#allocation9]
        $region24: #{tpu_custom_call.1} parent=11 // pred_fallthru
          _
        // Predicated region
        $region25: #{tpu_custom_call.1} parent=11 // pred_check
          %p207 = pneg %p129
        $region26: #{tpu_custom_call.1} parent=11 // pred_check_branch
          %209 = sbr.rel (%p207) target = $region28
        $region27: #{tpu_custom_call.1} parent=11 // pred_region
          %s211 = ssub.s32 16, 16
          %212 = vsyncadd [#allocation9], %s211
          %s214 = sshll.u32 [#allocation10], 4
          %s215 = int_to_ptr.vmem [resolvable:$true] %s214
          %217 = dma.hbm_to_vmem [thread:$0]  %s4, 16, %s215, [#allocation9]
        $region28: #{tpu_custom_call.1} parent=11 // pred_fallthru
          _
      $region12: #{tpu_custom_call.1} parent=5 // pred_fallthru
        _
      %p218 = scmp.lt.s32.totalorder %s19, 2
      // Predicated region
      $region29: #{tpu_custom_call.1} parent=5 // pred_check
        %p219 = pneg %p218
      $region30: #{tpu_custom_call.1} parent=5 // pred_check_branch
        %221 = sbr.rel (%p219) target = $region32
      $region31: #{tpu_custom_call.1} parent=5 // pred_region
        // Predicated region
        $region33: #{tpu_custom_call.1} parent=31 // pred_check
          %p222 = pneg %p39
        $region34: #{tpu_custom_call.1} parent=31 // pred_check_branch
          %224 = sbr.rel (%p222) target = $region36
        $region35: #{tpu_custom_call.1} parent=31 // pred_region
          %s225 = sand.u32 %s29, 1
          %s226 = scalar_lea.sflag [#allocation3], %s225
          %s227 = sand.u32 %s29, 1
          %s228 = smul.addr %s227, 8192
          %s229 = scalar_lea.vmem [#allocation2], %s228
          %s230 = smul.u32 64, %s19
          %s232 = ssub.s32 131072, 131072
          %233 = vsyncadd %s226, %s232
          %s234 = smul.addr %s230, 16
          %s235 = smul.addr %s234, 128
          %s236 = scalar_lea.hbm %s0, %s235
          %s237 = sshll.u32 %s229, 4
          %s238 = int_to_ptr.vmem [resolvable:$true] %s237
          %243 = dma.hbm_to_vmem [thread:$0]  %s236, 131072, %s238, %s226, 2048, 2048, 128
        $region36: #{tpu_custom_call.1} parent=31 // pred_fallthru
          _
      $region32: #{tpu_custom_call.1} parent=5 // pred_fallthru
        _
      %p244 = scmp.le.s32.totalorder 1, %s19
      %p245 = scmp.lt.s32.totalorder %s19, 3
      %p246 = pnand %p244, %p245
      %p247 = pneg %p246
      // Predicated region
      $region37: #{tpu_custom_call.1} parent=5 // pred_check
        _
      $region38: #{tpu_custom_call.1} parent=5 // pred_check_branch
        %249 = sbr.rel (%p246) target = $region40
      $region39: #{tpu_custom_call.1} parent=5 // pred_region
        %s250 = ssub.s32 %s19, 1
        %s251 = sand.u32 %s32, 1
        %s252 = scalar_lea.sflag [#allocation3], %s251
        %s253 = sand.u32 %s32, 1
        %s254 = smul.addr %s253, 8192
        %s255 = scalar_lea.vmem [#allocation2], %s254
        // Predicated region
        $region41: #{tpu_custom_call.1} parent=39 // pred_check
          %p256 = pneg %p45
        $region42: #{tpu_custom_call.1} parent=39 // pred_check_branch
          %258 = sbr.rel (%p256) target = $region44
        $region43: #{tpu_custom_call.1} parent=39 // pred_region
          %259 = dma.done %s252, 131072
        $region44: #{tpu_custom_call.1} parent=39 // pred_fallthru
          _
        // Predicated region
        $region45: #{tpu_custom_call.1} parent=39 // pred_check
          %p260 = pneg %p66
        $region46: #{tpu_custom_call.1} parent=39 // pred_check_branch
          %262 = sbr.rel (%p260) target = $region48
        $region47: #{tpu_custom_call.1} parent=39 // pred_region
          %263 = dma.done [#allocation6], 32768
        $region48: #{tpu_custom_call.1} parent=39 // pred_fallthru
          _
        // Predicated region
        $region49: #{tpu_custom_call.1} parent=39 // pred_check
          %p264 = pneg %p87
        $region50: #{tpu_custom_call.1} parent=39 // pred_check_branch
          %266 = sbr.rel (%p264) target = $region52
        $region51: #{tpu_custom_call.1} parent=39 // pred_region
          %267 = dma.done [#allocation6], 8192
        $region52: #{tpu_custom_call.1} parent=39 // pred_fallthru
          _
        // Predicated region
        $region53: #{tpu_custom_call.1} parent=39 // pred_check
          %p268 = pneg %p108
        $region54: #{tpu_custom_call.1} parent=39 // pred_check_branch
          %270 = sbr.rel (%p268) target = $region56
        $region55: #{tpu_custom_call.1} parent=39 // pred_region
          %271 = dma.done [#allocation9], 512
        $region56: #{tpu_custom_call.1} parent=39 // pred_fallthru
          _
        // Predicated region
        $region57: #{tpu_custom_call.1} parent=39 // pred_check
          %p272 = pneg %p129
        $region58: #{tpu_custom_call.1} parent=39 // pred_check_branch
          %274 = sbr.rel (%p272) target = $region60
        $region59: #{tpu_custom_call.1} parent=39 // pred_region
          %275 = dma.done [#allocation9], 16
        $region60: #{tpu_custom_call.1} parent=39 // pred_fallthru
          _
        %s276 = sand.u32 %s32, 1
        %s277 = scalar_lea.sflag [#allocation3], %s276
        %s278 = sand.u32 %s32, 1
        %s279 = smul.addr %s278, 8192
        %s280 = scalar_lea.vmem [#allocation2], %s279
        %p281 = pneg %p45
        %p282 = pneg %p42
        %p283 = pneg %p66
        %p284 = pneg %p63
        %p285 = pneg %p87
        %p286 = pneg %p84
        %p287 = pneg %p108
        %p288 = pneg %p105
        %p289 = pneg %p129
        %p290 = pneg %p126
        %p291 = pneg %p155
        %p292 = pneg %p152
        %s293 = sand.u32 %s142, 1
        %s294 = scalar_lea.sflag [#allocation4], %s293
        %s295 = sand.u32 %s142, 1
        %s296 = smul.addr %s295, 8
        %s297 = scalar_lea.vmem [#allocation11], %s296
        %s298 = smul.u32 64, %s24
        %v299 = vld [vmem:[%s255] sm:$0xff]
        %v300 = vld [vmem:[%s255 + $0x8] sm:$0xff]
        %v301 = vld [vmem:[%s255 + $0x10] sm:$0xff]
        %v302 = vld [vmem:[%s255 + $0x18] sm:$0xff]
        %v303 = vld [vmem:[%s255 + $0x20] sm:$0xff]
        %v304 = vld [vmem:[%s255 + $0x28] sm:$0xff]
        %v305 = vld [vmem:[%s255 + $0x30] sm:$0xff]
        %v306 = vld [vmem:[%s255 + $0x38] sm:$0xff]
        %v307 = vld [vmem:[%s255 + $0x40] sm:$0xff]
        %v308 = vld [vmem:[%s255 + $0x48] sm:$0xff]
        %v309 = vld [vmem:[%s255 + $0x50] sm:$0xff]
        %v310 = vld [vmem:[%s255 + $0x58] sm:$0xff]
        %v311 = vld [vmem:[%s255 + $0x60] sm:$0xff]
        %v312 = vld [vmem:[%s255 + $0x68] sm:$0xff]
        %v313 = vld [vmem:[%s255 + $0x70] sm:$0xff]
        %v314 = vld [vmem:[%s255 + $0x78] sm:$0xff]
        %v315 = vld [vmem:[%s255 + $0x80] sm:$0xff]
        %v316 = vld [vmem:[%s255 + $0x88] sm:$0xff]
        %v317 = vld [vmem:[%s255 + $0x90] sm:$0xff]
        %v318 = vld [vmem:[%s255 + $0x98] sm:$0xff]
        %v319 = vld [vmem:[%s255 + $0xa0] sm:$0xff]
        %v320 = vld [vmem:[%s255 + $0xa8] sm:$0xff]
        %v321 = vld [vmem:[%s255 + $0xb0] sm:$0xff]
        %v322 = vld [vmem:[%s255 + $0xb8] sm:$0xff]
        %v323 = vld [vmem:[%s255 + $0xc0] sm:$0xff]
        %v324 = vld [vmem:[%s255 + $0xc8] sm:$0xff]
        %v325 = vld [vmem:[%s255 + $0xd0] sm:$0xff]
        %v326 = vld [vmem:[%s255 + $0xd8] sm:$0xff]
        %v327 = vld [vmem:[%s255 + $0xe0] sm:$0xff]
        %v328 = vld [vmem:[%s255 + $0xe8] sm:$0xff]
        %v329 = vld [vmem:[%s255 + $0xf0] sm:$0xff]
        %v330 = vld [vmem:[%s255 + $0xf8] sm:$0xff]
        %v331 = vld [vmem:[%s255 + $0x100] sm:$0xff]
        %v332 = vld [vmem:[%s255 + $0x108] sm:$0xff]
        %v333 = vld [vmem:[%s255 + $0x110] sm:$0xff]
        %v334 = vld [vmem:[%s255 + $0x118] sm:$0xff]
        %v335 = vld [vmem:[%s255 + $0x120] sm:$0xff]
        %v336 = vld [vmem:[%s255 + $0x128] sm:$0xff]
        %v337 = vld [vmem:[%s255 + $0x130] sm:$0xff]
        %v338 = vld [vmem:[%s255 + $0x138] sm:$0xff]
        %v339 = vld [vmem:[%s255 + $0x140] sm:$0xff]
        %v340 = vld [vmem:[%s255 + $0x148] sm:$0xff]
        %v341 = vld [vmem:[%s255 + $0x150] sm:$0xff]
        %v342 = vld [vmem:[%s255 + $0x158] sm:$0xff]
        %v343 = vld [vmem:[%s255 + $0x160] sm:$0xff]
        %v344 = vld [vmem:[%s255 + $0x168] sm:$0xff]
        %v345 = vld [vmem:[%s255 + $0x170] sm:$0xff]
        %v346 = vld [vmem:[%s255 + $0x178] sm:$0xff]
        %v347 = vld [vmem:[%s255 + $0x180] sm:$0xff]
        %v348 = vld [vmem:[%s255 + $0x188] sm:$0xff]
        %v349 = vld [vmem:[%s255 + $0x190] sm:$0xff]
        %v350 = vld [vmem:[%s255 + $0x198] sm:$0xff]
        %v351 = vld [vmem:[%s255 + $0x1a0] sm:$0xff]
        %v352 = vld [vmem:[%s255 + $0x1a8] sm:$0xff]
        %v353 = vld [vmem:[%s255 + $0x1b0] sm:$0xff]
        %v354 = vld [vmem:[%s255 + $0x1b8] sm:$0xff]
        %v355 = vld [vmem:[%s255 + $0x1c0] sm:$0xff]
        %v356 = vld [vmem:[%s255 + $0x1c8] sm:$0xff]
        %v357 = vld [vmem:[%s255 + $0x1d0] sm:$0xff]
        %v358 = vld [vmem:[%s255 + $0x1d8] sm:$0xff]
        %v359 = vld [vmem:[%s255 + $0x1e0] sm:$0xff]
        %v360 = vld [vmem:[%s255 + $0x1e8] sm:$0xff]
        %v361 = vld [vmem:[%s255 + $0x1f0] sm:$0xff]
        %v362 = vld [vmem:[%s255 + $0x1f8] sm:$0xff]
        %v363 = vld [vmem:[%s255 + $0x200] sm:$0xff]
        %v364 = vld [vmem:[%s255 + $0x208] sm:$0xff]
        %v365 = vld [vmem:[%s255 + $0x210] sm:$0xff]
        %v366 = vld [vmem:[%s255 + $0x218] sm:$0xff]
        %v367 = vld [vmem:[%s255 + $0x220] sm:$0xff]
        %v368 = vld [vmem:[%s255 + $0x228] sm:$0xff]
        %v369 = vld [vmem:[%s255 + $0x230] sm:$0xff]
        %v370 = vld [vmem:[%s255 + $0x238] sm:$0xff]
        %v371 = vld [vmem:[%s255 + $0x240] sm:$0xff]
        %v372 = vld [vmem:[%s255 + $0x248] sm:$0xff]
        %v373 = vld [vmem:[%s255 + $0x250] sm:$0xff]
        %v374 = vld [vmem:[%s255 + $0x258] sm:$0xff]
        %v375 = vld [vmem:[%s255 + $0x260] sm:$0xff]
        %v376 = vld [vmem:[%s255 + $0x268] sm:$0xff]
        %v377 = vld [vmem:[%s255 + $0x270] sm:$0xff]
        %v378 = vld [vmem:[%s255 + $0x278] sm:$0xff]
        %v379 = vld [vmem:[%s255 + $0x280] sm:$0xff]
        %v380 = vld [vmem:[%s255 + $0x288] sm:$0xff]
        %v381 = vld [vmem:[%s255 + $0x290] sm:$0xff]
        %v382 = vld [vmem:[%s255 + $0x298] sm:$0xff]
        %v383 = vld [vmem:[%s255 + $0x2a0] sm:$0xff]
        %v384 = vld [vmem:[%s255 + $0x2a8] sm:$0xff]
        %v385 = vld [vmem:[%s255 + $0x2b0] sm:$0xff]
        %v386 = vld [vmem:[%s255 + $0x2b8] sm:$0xff]
        %v387 = vld [vmem:[%s255 + $0x2c0] sm:$0xff]
        %v388 = vld [vmem:[%s255 + $0x2c8] sm:$0xff]
        %v389 = vld [vmem:[%s255 + $0x2d0] sm:$0xff]
        %v390 = vld [vmem:[%s255 + $0x2d8] sm:$0xff]
        %v391 = vld [vmem:[%s255 + $0x2e0] sm:$0xff]
        %v392 = vld [vmem:[%s255 + $0x2e8] sm:$0xff]
        %v393 = vld [vmem:[%s255 + $0x2f0] sm:$0xff]
        %v394 = vld [vmem:[%s255 + $0x2f8] sm:$0xff]
        %v395 = vld [vmem:[%s255 + $0x300] sm:$0xff]
        %v396 = vld [vmem:[%s255 + $0x308] sm:$0xff]
        %v397 = vld [vmem:[%s255 + $0x310] sm:$0xff]
        %v398 = vld [vmem:[%s255 + $0x318] sm:$0xff]
        %v399 = vld [vmem:[%s255 + $0x320] sm:$0xff]
        %v400 = vld [vmem:[%s255 + $0x328] sm:$0xff]
        %v401 = vld [vmem:[%s255 + $0x330] sm:$0xff]
        %v402 = vld [vmem:[%s255 + $0x338] sm:$0xff]
        %v403 = vld [vmem:[%s255 + $0x340] sm:$0xff]
        %v404 = vld [vmem:[%s255 + $0x348] sm:$0xff]
        %v405 = vld [vmem:[%s255 + $0x350] sm:$0xff]
        %v406 = vld [vmem:[%s255 + $0x358] sm:$0xff]
        %v407 = vld [vmem:[%s255 + $0x360] sm:$0xff]
        %v408 = vld [vmem:[%s255 + $0x368] sm:$0xff]
        %v409 = vld [vmem:[%s255 + $0x370] sm:$0xff]
        %v410 = vld [vmem:[%s255 + $0x378] sm:$0xff]
        %v411 = vld [vmem:[%s255 + $0x380] sm:$0xff]
        %v412 = vld [vmem:[%s255 + $0x388] sm:$0xff]
        %v413 = vld [vmem:[%s255 + $0x390] sm:$0xff]
        %v414 = vld [vmem:[%s255 + $0x398] sm:$0xff]
        %v415 = vld [vmem:[%s255 + $0x3a0] sm:$0xff]
        %v416 = vld [vmem:[%s255 + $0x3a8] sm:$0xff]
        %v417 = vld [vmem:[%s255 + $0x3b0] sm:$0xff]
        %v418 = vld [vmem:[%s255 + $0x3b8] sm:$0xff]
        %v419 = vld [vmem:[%s255 + $0x3c0] sm:$0xff]
        %v420 = vld [vmem:[%s255 + $0x3c8] sm:$0xff]
        %v421 = vld [vmem:[%s255 + $0x3d0] sm:$0xff]
        %v422 = vld [vmem:[%s255 + $0x3d8] sm:$0xff]
        %v423 = vld [vmem:[%s255 + $0x3e0] sm:$0xff]
        %v424 = vld [vmem:[%s255 + $0x3e8] sm:$0xff]
        %v425 = vld [vmem:[%s255 + $0x3f0] sm:$0xff]
        %v426 = vld [vmem:[%s255 + $0x3f8] sm:$0xff]
        %v427 = vld [vmem:[%s255 + $0x400] sm:$0xff]
        %v428 = vld [vmem:[%s255 + $0x408] sm:$0xff]
        %v429 = vld [vmem:[%s255 + $0x410] sm:$0xff]
        %v430 = vld [vmem:[%s255 + $0x418] sm:$0xff]
        %v431 = vld [vmem:[%s255 + $0x420] sm:$0xff]
        %v432 = vld [vmem:[%s255 + $0x428] sm:$0xff]
        %v433 = vld [vmem:[%s255 + $0x430] sm:$0xff]
        %v434 = vld [vmem:[%s255 + $0x438] sm:$0xff]
        %v435 = vld [vmem:[%s255 + $0x440] sm:$0xff]
        %v436 = vld [vmem:[%s255 + $0x448] sm:$0xff]
        %v437 = vld [vmem:[%s255 + $0x450] sm:$0xff]
        %v438 = vld [vmem:[%s255 + $0x458] sm:$0xff]
        %v439 = vld [vmem:[%s255 + $0x460] sm:$0xff]
        %v440 = vld [vmem:[%s255 + $0x468] sm:$0xff]
        %v441 = vld [vmem:[%s255 + $0x470] sm:$0xff]
        %v442 = vld [vmem:[%s255 + $0x478] sm:$0xff]
        %v443 = vld [vmem:[%s255 + $0x480] sm:$0xff]
        %v444 = vld [vmem:[%s255 + $0x488] sm:$0xff]
        %v445 = vld [vmem:[%s255 + $0x490] sm:$0xff]
        %v446 = vld [vmem:[%s255 + $0x498] sm:$0xff]
        %v447 = vld [vmem:[%s255 + $0x4a0] sm:$0xff]
        %v448 = vld [vmem:[%s255 + $0x4a8] sm:$0xff]
        %v449 = vld [vmem:[%s255 + $0x4b0] sm:$0xff]
        %v450 = vld [vmem:[%s255 + $0x4b8] sm:$0xff]
        %v451 = vld [vmem:[%s255 + $0x4c0] sm:$0xff]
        %v452 = vld [vmem:[%s255 + $0x4c8] sm:$0xff]
        %v453 = vld [vmem:[%s255 + $0x4d0] sm:$0xff]
        %v454 = vld [vmem:[%s255 + $0x4d8] sm:$0xff]
        %v455 = vld [vmem:[%s255 + $0x4e0] sm:$0xff]
        %v456 = vld [vmem:[%s255 + $0x4e8] sm:$0xff]
        %v457 = vld [vmem:[%s255 + $0x4f0] sm:$0xff]
        %v458 = vld [vmem:[%s255 + $0x4f8] sm:$0xff]
        %v459 = vld [vmem:[%s255 + $0x500] sm:$0xff]
        %v460 = vld [vmem:[%s255 + $0x508] sm:$0xff]
        %v461 = vld [vmem:[%s255 + $0x510] sm:$0xff]
        %v462 = vld [vmem:[%s255 + $0x518] sm:$0xff]
        %v463 = vld [vmem:[%s255 + $0x520] sm:$0xff]
        %v464 = vld [vmem:[%s255 + $0x528] sm:$0xff]
        %v465 = vld [vmem:[%s255 + $0x530] sm:$0xff]
        %v466 = vld [vmem:[%s255 + $0x538] sm:$0xff]
        %v467 = vld [vmem:[%s255 + $0x540] sm:$0xff]
        %v468 = vld [vmem:[%s255 + $0x548] sm:$0xff]
        %v469 = vld [vmem:[%s255 + $0x550] sm:$0xff]
        %v470 = vld [vmem:[%s255 + $0x558] sm:$0xff]
        %v471 = vld [vmem:[%s255 + $0x560] sm:$0xff]
        %v472 = vld [vmem:[%s255 + $0x568] sm:$0xff]
        %v473 = vld [vmem:[%s255 + $0x570] sm:$0xff]
        %v474 = vld [vmem:[%s255 + $0x578] sm:$0xff]
        %v475 = vld [vmem:[%s255 + $0x580] sm:$0xff]
        %v476 = vld [vmem:[%s255 + $0x588] sm:$0xff]
        %v477 = vld [vmem:[%s255 + $0x590] sm:$0xff]
        %v478 = vld [vmem:[%s255 + $0x598] sm:$0xff]
        %v479 = vld [vmem:[%s255 + $0x5a0] sm:$0xff]
        %v480 = vld [vmem:[%s255 + $0x5a8] sm:$0xff]
        %v481 = vld [vmem:[%s255 + $0x5b0] sm:$0xff]
        %v482 = vld [vmem:[%s255 + $0x5b8] sm:$0xff]
        %v483 = vld [vmem:[%s255 + $0x5c0] sm:$0xff]
        %v484 = vld [vmem:[%s255 + $0x5c8] sm:$0xff]
        %v485 = vld [vmem:[%s255 + $0x5d0] sm:$0xff]
        %v486 = vld [vmem:[%s255 + $0x5d8] sm:$0xff]
        %v487 = vld [vmem:[%s255 + $0x5e0] sm:$0xff]
        %v488 = vld [vmem:[%s255 + $0x5e8] sm:$0xff]
        %v489 = vld [vmem:[%s255 + $0x5f0] sm:$0xff]
        %v490 = vld [vmem:[%s255 + $0x5f8] sm:$0xff]
        %v491 = vld [vmem:[%s255 + $0x600] sm:$0xff]
        %v492 = vld [vmem:[%s255 + $0x608] sm:$0xff]
        %v493 = vld [vmem:[%s255 + $0x610] sm:$0xff]
        %v494 = vld [vmem:[%s255 + $0x618] sm:$0xff]
        %v495 = vld [vmem:[%s255 + $0x620] sm:$0xff]
        %v496 = vld [vmem:[%s255 + $0x628] sm:$0xff]
        %v497 = vld [vmem:[%s255 + $0x630] sm:$0xff]
        %v498 = vld [vmem:[%s255 + $0x638] sm:$0xff]
        %v499 = vld [vmem:[%s255 + $0x640] sm:$0xff]
        %v500 = vld [vmem:[%s255 + $0x648] sm:$0xff]
        %v501 = vld [vmem:[%s255 + $0x650] sm:$0xff]
        %v502 = vld [vmem:[%s255 + $0x658] sm:$0xff]
        %v503 = vld [vmem:[%s255 + $0x660] sm:$0xff]
        %v504 = vld [vmem:[%s255 + $0x668] sm:$0xff]
        %v505 = vld [vmem:[%s255 + $0x670] sm:$0xff]
        %v506 = vld [vmem:[%s255 + $0x678] sm:$0xff]
        %v507 = vld [vmem:[%s255 + $0x680] sm:$0xff]
        %v508 = vld [vmem:[%s255 + $0x688] sm:$0xff]
        %v509 = vld [vmem:[%s255 + $0x690] sm:$0xff]
        %v510 = vld [vmem:[%s255 + $0x698] sm:$0xff]
        %v511 = vld [vmem:[%s255 + $0x6a0] sm:$0xff]
        %v512 = vld [vmem:[%s255 + $0x6a8] sm:$0xff]
        %v513 = vld [vmem:[%s255 + $0x6b0] sm:$0xff]
        %v514 = vld [vmem:[%s255 + $0x6b8] sm:$0xff]
        %v515 = vld [vmem:[%s255 + $0x6c0] sm:$0xff]
        %v516 = vld [vmem:[%s255 + $0x6c8] sm:$0xff]
        %v517 = vld [vmem:[%s255 + $0x6d0] sm:$0xff]
        %v518 = vld [vmem:[%s255 + $0x6d8] sm:$0xff]
        %v519 = vld [vmem:[%s255 + $0x6e0] sm:$0xff]
        %v520 = vld [vmem:[%s255 + $0x6e8] sm:$0xff]
        %v521 = vld [vmem:[%s255 + $0x6f0] sm:$0xff]
        %v522 = vld [vmem:[%s255 + $0x6f8] sm:$0xff]
        %v523 = vld [vmem:[%s255 + $0x700] sm:$0xff]
        %v524 = vld [vmem:[%s255 + $0x708] sm:$0xff]
        %v525 = vld [vmem:[%s255 + $0x710] sm:$0xff]
        %v526 = vld [vmem:[%s255 + $0x718] sm:$0xff]
        %v527 = vld [vmem:[%s255 + $0x720] sm:$0xff]
        %v528 = vld [vmem:[%s255 + $0x728] sm:$0xff]
        %v529 = vld [vmem:[%s255 + $0x730] sm:$0xff]
        %v530 = vld [vmem:[%s255 + $0x738] sm:$0xff]
        %v531 = vld [vmem:[%s255 + $0x740] sm:$0xff]
        %v532 = vld [vmem:[%s255 + $0x748] sm:$0xff]
        %v533 = vld [vmem:[%s255 + $0x750] sm:$0xff]
        %v534 = vld [vmem:[%s255 + $0x758] sm:$0xff]
        %v535 = vld [vmem:[%s255 + $0x760] sm:$0xff]
        %v536 = vld [vmem:[%s255 + $0x768] sm:$0xff]
        %v537 = vld [vmem:[%s255 + $0x770] sm:$0xff]
        %v538 = vld [vmem:[%s255 + $0x778] sm:$0xff]
        %v539 = vld [vmem:[%s255 + $0x780] sm:$0xff]
        %v540 = vld [vmem:[%s255 + $0x788] sm:$0xff]
        %v541 = vld [vmem:[%s255 + $0x790] sm:$0xff]
        %v542 = vld [vmem:[%s255 + $0x798] sm:$0xff]
        %v543 = vld [vmem:[%s255 + $0x7a0] sm:$0xff]
        %v544 = vld [vmem:[%s255 + $0x7a8] sm:$0xff]
        %v545 = vld [vmem:[%s255 + $0x7b0] sm:$0xff]
        %v546 = vld [vmem:[%s255 + $0x7b8] sm:$0xff]
        %v547 = vld [vmem:[%s255 + $0x7c0] sm:$0xff]
        %v548 = vld [vmem:[%s255 + $0x7c8] sm:$0xff]
        %v549 = vld [vmem:[%s255 + $0x7d0] sm:$0xff]
        %v550 = vld [vmem:[%s255 + $0x7d8] sm:$0xff]
        %v551 = vld [vmem:[%s255 + $0x7e0] sm:$0xff]
        %v552 = vld [vmem:[%s255 + $0x7e8] sm:$0xff]
        %v553 = vld [vmem:[%s255 + $0x7f0] sm:$0xff]
        %v554 = vld [vmem:[%s255 + $0x7f8] sm:$0xff]
        %v555 = vld [vmem:[%s255 + $0x800] sm:$0xff]
        %v556 = vld [vmem:[%s255 + $0x808] sm:$0xff]
        %v557 = vld [vmem:[%s255 + $0x810] sm:$0xff]
        %v558 = vld [vmem:[%s255 + $0x818] sm:$0xff]
        %v559 = vld [vmem:[%s255 + $0x820] sm:$0xff]
        %v560 = vld [vmem:[%s255 + $0x828] sm:$0xff]
        %v561 = vld [vmem:[%s255 + $0x830] sm:$0xff]
        %v562 = vld [vmem:[%s255 + $0x838] sm:$0xff]
        %v563 = vld [vmem:[%s255 + $0x840] sm:$0xff]
        %v564 = vld [vmem:[%s255 + $0x848] sm:$0xff]
        %v565 = vld [vmem:[%s255 + $0x850] sm:$0xff]
        %v566 = vld [vmem:[%s255 + $0x858] sm:$0xff]
        %v567 = vld [vmem:[%s255 + $0x860] sm:$0xff]
        %v568 = vld [vmem:[%s255 + $0x868] sm:$0xff]
        %v569 = vld [vmem:[%s255 + $0x870] sm:$0xff]
        %v570 = vld [vmem:[%s255 + $0x878] sm:$0xff]
        %v571 = vld [vmem:[%s255 + $0x880] sm:$0xff]
        %v572 = vld [vmem:[%s255 + $0x888] sm:$0xff]
        %v573 = vld [vmem:[%s255 + $0x890] sm:$0xff]
        %v574 = vld [vmem:[%s255 + $0x898] sm:$0xff]
        %v575 = vld [vmem:[%s255 + $0x8a0] sm:$0xff]
        %v576 = vld [vmem:[%s255 + $0x8a8] sm:$0xff]
        %v577 = vld [vmem:[%s255 + $0x8b0] sm:$0xff]
        %v578 = vld [vmem:[%s255 + $0x8b8] sm:$0xff]
        %v579 = vld [vmem:[%s255 + $0x8c0] sm:$0xff]
        %v580 = vld [vmem:[%s255 + $0x8c8] sm:$0xff]
        %v581 = vld [vmem:[%s255 + $0x8d0] sm:$0xff]
        %v582 = vld [vmem:[%s255 + $0x8d8] sm:$0xff]
        %v583 = vld [vmem:[%s255 + $0x8e0] sm:$0xff]
        %v584 = vld [vmem:[%s255 + $0x8e8] sm:$0xff]
        %v585 = vld [vmem:[%s255 + $0x8f0] sm:$0xff]
        %v586 = vld [vmem:[%s255 + $0x8f8] sm:$0xff]
        %v587 = vld [vmem:[%s255 + $0x900] sm:$0xff]
        %v588 = vld [vmem:[%s255 + $0x908] sm:$0xff]
        %v589 = vld [vmem:[%s255 + $0x910] sm:$0xff]
        %v590 = vld [vmem:[%s255 + $0x918] sm:$0xff]
        %v591 = vld [vmem:[%s255 + $0x920] sm:$0xff]
        %v592 = vld [vmem:[%s255 + $0x928] sm:$0xff]
        %v593 = vld [vmem:[%s255 + $0x930] sm:$0xff]
        %v594 = vld [vmem:[%s255 + $0x938] sm:$0xff]
        %v595 = vld [vmem:[%s255 + $0x940] sm:$0xff]
        %v596 = vld [vmem:[%s255 + $0x948] sm:$0xff]
        %v597 = vld [vmem:[%s255 + $0x950] sm:$0xff]
        %v598 = vld [vmem:[%s255 + $0x958] sm:$0xff]
        %v599 = vld [vmem:[%s255 + $0x960] sm:$0xff]
        %v600 = vld [vmem:[%s255 + $0x968] sm:$0xff]
        %v601 = vld [vmem:[%s255 + $0x970] sm:$0xff]
        %v602 = vld [vmem:[%s255 + $0x978] sm:$0xff]
        %v603 = vld [vmem:[%s255 + $0x980] sm:$0xff]
        %v604 = vld [vmem:[%s255 + $0x988] sm:$0xff]
        %v605 = vld [vmem:[%s255 + $0x990] sm:$0xff]
        %v606 = vld [vmem:[%s255 + $0x998] sm:$0xff]
        %v607 = vld [vmem:[%s255 + $0x9a0] sm:$0xff]
        %v608 = vld [vmem:[%s255 + $0x9a8] sm:$0xff]
        %v609 = vld [vmem:[%s255 + $0x9b0] sm:$0xff]
        %v610 = vld [vmem:[%s255 + $0x9b8] sm:$0xff]
        %v611 = vld [vmem:[%s255 + $0x9c0] sm:$0xff]
        %v612 = vld [vmem:[%s255 + $0x9c8] sm:$0xff]
        %v613 = vld [vmem:[%s255 + $0x9d0] sm:$0xff]
        %v614 = vld [vmem:[%s255 + $0x9d8] sm:$0xff]
        %v615 = vld [vmem:[%s255 + $0x9e0] sm:$0xff]
        %v616 = vld [vmem:[%s255 + $0x9e8] sm:$0xff]
        %v617 = vld [vmem:[%s255 + $0x9f0] sm:$0xff]
        %v618 = vld [vmem:[%s255 + $0x9f8] sm:$0xff]
        %v619 = vld [vmem:[%s255 + $0xa00] sm:$0xff]
        %v620 = vld [vmem:[%s255 + $0xa08] sm:$0xff]
        %v621 = vld [vmem:[%s255 + $0xa10] sm:$0xff]
        %v622 = vld [vmem:[%s255 + $0xa18] sm:$0xff]
        %v623 = vld [vmem:[%s255 + $0xa20] sm:$0xff]
        %v624 = vld [vmem:[%s255 + $0xa28] sm:$0xff]
        %v625 = vld [vmem:[%s255 + $0xa30] sm:$0xff]
        %v626 = vld [vmem:[%s255 + $0xa38] sm:$0xff]
        %v627 = vld [vmem:[%s255 + $0xa40] sm:$0xff]
        %v628 = vld [vmem:[%s255 + $0xa48] sm:$0xff]
        %v629 = vld [vmem:[%s255 + $0xa50] sm:$0xff]
        %v630 = vld [vmem:[%s255 + $0xa58] sm:$0xff]
        %v631 = vld [vmem:[%s255 + $0xa60] sm:$0xff]
        %v632 = vld [vmem:[%s255 + $0xa68] sm:$0xff]
        %v633 = vld [vmem:[%s255 + $0xa70] sm:$0xff]
        %v634 = vld [vmem:[%s255 + $0xa78] sm:$0xff]
        %v635 = vld [vmem:[%s255 + $0xa80] sm:$0xff]
        %v636 = vld [vmem:[%s255 + $0xa88] sm:$0xff]
        %v637 = vld [vmem:[%s255 + $0xa90] sm:$0xff]
        %v638 = vld [vmem:[%s255 + $0xa98] sm:$0xff]
        %v639 = vld [vmem:[%s255 + $0xaa0] sm:$0xff]
        %v640 = vld [vmem:[%s255 + $0xaa8] sm:$0xff]
        %v641 = vld [vmem:[%s255 + $0xab0] sm:$0xff]
        %v642 = vld [vmem:[%s255 + $0xab8] sm:$0xff]
        %v643 = vld [vmem:[%s255 + $0xac0] sm:$0xff]
        %v644 = vld [vmem:[%s255 + $0xac8] sm:$0xff]
        %v645 = vld [vmem:[%s255 + $0xad0] sm:$0xff]
        %v646 = vld [vmem:[%s255 + $0xad8] sm:$0xff]
        %v647 = vld [vmem:[%s255 + $0xae0] sm:$0xff]
        %v648 = vld [vmem:[%s255 + $0xae8] sm:$0xff]
        %v649 = vld [vmem:[%s255 + $0xaf0] sm:$0xff]
        %v650 = vld [vmem:[%s255 + $0xaf8] sm:$0xff]
        %v651 = vld [vmem:[%s255 + $0xb00] sm:$0xff]
        %v652 = vld [vmem:[%s255 + $0xb08] sm:$0xff]
        %v653 = vld [vmem:[%s255 + $0xb10] sm:$0xff]
        %v654 = vld [vmem:[%s255 + $0xb18] sm:$0xff]
        %v655 = vld [vmem:[%s255 + $0xb20] sm:$0xff]
        %v656 = vld [vmem:[%s255 + $0xb28] sm:$0xff]
        %v657 = vld [vmem:[%s255 + $0xb30] sm:$0xff]
        %v658 = vld [vmem:[%s255 + $0xb38] sm:$0xff]
        %v659 = vld [vmem:[%s255 + $0xb40] sm:$0xff]
        %v660 = vld [vmem:[%s255 + $0xb48] sm:$0xff]
        %v661 = vld [vmem:[%s255 + $0xb50] sm:$0xff]
        %v662 = vld [vmem:[%s255 + $0xb58] sm:$0xff]
        %v663 = vld [vmem:[%s255 + $0xb60] sm:$0xff]
        %v664 = vld [vmem:[%s255 + $0xb68] sm:$0xff]
        %v665 = vld [vmem:[%s255 + $0xb70] sm:$0xff]
        %v666 = vld [vmem:[%s255 + $0xb78] sm:$0xff]
        %v667 = vld [vmem:[%s255 + $0xb80] sm:$0xff]
        %v668 = vld [vmem:[%s255 + $0xb88] sm:$0xff]
        %v669 = vld [vmem:[%s255 + $0xb90] sm:$0xff]
        %v670 = vld [vmem:[%s255 + $0xb98] sm:$0xff]
        %v671 = vld [vmem:[%s255 + $0xba0] sm:$0xff]
        %v672 = vld [vmem:[%s255 + $0xba8] sm:$0xff]
        %v673 = vld [vmem:[%s255 + $0xbb0] sm:$0xff]
        %v674 = vld [vmem:[%s255 + $0xbb8] sm:$0xff]
        %v675 = vld [vmem:[%s255 + $0xbc0] sm:$0xff]
        %v676 = vld [vmem:[%s255 + $0xbc8] sm:$0xff]
        %v677 = vld [vmem:[%s255 + $0xbd0] sm:$0xff]
        %v678 = vld [vmem:[%s255 + $0xbd8] sm:$0xff]
        %v679 = vld [vmem:[%s255 + $0xbe0] sm:$0xff]
        %v680 = vld [vmem:[%s255 + $0xbe8] sm:$0xff]
        %v681 = vld [vmem:[%s255 + $0xbf0] sm:$0xff]
        %v682 = vld [vmem:[%s255 + $0xbf8] sm:$0xff]
        %v683 = vld [vmem:[%s255 + $0xc00] sm:$0xff]
        %v684 = vld [vmem:[%s255 + $0xc08] sm:$0xff]
        %v685 = vld [vmem:[%s255 + $0xc10] sm:$0xff]
        %v686 = vld [vmem:[%s255 + $0xc18] sm:$0xff]
        %v687 = vld [vmem:[%s255 + $0xc20] sm:$0xff]
        %v688 = vld [vmem:[%s255 + $0xc28] sm:$0xff]
        %v689 = vld [vmem:[%s255 + $0xc30] sm:$0xff]
        %v690 = vld [vmem:[%s255 + $0xc38] sm:$0xff]
        %v691 = vld [vmem:[%s255 + $0xc40] sm:$0xff]
        %v692 = vld [vmem:[%s255 + $0xc48] sm:$0xff]
        %v693 = vld [vmem:[%s255 + $0xc50] sm:$0xff]
        %v694 = vld [vmem:[%s255 + $0xc58] sm:$0xff]
        %v695 = vld [vmem:[%s255 + $0xc60] sm:$0xff]
        %v696 = vld [vmem:[%s255 + $0xc68] sm:$0xff]
        %v697 = vld [vmem:[%s255 + $0xc70] sm:$0xff]
        %v698 = vld [vmem:[%s255 + $0xc78] sm:$0xff]
        %v699 = vld [vmem:[%s255 + $0xc80] sm:$0xff]
        %v700 = vld [vmem:[%s255 + $0xc88] sm:$0xff]
        %v701 = vld [vmem:[%s255 + $0xc90] sm:$0xff]
        %v702 = vld [vmem:[%s255 + $0xc98] sm:$0xff]
        %v703 = vld [vmem:[%s255 + $0xca0] sm:$0xff]
        %v704 = vld [vmem:[%s255 + $0xca8] sm:$0xff]
        %v705 = vld [vmem:[%s255 + $0xcb0] sm:$0xff]
        %v706 = vld [vmem:[%s255 + $0xcb8] sm:$0xff]
        %v707 = vld [vmem:[%s255 + $0xcc0] sm:$0xff]
        %v708 = vld [vmem:[%s255 + $0xcc8] sm:$0xff]
        %v709 = vld [vmem:[%s255 + $0xcd0] sm:$0xff]
        %v710 = vld [vmem:[%s255 + $0xcd8] sm:$0xff]
        %v711 = vld [vmem:[%s255 + $0xce0] sm:$0xff]
        %v712 = vld [vmem:[%s255 + $0xce8] sm:$0xff]
        %v713 = vld [vmem:[%s255 + $0xcf0] sm:$0xff]
        %v714 = vld [vmem:[%s255 + $0xcf8] sm:$0xff]
        %v715 = vld [vmem:[%s255 + $0xd00] sm:$0xff]
        %v716 = vld [vmem:[%s255 + $0xd08] sm:$0xff]
        %v717 = vld [vmem:[%s255 + $0xd10] sm:$0xff]
        %v718 = vld [vmem:[%s255 + $0xd18] sm:$0xff]
        %v719 = vld [vmem:[%s255 + $0xd20] sm:$0xff]
        %v720 = vld [vmem:[%s255 + $0xd28] sm:$0xff]
        %v721 = vld [vmem:[%s255 + $0xd30] sm:$0xff]
        %v722 = vld [vmem:[%s255 + $0xd38] sm:$0xff]
        %v723 = vld [vmem:[%s255 + $0xd40] sm:$0xff]
        %v724 = vld [vmem:[%s255 + $0xd48] sm:$0xff]
        %v725 = vld [vmem:[%s255 + $0xd50] sm:$0xff]
        %v726 = vld [vmem:[%s255 + $0xd58] sm:$0xff]
        %v727 = vld [vmem:[%s255 + $0xd60] sm:$0xff]
        %v728 = vld [vmem:[%s255 + $0xd68] sm:$0xff]
        %v729 = vld [vmem:[%s255 + $0xd70] sm:$0xff]
        %v730 = vld [vmem:[%s255 + $0xd78] sm:$0xff]
        %v731 = vld [vmem:[%s255 + $0xd80] sm:$0xff]
        %v732 = vld [vmem:[%s255 + $0xd88] sm:$0xff]
        %v733 = vld [vmem:[%s255 + $0xd90] sm:$0xff]
        %v734 = vld [vmem:[%s255 + $0xd98] sm:$0xff]
        %v735 = vld [vmem:[%s255 + $0xda0] sm:$0xff]
        %v736 = vld [vmem:[%s255 + $0xda8] sm:$0xff]
        %v737 = vld [vmem:[%s255 + $0xdb0] sm:$0xff]
        %v738 = vld [vmem:[%s255 + $0xdb8] sm:$0xff]
        %v739 = vld [vmem:[%s255 + $0xdc0] sm:$0xff]
        %v740 = vld [vmem:[%s255 + $0xdc8] sm:$0xff]
        %v741 = vld [vmem:[%s255 + $0xdd0] sm:$0xff]
        %v742 = vld [vmem:[%s255 + $0xdd8] sm:$0xff]
        %v743 = vld [vmem:[%s255 + $0xde0] sm:$0xff]
        %v744 = vld [vmem:[%s255 + $0xde8] sm:$0xff]
        %v745 = vld [vmem:[%s255 + $0xdf0] sm:$0xff]
        %v746 = vld [vmem:[%s255 + $0xdf8] sm:$0xff]
        %v747 = vld [vmem:[%s255 + $0xe00] sm:$0xff]
        %v748 = vld [vmem:[%s255 + $0xe08] sm:$0xff]
        %v749 = vld [vmem:[%s255 + $0xe10] sm:$0xff]
        %v750 = vld [vmem:[%s255 + $0xe18] sm:$0xff]
        %v751 = vld [vmem:[%s255 + $0xe20] sm:$0xff]
        %v752 = vld [vmem:[%s255 + $0xe28] sm:$0xff]
        %v753 = vld [vmem:[%s255 + $0xe30] sm:$0xff]
        %v754 = vld [vmem:[%s255 + $0xe38] sm:$0xff]
        %v755 = vld [vmem:[%s255 + $0xe40] sm:$0xff]
        %v756 = vld [vmem:[%s255 + $0xe48] sm:$0xff]
        %v757 = vld [vmem:[%s255 + $0xe50] sm:$0xff]
        %v758 = vld [vmem:[%s255 + $0xe58] sm:$0xff]
        %v759 = vld [vmem:[%s255 + $0xe60] sm:$0xff]
        %v760 = vld [vmem:[%s255 + $0xe68] sm:$0xff]
        %v761 = vld [vmem:[%s255 + $0xe70] sm:$0xff]
        %v762 = vld [vmem:[%s255 + $0xe78] sm:$0xff]
        %v763 = vld [vmem:[%s255 + $0xe80] sm:$0xff]
        %v764 = vld [vmem:[%s255 + $0xe88] sm:$0xff]
        %v765 = vld [vmem:[%s255 + $0xe90] sm:$0xff]
        %v766 = vld [vmem:[%s255 + $0xe98] sm:$0xff]
        %v767 = vld [vmem:[%s255 + $0xea0] sm:$0xff]
        %v768 = vld [vmem:[%s255 + $0xea8] sm:$0xff]
        %v769 = vld [vmem:[%s255 + $0xeb0] sm:$0xff]
        %v770 = vld [vmem:[%s255 + $0xeb8] sm:$0xff]
        %v771 = vld [vmem:[%s255 + $0xec0] sm:$0xff]
        %v772 = vld [vmem:[%s255 + $0xec8] sm:$0xff]
        %v773 = vld [vmem:[%s255 + $0xed0] sm:$0xff]
        %v774 = vld [vmem:[%s255 + $0xed8] sm:$0xff]
        %v775 = vld [vmem:[%s255 + $0xee0] sm:$0xff]
        %v776 = vld [vmem:[%s255 + $0xee8] sm:$0xff]
        %v777 = vld [vmem:[%s255 + $0xef0] sm:$0xff]
        %v778 = vld [vmem:[%s255 + $0xef8] sm:$0xff]
        %v779 = vld [vmem:[%s255 + $0xf00] sm:$0xff]
        %v780 = vld [vmem:[%s255 + $0xf08] sm:$0xff]
        %v781 = vld [vmem:[%s255 + $0xf10] sm:$0xff]
        %v782 = vld [vmem:[%s255 + $0xf18] sm:$0xff]
        %v783 = vld [vmem:[%s255 + $0xf20] sm:$0xff]
        %v784 = vld [vmem:[%s255 + $0xf28] sm:$0xff]
        %v785 = vld [vmem:[%s255 + $0xf30] sm:$0xff]
        %v786 = vld [vmem:[%s255 + $0xf38] sm:$0xff]
        %v787 = vld [vmem:[%s255 + $0xf40] sm:$0xff]
        %v788 = vld [vmem:[%s255 + $0xf48] sm:$0xff]
        %v789 = vld [vmem:[%s255 + $0xf50] sm:$0xff]
        %v790 = vld [vmem:[%s255 + $0xf58] sm:$0xff]
        %v791 = vld [vmem:[%s255 + $0xf60] sm:$0xff]
        %v792 = vld [vmem:[%s255 + $0xf68] sm:$0xff]
        %v793 = vld [vmem:[%s255 + $0xf70] sm:$0xff]
        %v794 = vld [vmem:[%s255 + $0xf78] sm:$0xff]
        %v795 = vld [vmem:[%s255 + $0xf80] sm:$0xff]
        %v796 = vld [vmem:[%s255 + $0xf88] sm:$0xff]
        %v797 = vld [vmem:[%s255 + $0xf90] sm:$0xff]
        %v798 = vld [vmem:[%s255 + $0xf98] sm:$0xff]
        %v799 = vld [vmem:[%s255 + $0xfa0] sm:$0xff]
        %v800 = vld [vmem:[%s255 + $0xfa8] sm:$0xff]
        %v801 = vld [vmem:[%s255 + $0xfb0] sm:$0xff]
        %v802 = vld [vmem:[%s255 + $0xfb8] sm:$0xff]
        %v803 = vld [vmem:[%s255 + $0xfc0] sm:$0xff]
        %v804 = vld [vmem:[%s255 + $0xfc8] sm:$0xff]
        %v805 = vld [vmem:[%s255 + $0xfd0] sm:$0xff]
        %v806 = vld [vmem:[%s255 + $0xfd8] sm:$0xff]
        %v807 = vld [vmem:[%s255 + $0xfe0] sm:$0xff]
        %v808 = vld [vmem:[%s255 + $0xfe8] sm:$0xff]
        %v809 = vld [vmem:[%s255 + $0xff0] sm:$0xff]
        %v810 = vld [vmem:[%s255 + $0xff8] sm:$0xff]
        %v811 = vld [vmem:[%s255 + $0x1000] sm:$0xff]
        %v812 = vld [vmem:[%s255 + $0x1008] sm:$0xff]
        %v813 = vld [vmem:[%s255 + $0x1010] sm:$0xff]
        %v814 = vld [vmem:[%s255 + $0x1018] sm:$0xff]
        %v815 = vld [vmem:[%s255 + $0x1020] sm:$0xff]
        %v816 = vld [vmem:[%s255 + $0x1028] sm:$0xff]
        %v817 = vld [vmem:[%s255 + $0x1030] sm:$0xff]
        %v818 = vld [vmem:[%s255 + $0x1038] sm:$0xff]
        %v819 = vld [vmem:[%s255 + $0x1040] sm:$0xff]
        %v820 = vld [vmem:[%s255 + $0x1048] sm:$0xff]
        %v821 = vld [vmem:[%s255 + $0x1050] sm:$0xff]
        %v822 = vld [vmem:[%s255 + $0x1058] sm:$0xff]
        %v823 = vld [vmem:[%s255 + $0x1060] sm:$0xff]
        %v824 = vld [vmem:[%s255 + $0x1068] sm:$0xff]
        %v825 = vld [vmem:[%s255 + $0x1070] sm:$0xff]
        %v826 = vld [vmem:[%s255 + $0x1078] sm:$0xff]
        %v827 = vld [vmem:[%s255 + $0x1080] sm:$0xff]
        %v828 = vld [vmem:[%s255 + $0x1088] sm:$0xff]
        %v829 = vld [vmem:[%s255 + $0x1090] sm:$0xff]
        %v830 = vld [vmem:[%s255 + $0x1098] sm:$0xff]
        %v831 = vld [vmem:[%s255 + $0x10a0] sm:$0xff]
        %v832 = vld [vmem:[%s255 + $0x10a8] sm:$0xff]
        %v833 = vld [vmem:[%s255 + $0x10b0] sm:$0xff]
        %v834 = vld [vmem:[%s255 + $0x10b8] sm:$0xff]
        %v835 = vld [vmem:[%s255 + $0x10c0] sm:$0xff]
        %v836 = vld [vmem:[%s255 + $0x10c8] sm:$0xff]
        %v837 = vld [vmem:[%s255 + $0x10d0] sm:$0xff]
        %v838 = vld [vmem:[%s255 + $0x10d8] sm:$0xff]
        %v839 = vld [vmem:[%s255 + $0x10e0] sm:$0xff]
        %v840 = vld [vmem:[%s255 + $0x10e8] sm:$0xff]
        %v841 = vld [vmem:[%s255 + $0x10f0] sm:$0xff]
        %v842 = vld [vmem:[%s255 + $0x10f8] sm:$0xff]
        %v843 = vld [vmem:[%s255 + $0x1100] sm:$0xff]
        %v844 = vld [vmem:[%s255 + $0x1108] sm:$0xff]
        %v845 = vld [vmem:[%s255 + $0x1110] sm:$0xff]
        %v846 = vld [vmem:[%s255 + $0x1118] sm:$0xff]
        %v847 = vld [vmem:[%s255 + $0x1120] sm:$0xff]
        %v848 = vld [vmem:[%s255 + $0x1128] sm:$0xff]
        %v849 = vld [vmem:[%s255 + $0x1130] sm:$0xff]
        %v850 = vld [vmem:[%s255 + $0x1138] sm:$0xff]
        %v851 = vld [vmem:[%s255 + $0x1140] sm:$0xff]
        %v852 = vld [vmem:[%s255 + $0x1148] sm:$0xff]
        %v853 = vld [vmem:[%s255 + $0x1150] sm:$0xff]
        %v854 = vld [vmem:[%s255 + $0x1158] sm:$0xff]
        %v855 = vld [vmem:[%s255 + $0x1160] sm:$0xff]
        %v856 = vld [vmem:[%s255 + $0x1168] sm:$0xff]
        %v857 = vld [vmem:[%s255 + $0x1170] sm:$0xff]
        %v858 = vld [vmem:[%s255 + $0x1178] sm:$0xff]
        %v859 = vld [vmem:[%s255 + $0x1180] sm:$0xff]
        %v860 = vld [vmem:[%s255 + $0x1188] sm:$0xff]
        %v861 = vld [vmem:[%s255 + $0x1190] sm:$0xff]
        %v862 = vld [vmem:[%s255 + $0x1198] sm:$0xff]
        %v863 = vld [vmem:[%s255 + $0x11a0] sm:$0xff]
        %v864 = vld [vmem:[%s255 + $0x11a8] sm:$0xff]
        %v865 = vld [vmem:[%s255 + $0x11b0] sm:$0xff]
        %v866 = vld [vmem:[%s255 + $0x11b8] sm:$0xff]
        %v867 = vld [vmem:[%s255 + $0x11c0] sm:$0xff]
        %v868 = vld [vmem:[%s255 + $0x11c8] sm:$0xff]
        %v869 = vld [vmem:[%s255 + $0x11d0] sm:$0xff]
        %v870 = vld [vmem:[%s255 + $0x11d8] sm:$0xff]
        %v871 = vld [vmem:[%s255 + $0x11e0] sm:$0xff]
        %v872 = vld [vmem:[%s255 + $0x11e8] sm:$0xff]
        %v873 = vld [vmem:[%s255 + $0x11f0] sm:$0xff]
        %v874 = vld [vmem:[%s255 + $0x11f8] sm:$0xff]
        %v875 = vld [vmem:[%s255 + $0x1200] sm:$0xff]
        %v876 = vld [vmem:[%s255 + $0x1208] sm:$0xff]
        %v877 = vld [vmem:[%s255 + $0x1210] sm:$0xff]
        %v878 = vld [vmem:[%s255 + $0x1218] sm:$0xff]
        %v879 = vld [vmem:[%s255 + $0x1220] sm:$0xff]
        %v880 = vld [vmem:[%s255 + $0x1228] sm:$0xff]
        %v881 = vld [vmem:[%s255 + $0x1230] sm:$0xff]
        %v882 = vld [vmem:[%s255 + $0x1238] sm:$0xff]
        %v883 = vld [vmem:[%s255 + $0x1240] sm:$0xff]
        %v884 = vld [vmem:[%s255 + $0x1248] sm:$0xff]
        %v885 = vld [vmem:[%s255 + $0x1250] sm:$0xff]
        %v886 = vld [vmem:[%s255 + $0x1258] sm:$0xff]
        %v887 = vld [vmem:[%s255 + $0x1260] sm:$0xff]
        %v888 = vld [vmem:[%s255 + $0x1268] sm:$0xff]
        %v889 = vld [vmem:[%s255 + $0x1270] sm:$0xff]
        %v890 = vld [vmem:[%s255 + $0x1278] sm:$0xff]
        %v891 = vld [vmem:[%s255 + $0x1280] sm:$0xff]
        %v892 = vld [vmem:[%s255 + $0x1288] sm:$0xff]
        %v893 = vld [vmem:[%s255 + $0x1290] sm:$0xff]
        %v894 = vld [vmem:[%s255 + $0x1298] sm:$0xff]
        %v895 = vld [vmem:[%s255 + $0x12a0] sm:$0xff]
        %v896 = vld [vmem:[%s255 + $0x12a8] sm:$0xff]
        %v897 = vld [vmem:[%s255 + $0x12b0] sm:$0xff]
        %v898 = vld [vmem:[%s255 + $0x12b8] sm:$0xff]
        %v899 = vld [vmem:[%s255 + $0x12c0] sm:$0xff]
        %v900 = vld [vmem:[%s255 + $0x12c8] sm:$0xff]
        %v901 = vld [vmem:[%s255 + $0x12d0] sm:$0xff]
        %v902 = vld [vmem:[%s255 + $0x12d8] sm:$0xff]
        %v903 = vld [vmem:[%s255 + $0x12e0] sm:$0xff]
        %v904 = vld [vmem:[%s255 + $0x12e8] sm:$0xff]
        %v905 = vld [vmem:[%s255 + $0x12f0] sm:$0xff]
        %v906 = vld [vmem:[%s255 + $0x12f8] sm:$0xff]
        %v907 = vld [vmem:[%s255 + $0x1300] sm:$0xff]
        %v908 = vld [vmem:[%s255 + $0x1308] sm:$0xff]
        %v909 = vld [vmem:[%s255 + $0x1310] sm:$0xff]
        %v910 = vld [vmem:[%s255 + $0x1318] sm:$0xff]
        %v911 = vld [vmem:[%s255 + $0x1320] sm:$0xff]
        %v912 = vld [vmem:[%s255 + $0x1328] sm:$0xff]
        %v913 = vld [vmem:[%s255 + $0x1330] sm:$0xff]
        %v914 = vld [vmem:[%s255 + $0x1338] sm:$0xff]
        %v915 = vld [vmem:[%s255 + $0x1340] sm:$0xff]
        %v916 = vld [vmem:[%s255 + $0x1348] sm:$0xff]
        %v917 = vld [vmem:[%s255 + $0x1350] sm:$0xff]
        %v918 = vld [vmem:[%s255 + $0x1358] sm:$0xff]
        %v919 = vld [vmem:[%s255 + $0x1360] sm:$0xff]
        %v920 = vld [vmem:[%s255 + $0x1368] sm:$0xff]
        %v921 = vld [vmem:[%s255 + $0x1370] sm:$0xff]
        %v922 = vld [vmem:[%s255 + $0x1378] sm:$0xff]
        %v923 = vld [vmem:[%s255 + $0x1380] sm:$0xff]
        %v924 = vld [vmem:[%s255 + $0x1388] sm:$0xff]
        %v925 = vld [vmem:[%s255 + $0x1390] sm:$0xff]
        %v926 = vld [vmem:[%s255 + $0x1398] sm:$0xff]
        %v927 = vld [vmem:[%s255 + $0x13a0] sm:$0xff]
        %v928 = vld [vmem:[%s255 + $0x13a8] sm:$0xff]
        %v929 = vld [vmem:[%s255 + $0x13b0] sm:$0xff]
        %v930 = vld [vmem:[%s255 + $0x13b8] sm:$0xff]
        %v931 = vld [vmem:[%s255 + $0x13c0] sm:$0xff]
        %v932 = vld [vmem:[%s255 + $0x13c8] sm:$0xff]
        %v933 = vld [vmem:[%s255 + $0x13d0] sm:$0xff]
        %v934 = vld [vmem:[%s255 + $0x13d8] sm:$0xff]
        %v935 = vld [vmem:[%s255 + $0x13e0] sm:$0xff]
        %v936 = vld [vmem:[%s255 + $0x13e8] sm:$0xff]
        %v937 = vld [vmem:[%s255 + $0x13f0] sm:$0xff]
        %v938 = vld [vmem:[%s255 + $0x13f8] sm:$0xff]
        %v939 = vld [vmem:[%s255 + $0x1400] sm:$0xff]
        %v940 = vld [vmem:[%s255 + $0x1408] sm:$0xff]
        %v941 = vld [vmem:[%s255 + $0x1410] sm:$0xff]
        %v942 = vld [vmem:[%s255 + $0x1418] sm:$0xff]
        %v943 = vld [vmem:[%s255 + $0x1420] sm:$0xff]
        %v944 = vld [vmem:[%s255 + $0x1428] sm:$0xff]
        %v945 = vld [vmem:[%s255 + $0x1430] sm:$0xff]
        %v946 = vld [vmem:[%s255 + $0x1438] sm:$0xff]
        %v947 = vld [vmem:[%s255 + $0x1440] sm:$0xff]
        %v948 = vld [vmem:[%s255 + $0x1448] sm:$0xff]
        %v949 = vld [vmem:[%s255 + $0x1450] sm:$0xff]
        %v950 = vld [vmem:[%s255 + $0x1458] sm:$0xff]
        %v951 = vld [vmem:[%s255 + $0x1460] sm:$0xff]
        %v952 = vld [vmem:[%s255 + $0x1468] sm:$0xff]
        %v953 = vld [vmem:[%s255 + $0x1470] sm:$0xff]
        %v954 = vld [vmem:[%s255 + $0x1478] sm:$0xff]
        %v955 = vld [vmem:[%s255 + $0x1480] sm:$0xff]
        %v956 = vld [vmem:[%s255 + $0x1488] sm:$0xff]
        %v957 = vld [vmem:[%s255 + $0x1490] sm:$0xff]
        %v958 = vld [vmem:[%s255 + $0x1498] sm:$0xff]
        %v959 = vld [vmem:[%s255 + $0x14a0] sm:$0xff]
        %v960 = vld [vmem:[%s255 + $0x14a8] sm:$0xff]
        %v961 = vld [vmem:[%s255 + $0x14b0] sm:$0xff]
        %v962 = vld [vmem:[%s255 + $0x14b8] sm:$0xff]
        %v963 = vld [vmem:[%s255 + $0x14c0] sm:$0xff]
        %v964 = vld [vmem:[%s255 + $0x14c8] sm:$0xff]
        %v965 = vld [vmem:[%s255 + $0x14d0] sm:$0xff]
        %v966 = vld [vmem:[%s255 + $0x14d8] sm:$0xff]
        %v967 = vld [vmem:[%s255 + $0x14e0] sm:$0xff]
        %v968 = vld [vmem:[%s255 + $0x14e8] sm:$0xff]
        %v969 = vld [vmem:[%s255 + $0x14f0] sm:$0xff]
        %v970 = vld [vmem:[%s255 + $0x14f8] sm:$0xff]
        %v971 = vld [vmem:[%s255 + $0x1500] sm:$0xff]
        %v972 = vld [vmem:[%s255 + $0x1508] sm:$0xff]
        %v973 = vld [vmem:[%s255 + $0x1510] sm:$0xff]
        %v974 = vld [vmem:[%s255 + $0x1518] sm:$0xff]
        %v975 = vld [vmem:[%s255 + $0x1520] sm:$0xff]
        %v976 = vld [vmem:[%s255 + $0x1528] sm:$0xff]
        %v977 = vld [vmem:[%s255 + $0x1530] sm:$0xff]
        %v978 = vld [vmem:[%s255 + $0x1538] sm:$0xff]
        %v979 = vld [vmem:[%s255 + $0x1540] sm:$0xff]
        %v980 = vld [vmem:[%s255 + $0x1548] sm:$0xff]
        %v981 = vld [vmem:[%s255 + $0x1550] sm:$0xff]
        %v982 = vld [vmem:[%s255 + $0x1558] sm:$0xff]
        %v983 = vld [vmem:[%s255 + $0x1560] sm:$0xff]
        %v984 = vld [vmem:[%s255 + $0x1568] sm:$0xff]
        %v985 = vld [vmem:[%s255 + $0x1570] sm:$0xff]
        %v986 = vld [vmem:[%s255 + $0x1578] sm:$0xff]
        %v987 = vld [vmem:[%s255 + $0x1580] sm:$0xff]
        %v988 = vld [vmem:[%s255 + $0x1588] sm:$0xff]
        %v989 = vld [vmem:[%s255 + $0x1590] sm:$0xff]
        %v990 = vld [vmem:[%s255 + $0x1598] sm:$0xff]
        %v991 = vld [vmem:[%s255 + $0x15a0] sm:$0xff]
        %v992 = vld [vmem:[%s255 + $0x15a8] sm:$0xff]
        %v993 = vld [vmem:[%s255 + $0x15b0] sm:$0xff]
        %v994 = vld [vmem:[%s255 + $0x15b8] sm:$0xff]
        %v995 = vld [vmem:[%s255 + $0x15c0] sm:$0xff]
        %v996 = vld [vmem:[%s255 + $0x15c8] sm:$0xff]
        %v997 = vld [vmem:[%s255 + $0x15d0] sm:$0xff]
        %v998 = vld [vmem:[%s255 + $0x15d8] sm:$0xff]
        %v999 = vld [vmem:[%s255 + $0x15e0] sm:$0xff]
        %v1000 = vld [vmem:[%s255 + $0x15e8] sm:$0xff]
        %v1001 = vld [vmem:[%s255 + $0x15f0] sm:$0xff]
        %v1002 = vld [vmem:[%s255 + $0x15f8] sm:$0xff]
        %v1003 = vld [vmem:[%s255 + $0x1600] sm:$0xff]
        %v1004 = vld [vmem:[%s255 + $0x1608] sm:$0xff]
        %v1005 = vld [vmem:[%s255 + $0x1610] sm:$0xff]
        %v1006 = vld [vmem:[%s255 + $0x1618] sm:$0xff]
        %v1007 = vld [vmem:[%s255 + $0x1620] sm:$0xff]
        %v1008 = vld [vmem:[%s255 + $0x1628] sm:$0xff]
        %v1009 = vld [vmem:[%s255 + $0x1630] sm:$0xff]
        %v1010 = vld [vmem:[%s255 + $0x1638] sm:$0xff]
        %v1011 = vld [vmem:[%s255 + $0x1640] sm:$0xff]
        %v1012 = vld [vmem:[%s255 + $0x1648] sm:$0xff]
        %v1013 = vld [vmem:[%s255 + $0x1650] sm:$0xff]
        %v1014 = vld [vmem:[%s255 + $0x1658] sm:$0xff]
        %v1015 = vld [vmem:[%s255 + $0x1660] sm:$0xff]
        %v1016 = vld [vmem:[%s255 + $0x1668] sm:$0xff]
        %v1017 = vld [vmem:[%s255 + $0x1670] sm:$0xff]
        %v1018 = vld [vmem:[%s255 + $0x1678] sm:$0xff]
        %v1019 = vld [vmem:[%s255 + $0x1680] sm:$0xff]
        %v1020 = vld [vmem:[%s255 + $0x1688] sm:$0xff]
        %v1021 = vld [vmem:[%s255 + $0x1690] sm:$0xff]
        %v1022 = vld [vmem:[%s255 + $0x1698] sm:$0xff]
        %v1023 = vld [vmem:[%s255 + $0x16a0] sm:$0xff]
        %v1024 = vld [vmem:[%s255 + $0x16a8] sm:$0xff]
        %v1025 = vld [vmem:[%s255 + $0x16b0] sm:$0xff]
        %v1026 = vld [vmem:[%s255 + $0x16b8] sm:$0xff]
        %v1027 = vld [vmem:[%s255 + $0x16c0] sm:$0xff]
        %v1028 = vld [vmem:[%s255 + $0x16c8] sm:$0xff]
        %v1029 = vld [vmem:[%s255 + $0x16d0] sm:$0xff]
        %v1030 = vld [vmem:[%s255 + $0x16d8] sm:$0xff]
        %v1031 = vld [vmem:[%s255 + $0x16e0] sm:$0xff]
        %v1032 = vld [vmem:[%s255 + $0x16e8] sm:$0xff]
        %v1033 = vld [vmem:[%s255 + $0x16f0] sm:$0xff]
        %v1034 = vld [vmem:[%s255 + $0x16f8] sm:$0xff]
        %v1035 = vld [vmem:[%s255 + $0x1700] sm:$0xff]
        %v1036 = vld [vmem:[%s255 + $0x1708] sm:$0xff]
        %v1037 = vld [vmem:[%s255 + $0x1710] sm:$0xff]
        %v1038 = vld [vmem:[%s255 + $0x1718] sm:$0xff]
        %v1039 = vld [vmem:[%s255 + $0x1720] sm:$0xff]
        %v1040 = vld [vmem:[%s255 + $0x1728] sm:$0xff]
        %v1041 = vld [vmem:[%s255 + $0x1730] sm:$0xff]
        %v1042 = vld [vmem:[%s255 + $0x1738] sm:$0xff]
        %v1043 = vld [vmem:[%s255 + $0x1740] sm:$0xff]
        %v1044 = vld [vmem:[%s255 + $0x1748] sm:$0xff]
        %v1045 = vld [vmem:[%s255 + $0x1750] sm:$0xff]
        %v1046 = vld [vmem:[%s255 + $0x1758] sm:$0xff]
        %v1047 = vld [vmem:[%s255 + $0x1760] sm:$0xff]
        %v1048 = vld [vmem:[%s255 + $0x1768] sm:$0xff]
        %v1049 = vld [vmem:[%s255 + $0x1770] sm:$0xff]
        %v1050 = vld [vmem:[%s255 + $0x1778] sm:$0xff]
        %v1051 = vld [vmem:[%s255 + $0x1780] sm:$0xff]
        %v1052 = vld [vmem:[%s255 + $0x1788] sm:$0xff]
        %v1053 = vld [vmem:[%s255 + $0x1790] sm:$0xff]
        %v1054 = vld [vmem:[%s255 + $0x1798] sm:$0xff]
        %v1055 = vld [vmem:[%s255 + $0x17a0] sm:$0xff]
        %v1056 = vld [vmem:[%s255 + $0x17a8] sm:$0xff]
        %v1057 = vld [vmem:[%s255 + $0x17b0] sm:$0xff]
        %v1058 = vld [vmem:[%s255 + $0x17b8] sm:$0xff]
        %v1059 = vld [vmem:[%s255 + $0x17c0] sm:$0xff]
        %v1060 = vld [vmem:[%s255 + $0x17c8] sm:$0xff]
        %v1061 = vld [vmem:[%s255 + $0x17d0] sm:$0xff]
        %v1062 = vld [vmem:[%s255 + $0x17d8] sm:$0xff]
        %v1063 = vld [vmem:[%s255 + $0x17e0] sm:$0xff]
        %v1064 = vld [vmem:[%s255 + $0x17e8] sm:$0xff]
        %v1065 = vld [vmem:[%s255 + $0x17f0] sm:$0xff]
        %v1066 = vld [vmem:[%s255 + $0x17f8] sm:$0xff]
        %v1067 = vld [vmem:[%s255 + $0x1800] sm:$0xff]
        %v1068 = vld [vmem:[%s255 + $0x1808] sm:$0xff]
        %v1069 = vld [vmem:[%s255 + $0x1810] sm:$0xff]
        %v1070 = vld [vmem:[%s255 + $0x1818] sm:$0xff]
        %v1071 = vld [vmem:[%s255 + $0x1820] sm:$0xff]
        %v1072 = vld [vmem:[%s255 + $0x1828] sm:$0xff]
        %v1073 = vld [vmem:[%s255 + $0x1830] sm:$0xff]
        %v1074 = vld [vmem:[%s255 + $0x1838] sm:$0xff]
        %v1075 = vld [vmem:[%s255 + $0x1840] sm:$0xff]
        %v1076 = vld [vmem:[%s255 + $0x1848] sm:$0xff]
        %v1077 = vld [vmem:[%s255 + $0x1850] sm:$0xff]
        %v1078 = vld [vmem:[%s255 + $0x1858] sm:$0xff]
        %v1079 = vld [vmem:[%s255 + $0x1860] sm:$0xff]
        %v1080 = vld [vmem:[%s255 + $0x1868] sm:$0xff]
        %v1081 = vld [vmem:[%s255 + $0x1870] sm:$0xff]
        %v1082 = vld [vmem:[%s255 + $0x1878] sm:$0xff]
        %v1083 = vld [vmem:[%s255 + $0x1880] sm:$0xff]
        %v1084 = vld [vmem:[%s255 + $0x1888] sm:$0xff]
        %v1085 = vld [vmem:[%s255 + $0x1890] sm:$0xff]
        %v1086 = vld [vmem:[%s255 + $0x1898] sm:$0xff]
        %v1087 = vld [vmem:[%s255 + $0x18a0] sm:$0xff]
        %v1088 = vld [vmem:[%s255 + $0x18a8] sm:$0xff]
        %v1089 = vld [vmem:[%s255 + $0x18b0] sm:$0xff]
        %v1090 = vld [vmem:[%s255 + $0x18b8] sm:$0xff]
        %v1091 = vld [vmem:[%s255 + $0x18c0] sm:$0xff]
        %v1092 = vld [vmem:[%s255 + $0x18c8] sm:$0xff]
        %v1093 = vld [vmem:[%s255 + $0x18d0] sm:$0xff]
        %v1094 = vld [vmem:[%s255 + $0x18d8] sm:$0xff]
        %v1095 = vld [vmem:[%s255 + $0x18e0] sm:$0xff]
        %v1096 = vld [vmem:[%s255 + $0x18e8] sm:$0xff]
        %v1097 = vld [vmem:[%s255 + $0x18f0] sm:$0xff]
        %v1098 = vld [vmem:[%s255 + $0x18f8] sm:$0xff]
        %v1099 = vld [vmem:[%s255 + $0x1900] sm:$0xff]
        %v1100 = vld [vmem:[%s255 + $0x1908] sm:$0xff]
        %v1101 = vld [vmem:[%s255 + $0x1910] sm:$0xff]
        %v1102 = vld [vmem:[%s255 + $0x1918] sm:$0xff]
        %v1103 = vld [vmem:[%s255 + $0x1920] sm:$0xff]
        %v1104 = vld [vmem:[%s255 + $0x1928] sm:$0xff]
        %v1105 = vld [vmem:[%s255 + $0x1930] sm:$0xff]
        %v1106 = vld [vmem:[%s255 + $0x1938] sm:$0xff]
        %v1107 = vld [vmem:[%s255 + $0x1940] sm:$0xff]
        %v1108 = vld [vmem:[%s255 + $0x1948] sm:$0xff]
        %v1109 = vld [vmem:[%s255 + $0x1950] sm:$0xff]
        %v1110 = vld [vmem:[%s255 + $0x1958] sm:$0xff]
        %v1111 = vld [vmem:[%s255 + $0x1960] sm:$0xff]
        %v1112 = vld [vmem:[%s255 + $0x1968] sm:$0xff]
        %v1113 = vld [vmem:[%s255 + $0x1970] sm:$0xff]
        %v1114 = vld [vmem:[%s255 + $0x1978] sm:$0xff]
        %v1115 = vld [vmem:[%s255 + $0x1980] sm:$0xff]
        %v1116 = vld [vmem:[%s255 + $0x1988] sm:$0xff]
        %v1117 = vld [vmem:[%s255 + $0x1990] sm:$0xff]
        %v1118 = vld [vmem:[%s255 + $0x1998] sm:$0xff]
        %v1119 = vld [vmem:[%s255 + $0x19a0] sm:$0xff]
        %v1120 = vld [vmem:[%s255 + $0x19a8] sm:$0xff]
        %v1121 = vld [vmem:[%s255 + $0x19b0] sm:$0xff]
        %v1122 = vld [vmem:[%s255 + $0x19b8] sm:$0xff]
        %v1123 = vld [vmem:[%s255 + $0x19c0] sm:$0xff]
        %v1124 = vld [vmem:[%s255 + $0x19c8] sm:$0xff]
        %v1125 = vld [vmem:[%s255 + $0x19d0] sm:$0xff]
        %v1126 = vld [vmem:[%s255 + $0x19d8] sm:$0xff]
        %v1127 = vld [vmem:[%s255 + $0x19e0] sm:$0xff]
        %v1128 = vld [vmem:[%s255 + $0x19e8] sm:$0xff]
        %v1129 = vld [vmem:[%s255 + $0x19f0] sm:$0xff]
        %v1130 = vld [vmem:[%s255 + $0x19f8] sm:$0xff]
        %v1131 = vld [vmem:[%s255 + $0x1a00] sm:$0xff]
        %v1132 = vld [vmem:[%s255 + $0x1a08] sm:$0xff]
        %v1133 = vld [vmem:[%s255 + $0x1a10] sm:$0xff]
        %v1134 = vld [vmem:[%s255 + $0x1a18] sm:$0xff]
        %v1135 = vld [vmem:[%s255 + $0x1a20] sm:$0xff]
        %v1136 = vld [vmem:[%s255 + $0x1a28] sm:$0xff]
        %v1137 = vld [vmem:[%s255 + $0x1a30] sm:$0xff]
        %v1138 = vld [vmem:[%s255 + $0x1a38] sm:$0xff]
        %v1139 = vld [vmem:[%s255 + $0x1a40] sm:$0xff]
        %v1140 = vld [vmem:[%s255 + $0x1a48] sm:$0xff]
        %v1141 = vld [vmem:[%s255 + $0x1a50] sm:$0xff]
        %v1142 = vld [vmem:[%s255 + $0x1a58] sm:$0xff]
        %v1143 = vld [vmem:[%s255 + $0x1a60] sm:$0xff]
        %v1144 = vld [vmem:[%s255 + $0x1a68] sm:$0xff]
        %v1145 = vld [vmem:[%s255 + $0x1a70] sm:$0xff]
        %v1146 = vld [vmem:[%s255 + $0x1a78] sm:$0xff]
        %v1147 = vld [vmem:[%s255 + $0x1a80] sm:$0xff]
        %v1148 = vld [vmem:[%s255 + $0x1a88] sm:$0xff]
        %v1149 = vld [vmem:[%s255 + $0x1a90] sm:$0xff]
        %v1150 = vld [vmem:[%s255 + $0x1a98] sm:$0xff]
        %v1151 = vld [vmem:[%s255 + $0x1aa0] sm:$0xff]
        %v1152 = vld [vmem:[%s255 + $0x1aa8] sm:$0xff]
        %v1153 = vld [vmem:[%s255 + $0x1ab0] sm:$0xff]
        %v1154 = vld [vmem:[%s255 + $0x1ab8] sm:$0xff]
        %v1155 = vld [vmem:[%s255 + $0x1ac0] sm:$0xff]
        %v1156 = vld [vmem:[%s255 + $0x1ac8] sm:$0xff]
        %v1157 = vld [vmem:[%s255 + $0x1ad0] sm:$0xff]
        %v1158 = vld [vmem:[%s255 + $0x1ad8] sm:$0xff]
        %v1159 = vld [vmem:[%s255 + $0x1ae0] sm:$0xff]
        %v1160 = vld [vmem:[%s255 + $0x1ae8] sm:$0xff]
        %v1161 = vld [vmem:[%s255 + $0x1af0] sm:$0xff]
        %v1162 = vld [vmem:[%s255 + $0x1af8] sm:$0xff]
        %v1163 = vld [vmem:[%s255 + $0x1b00] sm:$0xff]
        %v1164 = vld [vmem:[%s255 + $0x1b08] sm:$0xff]
        %v1165 = vld [vmem:[%s255 + $0x1b10] sm:$0xff]
        %v1166 = vld [vmem:[%s255 + $0x1b18] sm:$0xff]
        %v1167 = vld [vmem:[%s255 + $0x1b20] sm:$0xff]
        %v1168 = vld [vmem:[%s255 + $0x1b28] sm:$0xff]
        %v1169 = vld [vmem:[%s255 + $0x1b30] sm:$0xff]
        %v1170 = vld [vmem:[%s255 + $0x1b38] sm:$0xff]
        %v1171 = vld [vmem:[%s255 + $0x1b40] sm:$0xff]
        %v1172 = vld [vmem:[%s255 + $0x1b48] sm:$0xff]
        %v1173 = vld [vmem:[%s255 + $0x1b50] sm:$0xff]
        %v1174 = vld [vmem:[%s255 + $0x1b58] sm:$0xff]
        %v1175 = vld [vmem:[%s255 + $0x1b60] sm:$0xff]
        %v1176 = vld [vmem:[%s255 + $0x1b68] sm:$0xff]
        %v1177 = vld [vmem:[%s255 + $0x1b70] sm:$0xff]
        %v1178 = vld [vmem:[%s255 + $0x1b78] sm:$0xff]
        %v1179 = vld [vmem:[%s255 + $0x1b80] sm:$0xff]
        %v1180 = vld [vmem:[%s255 + $0x1b88] sm:$0xff]
        %v1181 = vld [vmem:[%s255 + $0x1b90] sm:$0xff]
        %v1182 = vld [vmem:[%s255 + $0x1b98] sm:$0xff]
        %v1183 = vld [vmem:[%s255 + $0x1ba0] sm:$0xff]
        %v1184 = vld [vmem:[%s255 + $0x1ba8] sm:$0xff]
        %v1185 = vld [vmem:[%s255 + $0x1bb0] sm:$0xff]
        %v1186 = vld [vmem:[%s255 + $0x1bb8] sm:$0xff]
        %v1187 = vld [vmem:[%s255 + $0x1bc0] sm:$0xff]
        %v1188 = vld [vmem:[%s255 + $0x1bc8] sm:$0xff]
        %v1189 = vld [vmem:[%s255 + $0x1bd0] sm:$0xff]
        %v1190 = vld [vmem:[%s255 + $0x1bd8] sm:$0xff]
        %v1191 = vld [vmem:[%s255 + $0x1be0] sm:$0xff]
        %v1192 = vld [vmem:[%s255 + $0x1be8] sm:$0xff]
        %v1193 = vld [vmem:[%s255 + $0x1bf0] sm:$0xff]
        %v1194 = vld [vmem:[%s255 + $0x1bf8] sm:$0xff]
        %v1195 = vld [vmem:[%s255 + $0x1c00] sm:$0xff]
        %v1196 = vld [vmem:[%s255 + $0x1c08] sm:$0xff]
        %v1197 = vld [vmem:[%s255 + $0x1c10] sm:$0xff]
        %v1198 = vld [vmem:[%s255 + $0x1c18] sm:$0xff]
        %v1199 = vld [vmem:[%s255 + $0x1c20] sm:$0xff]
        %v1200 = vld [vmem:[%s255 + $0x1c28] sm:$0xff]
        %v1201 = vld [vmem:[%s255 + $0x1c30] sm:$0xff]
        %v1202 = vld [vmem:[%s255 + $0x1c38] sm:$0xff]
        %v1203 = vld [vmem:[%s255 + $0x1c40] sm:$0xff]
        %v1204 = vld [vmem:[%s255 + $0x1c48] sm:$0xff]
        %v1205 = vld [vmem:[%s255 + $0x1c50] sm:$0xff]
        %v1206 = vld [vmem:[%s255 + $0x1c58] sm:$0xff]
        %v1207 = vld [vmem:[%s255 + $0x1c60] sm:$0xff]
        %v1208 = vld [vmem:[%s255 + $0x1c68] sm:$0xff]
        %v1209 = vld [vmem:[%s255 + $0x1c70] sm:$0xff]
        %v1210 = vld [vmem:[%s255 + $0x1c78] sm:$0xff]
        %v1211 = vld [vmem:[%s255 + $0x1c80] sm:$0xff]
        %v1212 = vld [vmem:[%s255 + $0x1c88] sm:$0xff]
        %v1213 = vld [vmem:[%s255 + $0x1c90] sm:$0xff]
        %v1214 = vld [vmem:[%s255 + $0x1c98] sm:$0xff]
        %v1215 = vld [vmem:[%s255 + $0x1ca0] sm:$0xff]
        %v1216 = vld [vmem:[%s255 + $0x1ca8] sm:$0xff]
        %v1217 = vld [vmem:[%s255 + $0x1cb0] sm:$0xff]
        %v1218 = vld [vmem:[%s255 + $0x1cb8] sm:$0xff]
        %v1219 = vld [vmem:[%s255 + $0x1cc0] sm:$0xff]
        %v1220 = vld [vmem:[%s255 + $0x1cc8] sm:$0xff]
        %v1221 = vld [vmem:[%s255 + $0x1cd0] sm:$0xff]
        %v1222 = vld [vmem:[%s255 + $0x1cd8] sm:$0xff]
        %v1223 = vld [vmem:[%s255 + $0x1ce0] sm:$0xff]
        %v1224 = vld [vmem:[%s255 + $0x1ce8] sm:$0xff]
        %v1225 = vld [vmem:[%s255 + $0x1cf0] sm:$0xff]
        %v1226 = vld [vmem:[%s255 + $0x1cf8] sm:$0xff]
        %v1227 = vld [vmem:[%s255 + $0x1d00] sm:$0xff]
        %v1228 = vld [vmem:[%s255 + $0x1d08] sm:$0xff]
        %v1229 = vld [vmem:[%s255 + $0x1d10] sm:$0xff]
        %v1230 = vld [vmem:[%s255 + $0x1d18] sm:$0xff]
        %v1231 = vld [vmem:[%s255 + $0x1d20] sm:$0xff]
        %v1232 = vld [vmem:[%s255 + $0x1d28] sm:$0xff]
        %v1233 = vld [vmem:[%s255 + $0x1d30] sm:$0xff]
        %v1234 = vld [vmem:[%s255 + $0x1d38] sm:$0xff]
        %v1235 = vld [vmem:[%s255 + $0x1d40] sm:$0xff]
        %v1236 = vld [vmem:[%s255 + $0x1d48] sm:$0xff]
        %v1237 = vld [vmem:[%s255 + $0x1d50] sm:$0xff]
        %v1238 = vld [vmem:[%s255 + $0x1d58] sm:$0xff]
        %v1239 = vld [vmem:[%s255 + $0x1d60] sm:$0xff]
        %v1240 = vld [vmem:[%s255 + $0x1d68] sm:$0xff]
        %v1241 = vld [vmem:[%s255 + $0x1d70] sm:$0xff]
        %v1242 = vld [vmem:[%s255 + $0x1d78] sm:$0xff]
        %v1243 = vld [vmem:[%s255 + $0x1d80] sm:$0xff]
        %v1244 = vld [vmem:[%s255 + $0x1d88] sm:$0xff]
        %v1245 = vld [vmem:[%s255 + $0x1d90] sm:$0xff]
        %v1246 = vld [vmem:[%s255 + $0x1d98] sm:$0xff]
        %v1247 = vld [vmem:[%s255 + $0x1da0] sm:$0xff]
        %v1248 = vld [vmem:[%s255 + $0x1da8] sm:$0xff]
        %v1249 = vld [vmem:[%s255 + $0x1db0] sm:$0xff]
        %v1250 = vld [vmem:[%s255 + $0x1db8] sm:$0xff]
        %v1251 = vld [vmem:[%s255 + $0x1dc0] sm:$0xff]
        %v1252 = vld [vmem:[%s255 + $0x1dc8] sm:$0xff]
        %v1253 = vld [vmem:[%s255 + $0x1dd0] sm:$0xff]
        %v1254 = vld [vmem:[%s255 + $0x1dd8] sm:$0xff]
        %v1255 = vld [vmem:[%s255 + $0x1de0] sm:$0xff]
        %v1256 = vld [vmem:[%s255 + $0x1de8] sm:$0xff]
        %v1257 = vld [vmem:[%s255 + $0x1df0] sm:$0xff]
        %v1258 = vld [vmem:[%s255 + $0x1df8] sm:$0xff]
        %v1259 = vld [vmem:[%s255 + $0x1e00] sm:$0xff]
        %v1260 = vld [vmem:[%s255 + $0x1e08] sm:$0xff]
        %v1261 = vld [vmem:[%s255 + $0x1e10] sm:$0xff]
        %v1262 = vld [vmem:[%s255 + $0x1e18] sm:$0xff]
        %v1263 = vld [vmem:[%s255 + $0x1e20] sm:$0xff]
        %v1264 = vld [vmem:[%s255 + $0x1e28] sm:$0xff]
        %v1265 = vld [vmem:[%s255 + $0x1e30] sm:$0xff]
        %v1266 = vld [vmem:[%s255 + $0x1e38] sm:$0xff]
        %v1267 = vld [vmem:[%s255 + $0x1e40] sm:$0xff]
        %v1268 = vld [vmem:[%s255 + $0x1e48] sm:$0xff]
        %v1269 = vld [vmem:[%s255 + $0x1e50] sm:$0xff]
        %v1270 = vld [vmem:[%s255 + $0x1e58] sm:$0xff]
        %v1271 = vld [vmem:[%s255 + $0x1e60] sm:$0xff]
        %v1272 = vld [vmem:[%s255 + $0x1e68] sm:$0xff]
        %v1273 = vld [vmem:[%s255 + $0x1e70] sm:$0xff]
        %v1274 = vld [vmem:[%s255 + $0x1e78] sm:$0xff]
        %v1275 = vld [vmem:[%s255 + $0x1e80] sm:$0xff]
        %v1276 = vld [vmem:[%s255 + $0x1e88] sm:$0xff]
        %v1277 = vld [vmem:[%s255 + $0x1e90] sm:$0xff]
        %v1278 = vld [vmem:[%s255 + $0x1e98] sm:$0xff]
        %v1279 = vld [vmem:[%s255 + $0x1ea0] sm:$0xff]
        %v1280 = vld [vmem:[%s255 + $0x1ea8] sm:$0xff]
        %v1281 = vld [vmem:[%s255 + $0x1eb0] sm:$0xff]
        %v1282 = vld [vmem:[%s255 + $0x1eb8] sm:$0xff]
        %v1283 = vld [vmem:[%s255 + $0x1ec0] sm:$0xff]
        %v1284 = vld [vmem:[%s255 + $0x1ec8] sm:$0xff]
        %v1285 = vld [vmem:[%s255 + $0x1ed0] sm:$0xff]
        %v1286 = vld [vmem:[%s255 + $0x1ed8] sm:$0xff]
        %v1287 = vld [vmem:[%s255 + $0x1ee0] sm:$0xff]
        %v1288 = vld [vmem:[%s255 + $0x1ee8] sm:$0xff]
        %v1289 = vld [vmem:[%s255 + $0x1ef0] sm:$0xff]
        %v1290 = vld [vmem:[%s255 + $0x1ef8] sm:$0xff]
        %v1291 = vld [vmem:[%s255 + $0x1f00] sm:$0xff]
        %v1292 = vld [vmem:[%s255 + $0x1f08] sm:$0xff]
        %v1293 = vld [vmem:[%s255 + $0x1f10] sm:$0xff]
        %v1294 = vld [vmem:[%s255 + $0x1f18] sm:$0xff]
        %v1295 = vld [vmem:[%s255 + $0x1f20] sm:$0xff]
        %v1296 = vld [vmem:[%s255 + $0x1f28] sm:$0xff]
        %v1297 = vld [vmem:[%s255 + $0x1f30] sm:$0xff]
        %v1298 = vld [vmem:[%s255 + $0x1f38] sm:$0xff]
        %v1299 = vld [vmem:[%s255 + $0x1f40] sm:$0xff]
        %v1300 = vld [vmem:[%s255 + $0x1f48] sm:$0xff]
        %v1301 = vld [vmem:[%s255 + $0x1f50] sm:$0xff]
        %v1302 = vld [vmem:[%s255 + $0x1f58] sm:$0xff]
        %v1303 = vld [vmem:[%s255 + $0x1f60] sm:$0xff]
        %v1304 = vld [vmem:[%s255 + $0x1f68] sm:$0xff]
        %v1305 = vld [vmem:[%s255 + $0x1f70] sm:$0xff]
        %v1306 = vld [vmem:[%s255 + $0x1f78] sm:$0xff]
        %v1307 = vld [vmem:[%s255 + $0x1f80] sm:$0xff]
        %v1308 = vld [vmem:[%s255 + $0x1f88] sm:$0xff]
        %v1309 = vld [vmem:[%s255 + $0x1f90] sm:$0xff]
        %v1310 = vld [vmem:[%s255 + $0x1f98] sm:$0xff]
        %v1311 = vld [vmem:[%s255 + $0x1fa0] sm:$0xff]
        %v1312 = vld [vmem:[%s255 + $0x1fa8] sm:$0xff]
        %v1313 = vld [vmem:[%s255 + $0x1fb0] sm:$0xff]
        %v1314 = vld [vmem:[%s255 + $0x1fb8] sm:$0xff]
        %v1315 = vld [vmem:[%s255 + $0x1fc0] sm:$0xff]
        %v1316 = vld [vmem:[%s255 + $0x1fc8] sm:$0xff]
        %v1317 = vld [vmem:[%s255 + $0x1fd0] sm:$0xff]
        %v1318 = vld [vmem:[%s255 + $0x1fd8] sm:$0xff]
        %v1319 = vld [vmem:[%s255 + $0x1fe0] sm:$0xff]
        %v1320 = vld [vmem:[%s255 + $0x1fe8] sm:$0xff]
        %v1321 = vld [vmem:[%s255 + $0x1ff0] sm:$0xff]
        %v1322 = vld [vmem:[%s255 + $0x1ff8] sm:$0xff]
        %v1323 = vld [vmem:[#allocation5] sm:$0xff]
        %v1324 = vld [vmem:[#allocation5 + $0x8] sm:$0xff]
        %v1325 = vld [vmem:[#allocation5 + $0x10] sm:$0xff]
        %v1326 = vld [vmem:[#allocation5 + $0x18] sm:$0xff]
        %v1327 = vld [vmem:[#allocation5 + $0x20] sm:$0xff]
        %v1328 = vld [vmem:[#allocation5 + $0x28] sm:$0xff]
        %v1329 = vld [vmem:[#allocation5 + $0x30] sm:$0xff]
        %v1330 = vld [vmem:[#allocation5 + $0x38] sm:$0xff]
        %v1331 = vld [vmem:[#allocation5 + $0x40] sm:$0xff]
        %v1332 = vld [vmem:[#allocation5 + $0x48] sm:$0xff]
        %v1333 = vld [vmem:[#allocation5 + $0x50] sm:$0xff]
        %v1334 = vld [vmem:[#allocation5 + $0x58] sm:$0xff]
        %v1335 = vld [vmem:[#allocation5 + $0x60] sm:$0xff]
        %v1336 = vld [vmem:[#allocation5 + $0x68] sm:$0xff]
        %v1337 = vld [vmem:[#allocation5 + $0x70] sm:$0xff]
        %v1338 = vld [vmem:[#allocation5 + $0x78] sm:$0xff]
        %v1339 = vld [vmem:[#allocation5 + $0x80] sm:$0xff]
        %v1340 = vld [vmem:[#allocation5 + $0x88] sm:$0xff]
        %v1341 = vld [vmem:[#allocation5 + $0x90] sm:$0xff]
        %v1342 = vld [vmem:[#allocation5 + $0x98] sm:$0xff]
        %v1343 = vld [vmem:[#allocation5 + $0xa0] sm:$0xff]
        %v1344 = vld [vmem:[#allocation5 + $0xa8] sm:$0xff]
        %v1345 = vld [vmem:[#allocation5 + $0xb0] sm:$0xff]
        %v1346 = vld [vmem:[#allocation5 + $0xb8] sm:$0xff]
        %v1347 = vld [vmem:[#allocation5 + $0xc0] sm:$0xff]
        %v1348 = vld [vmem:[#allocation5 + $0xc8] sm:$0xff]
        %v1349 = vld [vmem:[#allocation5 + $0xd0] sm:$0xff]
        %v1350 = vld [vmem:[#allocation5 + $0xd8] sm:$0xff]
        %v1351 = vld [vmem:[#allocation5 + $0xe0] sm:$0xff]
        %v1352 = vld [vmem:[#allocation5 + $0xe8] sm:$0xff]
        %v1353 = vld [vmem:[#allocation5 + $0xf0] sm:$0xff]
        %v1354 = vld [vmem:[#allocation5 + $0xf8] sm:$0xff]
        %v1355 = vld [vmem:[#allocation5 + $0x100] sm:$0xff]
        %v1356 = vld [vmem:[#allocation5 + $0x108] sm:$0xff]
        %v1357 = vld [vmem:[#allocation5 + $0x110] sm:$0xff]
        %v1358 = vld [vmem:[#allocation5 + $0x118] sm:$0xff]
        %v1359 = vld [vmem:[#allocation5 + $0x120] sm:$0xff]
        %v1360 = vld [vmem:[#allocation5 + $0x128] sm:$0xff]
        %v1361 = vld [vmem:[#allocation5 + $0x130] sm:$0xff]
        %v1362 = vld [vmem:[#allocation5 + $0x138] sm:$0xff]
        %v1363 = vld [vmem:[#allocation5 + $0x140] sm:$0xff]
        %v1364 = vld [vmem:[#allocation5 + $0x148] sm:$0xff]
        %v1365 = vld [vmem:[#allocation5 + $0x150] sm:$0xff]
        %v1366 = vld [vmem:[#allocation5 + $0x158] sm:$0xff]
        %v1367 = vld [vmem:[#allocation5 + $0x160] sm:$0xff]
        %v1368 = vld [vmem:[#allocation5 + $0x168] sm:$0xff]
        %v1369 = vld [vmem:[#allocation5 + $0x170] sm:$0xff]
        %v1370 = vld [vmem:[#allocation5 + $0x178] sm:$0xff]
        %v1371 = vld [vmem:[#allocation5 + $0x180] sm:$0xff]
        %v1372 = vld [vmem:[#allocation5 + $0x188] sm:$0xff]
        %v1373 = vld [vmem:[#allocation5 + $0x190] sm:$0xff]
        %v1374 = vld [vmem:[#allocation5 + $0x198] sm:$0xff]
        %v1375 = vld [vmem:[#allocation5 + $0x1a0] sm:$0xff]
        %v1376 = vld [vmem:[#allocation5 + $0x1a8] sm:$0xff]
        %v1377 = vld [vmem:[#allocation5 + $0x1b0] sm:$0xff]
        %v1378 = vld [vmem:[#allocation5 + $0x1b8] sm:$0xff]
        %v1379 = vld [vmem:[#allocation5 + $0x1c0] sm:$0xff]
        %v1380 = vld [vmem:[#allocation5 + $0x1c8] sm:$0xff]
        %v1381 = vld [vmem:[#allocation5 + $0x1d0] sm:$0xff]
        %v1382 = vld [vmem:[#allocation5 + $0x1d8] sm:$0xff]
        %v1383 = vld [vmem:[#allocation5 + $0x1e0] sm:$0xff]
        %v1384 = vld [vmem:[#allocation5 + $0x1e8] sm:$0xff]
        %v1385 = vld [vmem:[#allocation5 + $0x1f0] sm:$0xff]
        %v1386 = vld [vmem:[#allocation5 + $0x1f8] sm:$0xff]
        %v1387 = vld [vmem:[#allocation5 + $0x200] sm:$0xff]
        %v1388 = vld [vmem:[#allocation5 + $0x208] sm:$0xff]
        %v1389 = vld [vmem:[#allocation5 + $0x210] sm:$0xff]
        %v1390 = vld [vmem:[#allocation5 + $0x218] sm:$0xff]
        %v1391 = vld [vmem:[#allocation5 + $0x220] sm:$0xff]
        %v1392 = vld [vmem:[#allocation5 + $0x228] sm:$0xff]
        %v1393 = vld [vmem:[#allocation5 + $0x230] sm:$0xff]
        %v1394 = vld [vmem:[#allocation5 + $0x238] sm:$0xff]
        %v1395 = vld [vmem:[#allocation5 + $0x240] sm:$0xff]
        %v1396 = vld [vmem:[#allocation5 + $0x248] sm:$0xff]
        %v1397 = vld [vmem:[#allocation5 + $0x250] sm:$0xff]
        %v1398 = vld [vmem:[#allocation5 + $0x258] sm:$0xff]
        %v1399 = vld [vmem:[#allocation5 + $0x260] sm:$0xff]
        %v1400 = vld [vmem:[#allocation5 + $0x268] sm:$0xff]
        %v1401 = vld [vmem:[#allocation5 + $0x270] sm:$0xff]
        %v1402 = vld [vmem:[#allocation5 + $0x278] sm:$0xff]
        %v1403 = vld [vmem:[#allocation5 + $0x280] sm:$0xff]
        %v1404 = vld [vmem:[#allocation5 + $0x288] sm:$0xff]
        %v1405 = vld [vmem:[#allocation5 + $0x290] sm:$0xff]
        %v1406 = vld [vmem:[#allocation5 + $0x298] sm:$0xff]
        %v1407 = vld [vmem:[#allocation5 + $0x2a0] sm:$0xff]
        %v1408 = vld [vmem:[#allocation5 + $0x2a8] sm:$0xff]
        %v1409 = vld [vmem:[#allocation5 + $0x2b0] sm:$0xff]
        %v1410 = vld [vmem:[#allocation5 + $0x2b8] sm:$0xff]
        %v1411 = vld [vmem:[#allocation5 + $0x2c0] sm:$0xff]
        %v1412 = vld [vmem:[#allocation5 + $0x2c8] sm:$0xff]
        %v1413 = vld [vmem:[#allocation5 + $0x2d0] sm:$0xff]
        %v1414 = vld [vmem:[#allocation5 + $0x2d8] sm:$0xff]
        %v1415 = vld [vmem:[#allocation5 + $0x2e0] sm:$0xff]
        %v1416 = vld [vmem:[#allocation5 + $0x2e8] sm:$0xff]
        %v1417 = vld [vmem:[#allocation5 + $0x2f0] sm:$0xff]
        %v1418 = vld [vmem:[#allocation5 + $0x2f8] sm:$0xff]
        %v1419 = vld [vmem:[#allocation5 + $0x300] sm:$0xff]
        %v1420 = vld [vmem:[#allocation5 + $0x308] sm:$0xff]
        %v1421 = vld [vmem:[#allocation5 + $0x310] sm:$0xff]
        %v1422 = vld [vmem:[#allocation5 + $0x318] sm:$0xff]
        %v1423 = vld [vmem:[#allocation5 + $0x320] sm:$0xff]
        %v1424 = vld [vmem:[#allocation5 + $0x328] sm:$0xff]
        %v1425 = vld [vmem:[#allocation5 + $0x330] sm:$0xff]
        %v1426 = vld [vmem:[#allocation5 + $0x338] sm:$0xff]
        %v1427 = vld [vmem:[#allocation5 + $0x340] sm:$0xff]
        %v1428 = vld [vmem:[#allocation5 + $0x348] sm:$0xff]
        %v1429 = vld [vmem:[#allocation5 + $0x350] sm:$0xff]
        %v1430 = vld [vmem:[#allocation5 + $0x358] sm:$0xff]
        %v1431 = vld [vmem:[#allocation5 + $0x360] sm:$0xff]
        %v1432 = vld [vmem:[#allocation5 + $0x368] sm:$0xff]
        %v1433 = vld [vmem:[#allocation5 + $0x370] sm:$0xff]
        %v1434 = vld [vmem:[#allocation5 + $0x378] sm:$0xff]
        %v1435 = vld [vmem:[#allocation5 + $0x380] sm:$0xff]
        %v1436 = vld [vmem:[#allocation5 + $0x388] sm:$0xff]
        %v1437 = vld [vmem:[#allocation5 + $0x390] sm:$0xff]
        %v1438 = vld [vmem:[#allocation5 + $0x398] sm:$0xff]
        %v1439 = vld [vmem:[#allocation5 + $0x3a0] sm:$0xff]
        %v1440 = vld [vmem:[#allocation5 + $0x3a8] sm:$0xff]
        %v1441 = vld [vmem:[#allocation5 + $0x3b0] sm:$0xff]
        %v1442 = vld [vmem:[#allocation5 + $0x3b8] sm:$0xff]
        %v1443 = vld [vmem:[#allocation5 + $0x3c0] sm:$0xff]
        %v1444 = vld [vmem:[#allocation5 + $0x3c8] sm:$0xff]
        %v1445 = vld [vmem:[#allocation5 + $0x3d0] sm:$0xff]
        %v1446 = vld [vmem:[#allocation5 + $0x3d8] sm:$0xff]
        %v1447 = vld [vmem:[#allocation5 + $0x3e0] sm:$0xff]
        %v1448 = vld [vmem:[#allocation5 + $0x3e8] sm:$0xff]
        %v1449 = vld [vmem:[#allocation5 + $0x3f0] sm:$0xff]
        %v1450 = vld [vmem:[#allocation5 + $0x3f8] sm:$0xff]
        %v1451 = vld [vmem:[#allocation5 + $0x400] sm:$0xff]
        %v1452 = vld [vmem:[#allocation5 + $0x408] sm:$0xff]
        %v1453 = vld [vmem:[#allocation5 + $0x410] sm:$0xff]
        %v1454 = vld [vmem:[#allocation5 + $0x418] sm:$0xff]
        %v1455 = vld [vmem:[#allocation5 + $0x420] sm:$0xff]
        %v1456 = vld [vmem:[#allocation5 + $0x428] sm:$0xff]
        %v1457 = vld [vmem:[#allocation5 + $0x430] sm:$0xff]
        %v1458 = vld [vmem:[#allocation5 + $0x438] sm:$0xff]
        %v1459 = vld [vmem:[#allocation5 + $0x440] sm:$0xff]
        %v1460 = vld [vmem:[#allocation5 + $0x448] sm:$0xff]
        %v1461 = vld [vmem:[#allocation5 + $0x450] sm:$0xff]
        %v1462 = vld [vmem:[#allocation5 + $0x458] sm:$0xff]
        %v1463 = vld [vmem:[#allocation5 + $0x460] sm:$0xff]
        %v1464 = vld [vmem:[#allocation5 + $0x468] sm:$0xff]
        %v1465 = vld [vmem:[#allocation5 + $0x470] sm:$0xff]
        %v1466 = vld [vmem:[#allocation5 + $0x478] sm:$0xff]
        %v1467 = vld [vmem:[#allocation5 + $0x480] sm:$0xff]
        %v1468 = vld [vmem:[#allocation5 + $0x488] sm:$0xff]
        %v1469 = vld [vmem:[#allocation5 + $0x490] sm:$0xff]
        %v1470 = vld [vmem:[#allocation5 + $0x498] sm:$0xff]
        %v1471 = vld [vmem:[#allocation5 + $0x4a0] sm:$0xff]
        %v1472 = vld [vmem:[#allocation5 + $0x4a8] sm:$0xff]
        %v1473 = vld [vmem:[#allocation5 + $0x4b0] sm:$0xff]
        %v1474 = vld [vmem:[#allocation5 + $0x4b8] sm:$0xff]
        %v1475 = vld [vmem:[#allocation5 + $0x4c0] sm:$0xff]
        %v1476 = vld [vmem:[#allocation5 + $0x4c8] sm:$0xff]
        %v1477 = vld [vmem:[#allocation5 + $0x4d0] sm:$0xff]
        %v1478 = vld [vmem:[#allocation5 + $0x4d8] sm:$0xff]
        %v1479 = vld [vmem:[#allocation5 + $0x4e0] sm:$0xff]
        %v1480 = vld [vmem:[#allocation5 + $0x4e8] sm:$0xff]
        %v1481 = vld [vmem:[#allocation5 + $0x4f0] sm:$0xff]
        %v1482 = vld [vmem:[#allocation5 + $0x4f8] sm:$0xff]
        %v1483 = vld [vmem:[#allocation5 + $0x500] sm:$0xff]
        %v1484 = vld [vmem:[#allocation5 + $0x508] sm:$0xff]
        %v1485 = vld [vmem:[#allocation5 + $0x510] sm:$0xff]
        %v1486 = vld [vmem:[#allocation5 + $0x518] sm:$0xff]
        %v1487 = vld [vmem:[#allocation5 + $0x520] sm:$0xff]
        %v1488 = vld [vmem:[#allocation5 + $0x528] sm:$0xff]
        %v1489 = vld [vmem:[#allocation5 + $0x530] sm:$0xff]
        %v1490 = vld [vmem:[#allocation5 + $0x538] sm:$0xff]
        %v1491 = vld [vmem:[#allocation5 + $0x540] sm:$0xff]
        %v1492 = vld [vmem:[#allocation5 + $0x548] sm:$0xff]
        %v1493 = vld [vmem:[#allocation5 + $0x550] sm:$0xff]
        %v1494 = vld [vmem:[#allocation5 + $0x558] sm:$0xff]
        %v1495 = vld [vmem:[#allocation5 + $0x560] sm:$0xff]
        %v1496 = vld [vmem:[#allocation5 + $0x568] sm:$0xff]
        %v1497 = vld [vmem:[#allocation5 + $0x570] sm:$0xff]
        %v1498 = vld [vmem:[#allocation5 + $0x578] sm:$0xff]
        %v1499 = vld [vmem:[#allocation5 + $0x580] sm:$0xff]
        %v1500 = vld [vmem:[#allocation5 + $0x588] sm:$0xff]
        %v1501 = vld [vmem:[#allocation5 + $0x590] sm:$0xff]
        %v1502 = vld [vmem:[#allocation5 + $0x598] sm:$0xff]
        %v1503 = vld [vmem:[#allocation5 + $0x5a0] sm:$0xff]
        %v1504 = vld [vmem:[#allocation5 + $0x5a8] sm:$0xff]
        %v1505 = vld [vmem:[#allocation5 + $0x5b0] sm:$0xff]
        %v1506 = vld [vmem:[#allocation5 + $0x5b8] sm:$0xff]
        %v1507 = vld [vmem:[#allocation5 + $0x5c0] sm:$0xff]
        %v1508 = vld [vmem:[#allocation5 + $0x5c8] sm:$0xff]
        %v1509 = vld [vmem:[#allocation5 + $0x5d0] sm:$0xff]
        %v1510 = vld [vmem:[#allocation5 + $0x5d8] sm:$0xff]
        %v1511 = vld [vmem:[#allocation5 + $0x5e0] sm:$0xff]
        %v1512 = vld [vmem:[#allocation5 + $0x5e8] sm:$0xff]
        %v1513 = vld [vmem:[#allocation5 + $0x5f0] sm:$0xff]
        %v1514 = vld [vmem:[#allocation5 + $0x5f8] sm:$0xff]
        %v1515 = vld [vmem:[#allocation5 + $0x600] sm:$0xff]
        %v1516 = vld [vmem:[#allocation5 + $0x608] sm:$0xff]
        %v1517 = vld [vmem:[#allocation5 + $0x610] sm:$0xff]
        %v1518 = vld [vmem:[#allocation5 + $0x618] sm:$0xff]
        %v1519 = vld [vmem:[#allocation5 + $0x620] sm:$0xff]
        %v1520 = vld [vmem:[#allocation5 + $0x628] sm:$0xff]
        %v1521 = vld [vmem:[#allocation5 + $0x630] sm:$0xff]
        %v1522 = vld [vmem:[#allocation5 + $0x638] sm:$0xff]
        %v1523 = vld [vmem:[#allocation5 + $0x640] sm:$0xff]
        %v1524 = vld [vmem:[#allocation5 + $0x648] sm:$0xff]
        %v1525 = vld [vmem:[#allocation5 + $0x650] sm:$0xff]
        %v1526 = vld [vmem:[#allocation5 + $0x658] sm:$0xff]
        %v1527 = vld [vmem:[#allocation5 + $0x660] sm:$0xff]
        %v1528 = vld [vmem:[#allocation5 + $0x668] sm:$0xff]
        %v1529 = vld [vmem:[#allocation5 + $0x670] sm:$0xff]
        %v1530 = vld [vmem:[#allocation5 + $0x678] sm:$0xff]
        %v1531 = vld [vmem:[#allocation5 + $0x680] sm:$0xff]
        %v1532 = vld [vmem:[#allocation5 + $0x688] sm:$0xff]
        %v1533 = vld [vmem:[#allocation5 + $0x690] sm:$0xff]
        %v1534 = vld [vmem:[#allocation5 + $0x698] sm:$0xff]
        %v1535 = vld [vmem:[#allocation5 + $0x6a0] sm:$0xff]
        %v1536 = vld [vmem:[#allocation5 + $0x6a8] sm:$0xff]
        %v1537 = vld [vmem:[#allocation5 + $0x6b0] sm:$0xff]
        %v1538 = vld [vmem:[#allocation5 + $0x6b8] sm:$0xff]
        %v1539 = vld [vmem:[#allocation5 + $0x6c0] sm:$0xff]
        %v1540 = vld [vmem:[#allocation5 + $0x6c8] sm:$0xff]
        %v1541 = vld [vmem:[#allocation5 + $0x6d0] sm:$0xff]
        %v1542 = vld [vmem:[#allocation5 + $0x6d8] sm:$0xff]
        %v1543 = vld [vmem:[#allocation5 + $0x6e0] sm:$0xff]
        %v1544 = vld [vmem:[#allocation5 + $0x6e8] sm:$0xff]
        %v1545 = vld [vmem:[#allocation5 + $0x6f0] sm:$0xff]
        %v1546 = vld [vmem:[#allocation5 + $0x6f8] sm:$0xff]
        %v1547 = vld [vmem:[#allocation5 + $0x700] sm:$0xff]
        %v1548 = vld [vmem:[#allocation5 + $0x708] sm:$0xff]
        %v1549 = vld [vmem:[#allocation5 + $0x710] sm:$0xff]
        %v1550 = vld [vmem:[#allocation5 + $0x718] sm:$0xff]
        %v1551 = vld [vmem:[#allocation5 + $0x720] sm:$0xff]
        %v1552 = vld [vmem:[#allocation5 + $0x728] sm:$0xff]
        %v1553 = vld [vmem:[#allocation5 + $0x730] sm:$0xff]
        %v1554 = vld [vmem:[#allocation5 + $0x738] sm:$0xff]
        %v1555 = vld [vmem:[#allocation5 + $0x740] sm:$0xff]
        %v1556 = vld [vmem:[#allocation5 + $0x748] sm:$0xff]
        %v1557 = vld [vmem:[#allocation5 + $0x750] sm:$0xff]
        %v1558 = vld [vmem:[#allocation5 + $0x758] sm:$0xff]
        %v1559 = vld [vmem:[#allocation5 + $0x760] sm:$0xff]
        %v1560 = vld [vmem:[#allocation5 + $0x768] sm:$0xff]
        %v1561 = vld [vmem:[#allocation5 + $0x770] sm:$0xff]
        %v1562 = vld [vmem:[#allocation5 + $0x778] sm:$0xff]
        %v1563 = vld [vmem:[#allocation5 + $0x780] sm:$0xff]
        %v1564 = vld [vmem:[#allocation5 + $0x788] sm:$0xff]
        %v1565 = vld [vmem:[#allocation5 + $0x790] sm:$0xff]
        %v1566 = vld [vmem:[#allocation5 + $0x798] sm:$0xff]
        %v1567 = vld [vmem:[#allocation5 + $0x7a0] sm:$0xff]
        %v1568 = vld [vmem:[#allocation5 + $0x7a8] sm:$0xff]
        %v1569 = vld [vmem:[#allocation5 + $0x7b0] sm:$0xff]
        %v1570 = vld [vmem:[#allocation5 + $0x7b8] sm:$0xff]
        %v1571 = vld [vmem:[#allocation5 + $0x7c0] sm:$0xff]
        %v1572 = vld [vmem:[#allocation5 + $0x7c8] sm:$0xff]
        %v1573 = vld [vmem:[#allocation5 + $0x7d0] sm:$0xff]
        %v1574 = vld [vmem:[#allocation5 + $0x7d8] sm:$0xff]
        %v1575 = vld [vmem:[#allocation5 + $0x7e0] sm:$0xff]
        %v1576 = vld [vmem:[#allocation5 + $0x7e8] sm:$0xff]
        %v1577 = vld [vmem:[#allocation5 + $0x7f0] sm:$0xff]
        %v1578 = vld [vmem:[#allocation5 + $0x7f8] sm:$0xff]
        %1579 = vmatprep.subr.mxu0 0.0
        %1580 = vmatpush1.msra.mxu0 %v1338
        %1581 = vmatprep.subr.mxu0 0.0
        %1582 = vmatpush1.msra.mxu0 %v1337
        %1583 = vmatprep.subr.mxu0 0.0
        %1584 = vmatpush1.msra.mxu0 %v1336
        %1585 = vmatprep.subr.mxu0 0.0
        %1586 = vmatpush1.msra.mxu0 %v1335
        %1587 = vmatprep.subr.mxu0 0.0
        %1588 = vmatpush1.msra.mxu0 %v1334
        %1589 = vmatprep.subr.mxu0 0.0
        %1590 = vmatpush1.msra.mxu0 %v1333
        %1591 = vmatprep.subr.mxu0 0.0
        %1592 = vmatpush1.msra.mxu0 %v1332
        %1593 = vmatprep.subr.mxu0 0.0
        %1594 = vmatpush1.msra.mxu0 %v1331
        %1595 = vmatprep.subr.mxu0 0.0
        %1596 = vmatpush1.msra.mxu0 %v1330
        %1597 = vmatprep.subr.mxu0 0.0
        %1598 = vmatpush1.msra.mxu0 %v1329
        %1599 = vmatprep.subr.mxu0 0.0
        %1600 = vmatpush1.msra.mxu0 %v1328
        %1601 = vmatprep.subr.mxu0 0.0
        %1602 = vmatpush1.msra.mxu0 %v1327
        %1603 = vmatprep.subr.mxu0 0.0
        %1604 = vmatpush1.msra.mxu0 %v1326
        %1605 = vmatprep.subr.mxu0 0.0
        %1606 = vmatpush1.msra.mxu0 %v1325
        %1607 = vmatprep.subr.mxu0 0.0
        %1608 = vmatpush1.msra.mxu0 %v1324
        %1609 = vmatprep.subr.mxu0 0.0
        %1610 = vmatpush1.msra.mxu0 %v1323
        %1611 = vmatprep.subr.mxu0 0.0
        %1612 = vmatpush2.msra.mxu0 %v1354
        %1613 = vmatprep.subr.mxu0 0.0
        %1614 = vmatpush2.msra.mxu0 %v1353
        %1615 = vmatprep.subr.mxu0 0.0
        %1616 = vmatpush2.msra.mxu0 %v1352
        %1617 = vmatprep.subr.mxu0 0.0
        %1618 = vmatpush2.msra.mxu0 %v1351
        %1619 = vmatprep.subr.mxu0 0.0
        %1620 = vmatpush2.msra.mxu0 %v1350
        %1621 = vmatprep.subr.mxu0 0.0
        %1622 = vmatpush2.msra.mxu0 %v1349
        %1623 = vmatprep.subr.mxu0 0.0
        %1624 = vmatpush2.msra.mxu0 %v1348
        %1625 = vmatprep.subr.mxu0 0.0
        %1626 = vmatpush2.msra.mxu0 %v1347
        %1627 = vmatprep.subr.mxu0 0.0
        %1628 = vmatpush2.msra.mxu0 %v1346
        %1629 = vmatprep.subr.mxu0 0.0
        %1630 = vmatpush2.msra.mxu0 %v1345
        %1631 = vmatprep.subr.mxu0 0.0
        %1632 = vmatpush2.msra.mxu0 %v1344
        %1633 = vmatprep.subr.mxu0 0.0
        %1634 = vmatpush2.msra.mxu0 %v1343
        %1635 = vmatprep.subr.mxu0 0.0
        %1636 = vmatpush2.msra.mxu0 %v1342
        %1637 = vmatprep.subr.mxu0 0.0
        %1638 = vmatpush2.msra.mxu0 %v1341
        %1639 = vmatprep.subr.mxu0 0.0
        %1640 = vmatpush2.msra.mxu0 %v1340
        %1641 = vmatprep.subr.mxu0 0.0
        %1642 = vmatpush2.msra.mxu0 %v1339
        %1643 = vmatprep.mubr.f32.mxu0 %v300
        %1644 = vmatmul.mubr.f32.gmra.mxu0 %v299
        %v1645 = vpop.f32.mrf.mxu0
        %v1646 = vadd.f32 0.0, %v1645
        %v1647 = vpop.f32.mrf.mxu0
        %1648 = vmatprep.mubr.f32.mxu0 %v316
        %1649 = vmatmul.mubr.f32.gmra.mxu0 %v315
        %v1650 = vpop.f32.mrf.mxu0
        %v1651 = vadd.f32 0.0, %v1650
        %v1652 = vpop.f32.mrf.mxu0
        %1653 = vmatprep.mubr.f32.mxu0 %v332
        %1654 = vmatmul.mubr.f32.gmra.mxu0 %v331
        %v1655 = vpop.f32.mrf.mxu0
        %v1656 = vadd.f32 0.0, %v1655
        %v1657 = vpop.f32.mrf.mxu0
        %1658 = vmatprep.mubr.f32.mxu0 %v348
        %1659 = vmatmul.mubr.f32.gmra.mxu0 %v347
        %v1660 = vpop.f32.mrf.mxu0
        %v1661 = vadd.f32 0.0, %v1660
        %v1662 = vpop.f32.mrf.mxu0
        %1663 = vmatprep.mubr.f32.mxu0 %v364
        %1664 = vmatmul.mubr.f32.gmra.mxu0 %v363
        %v1665 = vpop.f32.mrf.mxu0
        %v1666 = vadd.f32 0.0, %v1665
        %v1667 = vpop.f32.mrf.mxu0
        %1668 = vmatprep.mubr.f32.mxu0 %v380
        %1669 = vmatmul.mubr.f32.gmra.mxu0 %v379
        %v1670 = vpop.f32.mrf.mxu0
        %v1671 = vadd.f32 0.0, %v1670
        %v1672 = vpop.f32.mrf.mxu0
        %1673 = vmatprep.mubr.f32.mxu0 %v396
        %1674 = vmatmul.mubr.f32.gmra.mxu0 %v395
        %v1675 = vpop.f32.mrf.mxu0
        %v1676 = vadd.f32 0.0, %v1675
        %v1677 = vpop.f32.mrf.mxu0
        %1678 = vmatprep.mubr.f32.mxu0 %v412
        %1679 = vmatmul.mubr.f32.gmra.mxu0 %v411
        %v1680 = vpop.f32.mrf.mxu0
        %v1681 = vadd.f32 0.0, %v1680
        %v1682 = vpop.f32.mrf.mxu0
        %1683 = vmatprep.mubr.f32.mxu0 %v428
        %1684 = vmatmul.mubr.f32.gmra.mxu0 %v427
        %v1685 = vpop.f32.mrf.mxu0
        %v1686 = vadd.f32 0.0, %v1685
        %v1687 = vpop.f32.mrf.mxu0
        %1688 = vmatprep.mubr.f32.mxu0 %v444
        %1689 = vmatmul.mubr.f32.gmra.mxu0 %v443
        %v1690 = vpop.f32.mrf.mxu0
        %v1691 = vadd.f32 0.0, %v1690
        %v1692 = vpop.f32.mrf.mxu0
        %1693 = vmatprep.mubr.f32.mxu0 %v460
        %1694 = vmatmul.mubr.f32.gmra.mxu0 %v459
        %v1695 = vpop.f32.mrf.mxu0
        %v1696 = vadd.f32 0.0, %v1695
        %v1697 = vpop.f32.mrf.mxu0
        %1698 = vmatprep.mubr.f32.mxu0 %v476
        %1699 = vmatmul.mubr.f32.gmra.mxu0 %v475
        %v1700 = vpop.f32.mrf.mxu0
        %v1701 = vadd.f32 0.0, %v1700
        %v1702 = vpop.f32.mrf.mxu0
        %1703 = vmatprep.mubr.f32.mxu0 %v492
        %1704 = vmatmul.mubr.f32.gmra.mxu0 %v491
        %v1705 = vpop.f32.mrf.mxu0
        %v1706 = vadd.f32 0.0, %v1705
        %v1707 = vpop.f32.mrf.mxu0
        %1708 = vmatprep.mubr.f32.mxu0 %v508
        %1709 = vmatmul.mubr.f32.gmra.mxu0 %v507
        %v1710 = vpop.f32.mrf.mxu0
        %v1711 = vadd.f32 0.0, %v1710
        %v1712 = vpop.f32.mrf.mxu0
        %1713 = vmatprep.mubr.f32.mxu0 %v524
        %1714 = vmatmul.mubr.f32.gmra.mxu0 %v523
        %v1715 = vpop.f32.mrf.mxu0
        %v1716 = vadd.f32 0.0, %v1715
        %v1717 = vpop.f32.mrf.mxu0
        %1718 = vmatprep.mubr.f32.mxu0 %v540
        %1719 = vmatmul.mubr.f32.gmra.mxu0 %v539
        %v1720 = vpop.f32.mrf.mxu0
        %v1721 = vadd.f32 0.0, %v1720
        %v1722 = vpop.f32.mrf.mxu0
        %1723 = vmatprep.mubr.f32.mxu0 %v556
        %1724 = vmatmul.mubr.f32.gmra.mxu0 %v555
        %v1725 = vpop.f32.mrf.mxu0
        %v1726 = vadd.f32 0.0, %v1725
        %v1727 = vpop.f32.mrf.mxu0
        %1728 = vmatprep.mubr.f32.mxu0 %v572
        %1729 = vmatmul.mubr.f32.gmra.mxu0 %v571
        %v1730 = vpop.f32.mrf.mxu0
        %v1731 = vadd.f32 0.0, %v1730
        %v1732 = vpop.f32.mrf.mxu0
        %1733 = vmatprep.mubr.f32.mxu0 %v588
        %1734 = vmatmul.mubr.f32.gmra.mxu0 %v587
        %v1735 = vpop.f32.mrf.mxu0
        %v1736 = vadd.f32 0.0, %v1735
        %v1737 = vpop.f32.mrf.mxu0
        %1738 = vmatprep.mubr.f32.mxu0 %v604
        %1739 = vmatmul.mubr.f32.gmra.mxu0 %v603
        %v1740 = vpop.f32.mrf.mxu0
        %v1741 = vadd.f32 0.0, %v1740
        %v1742 = vpop.f32.mrf.mxu0
        %1743 = vmatprep.mubr.f32.mxu0 %v620
        %1744 = vmatmul.mubr.f32.gmra.mxu0 %v619
        %v1745 = vpop.f32.mrf.mxu0
        %v1746 = vadd.f32 0.0, %v1745
        %v1747 = vpop.f32.mrf.mxu0
        %1748 = vmatprep.mubr.f32.mxu0 %v636
        %1749 = vmatmul.mubr.f32.gmra.mxu0 %v635
        %v1750 = vpop.f32.mrf.mxu0
        %v1751 = vadd.f32 0.0, %v1750
        %v1752 = vpop.f32.mrf.mxu0
        %1753 = vmatprep.mubr.f32.mxu0 %v652
        %1754 = vmatmul.mubr.f32.gmra.mxu0 %v651
        %v1755 = vpop.f32.mrf.mxu0
        %v1756 = vadd.f32 0.0, %v1755
        %v1757 = vpop.f32.mrf.mxu0
        %1758 = vmatprep.mubr.f32.mxu0 %v668
        %1759 = vmatmul.mubr.f32.gmra.mxu0 %v667
        %v1760 = vpop.f32.mrf.mxu0
        %v1761 = vadd.f32 0.0, %v1760
        %v1762 = vpop.f32.mrf.mxu0
        %1763 = vmatprep.mubr.f32.mxu0 %v684
        %1764 = vmatmul.mubr.f32.gmra.mxu0 %v683
        %v1765 = vpop.f32.mrf.mxu0
        %v1766 = vadd.f32 0.0, %v1765
        %v1767 = vpop.f32.mrf.mxu0
        %1768 = vmatprep.mubr.f32.mxu0 %v700
        %1769 = vmatmul.mubr.f32.gmra.mxu0 %v699
        %v1770 = vpop.f32.mrf.mxu0
        %v1771 = vadd.f32 0.0, %v1770
        %v1772 = vpop.f32.mrf.mxu0
        %1773 = vmatprep.mubr.f32.mxu0 %v716
        %1774 = vmatmul.mubr.f32.gmra.mxu0 %v715
        %v1775 = vpop.f32.mrf.mxu0
        %v1776 = vadd.f32 0.0, %v1775
        %v1777 = vpop.f32.mrf.mxu0
        %1778 = vmatprep.mubr.f32.mxu0 %v732
        %1779 = vmatmul.mubr.f32.gmra.mxu0 %v731
        %v1780 = vpop.f32.mrf.mxu0
        %v1781 = vadd.f32 0.0, %v1780
        %v1782 = vpop.f32.mrf.mxu0
        %1783 = vmatprep.mubr.f32.mxu0 %v748
        %1784 = vmatmul.mubr.f32.gmra.mxu0 %v747
        %v1785 = vpop.f32.mrf.mxu0
        %v1786 = vadd.f32 0.0, %v1785
        %v1787 = vpop.f32.mrf.mxu0
        %1788 = vmatprep.mubr.f32.mxu0 %v764
        %1789 = vmatmul.mubr.f32.gmra.mxu0 %v763
        %v1790 = vpop.f32.mrf.mxu0
        %v1791 = vadd.f32 0.0, %v1790
        %v1792 = vpop.f32.mrf.mxu0
        %1793 = vmatprep.mubr.f32.mxu0 %v780
        %1794 = vmatmul.mubr.f32.gmra.mxu0 %v779
        %v1795 = vpop.f32.mrf.mxu0
        %v1796 = vadd.f32 0.0, %v1795
        %v1797 = vpop.f32.mrf.mxu0
        %1798 = vmatprep.mubr.f32.mxu0 %v796
        %1799 = vmatmul.mubr.f32.gmra.mxu0 %v795
        %v1800 = vpop.f32.mrf.mxu0
        %v1801 = vadd.f32 0.0, %v1800
        %v1802 = vpop.f32.mrf.mxu0
        %1803 = vmatprep.mubr.f32.mxu0 %v812
        %1804 = vmatmul.mubr.f32.gmra.mxu0 %v811
        %v1805 = vpop.f32.mrf.mxu0
        %v1806 = vadd.f32 0.0, %v1805
        %v1807 = vpop.f32.mrf.mxu0
        %1808 = vmatprep.mubr.f32.mxu0 %v828
        %1809 = vmatmul.mubr.f32.gmra.mxu0 %v827
        %v1810 = vpop.f32.mrf.mxu0
        %v1811 = vadd.f32 0.0, %v1810
        %v1812 = vpop.f32.mrf.mxu0
        %1813 = vmatprep.mubr.f32.mxu0 %v844
        %1814 = vmatmul.mubr.f32.gmra.mxu0 %v843
        %v1815 = vpop.f32.mrf.mxu0
        %v1816 = vadd.f32 0.0, %v1815
        %v1817 = vpop.f32.mrf.mxu0
        %1818 = vmatprep.mubr.f32.mxu0 %v860
        %1819 = vmatmul.mubr.f32.gmra.mxu0 %v859
        %v1820 = vpop.f32.mrf.mxu0
        %v1821 = vadd.f32 0.0, %v1820
        %v1822 = vpop.f32.mrf.mxu0
        %1823 = vmatprep.mubr.f32.mxu0 %v876
        %1824 = vmatmul.mubr.f32.gmra.mxu0 %v875
        %v1825 = vpop.f32.mrf.mxu0
        %v1826 = vadd.f32 0.0, %v1825
        %v1827 = vpop.f32.mrf.mxu0
        %1828 = vmatprep.mubr.f32.mxu0 %v892
        %1829 = vmatmul.mubr.f32.gmra.mxu0 %v891
        %v1830 = vpop.f32.mrf.mxu0
        %v1831 = vadd.f32 0.0, %v1830
        %v1832 = vpop.f32.mrf.mxu0
        %1833 = vmatprep.mubr.f32.mxu0 %v908
        %1834 = vmatmul.mubr.f32.gmra.mxu0 %v907
        %v1835 = vpop.f32.mrf.mxu0
        %v1836 = vadd.f32 0.0, %v1835
        %v1837 = vpop.f32.mrf.mxu0
        %1838 = vmatprep.mubr.f32.mxu0 %v924
        %1839 = vmatmul.mubr.f32.gmra.mxu0 %v923
        %v1840 = vpop.f32.mrf.mxu0
        %v1841 = vadd.f32 0.0, %v1840
        %v1842 = vpop.f32.mrf.mxu0
        %1843 = vmatprep.mubr.f32.mxu0 %v940
        %1844 = vmatmul.mubr.f32.gmra.mxu0 %v939
        %v1845 = vpop.f32.mrf.mxu0
        %v1846 = vadd.f32 0.0, %v1845
        %v1847 = vpop.f32.mrf.mxu0
        %1848 = vmatprep.mubr.f32.mxu0 %v956
        %1849 = vmatmul.mubr.f32.gmra.mxu0 %v955
        %v1850 = vpop.f32.mrf.mxu0
        %v1851 = vadd.f32 0.0, %v1850
        %v1852 = vpop.f32.mrf.mxu0
        %1853 = vmatprep.mubr.f32.mxu0 %v972
        %1854 = vmatmul.mubr.f32.gmra.mxu0 %v971
        %v1855 = vpop.f32.mrf.mxu0
        %v1856 = vadd.f32 0.0, %v1855
        %v1857 = vpop.f32.mrf.mxu0
        %1858 = vmatprep.mubr.f32.mxu0 %v988
        %1859 = vmatmul.mubr.f32.gmra.mxu0 %v987
        %v1860 = vpop.f32.mrf.mxu0
        %v1861 = vadd.f32 0.0, %v1860
        %v1862 = vpop.f32.mrf.mxu0
        %1863 = vmatprep.mubr.f32.mxu0 %v1004
        %1864 = vmatmul.mubr.f32.gmra.mxu0 %v1003
        %v1865 = vpop.f32.mrf.mxu0
        %v1866 = vadd.f32 0.0, %v1865
        %v1867 = vpop.f32.mrf.mxu0
        %1868 = vmatprep.mubr.f32.mxu0 %v1020
        %1869 = vmatmul.mubr.f32.gmra.mxu0 %v1019
        %v1870 = vpop.f32.mrf.mxu0
        %v1871 = vadd.f32 0.0, %v1870
        %v1872 = vpop.f32.mrf.mxu0
        %1873 = vmatprep.mubr.f32.mxu0 %v1036
        %1874 = vmatmul.mubr.f32.gmra.mxu0 %v1035
        %v1875 = vpop.f32.mrf.mxu0
        %v1876 = vadd.f32 0.0, %v1875
        %v1877 = vpop.f32.mrf.mxu0
        %1878 = vmatprep.mubr.f32.mxu0 %v1052
        %1879 = vmatmul.mubr.f32.gmra.mxu0 %v1051
        %v1880 = vpop.f32.mrf.mxu0
        %v1881 = vadd.f32 0.0, %v1880
        %v1882 = vpop.f32.mrf.mxu0
        %1883 = vmatprep.mubr.f32.mxu0 %v1068
        %1884 = vmatmul.mubr.f32.gmra.mxu0 %v1067
        %v1885 = vpop.f32.mrf.mxu0
        %v1886 = vadd.f32 0.0, %v1885
        %v1887 = vpop.f32.mrf.mxu0
        %1888 = vmatprep.mubr.f32.mxu0 %v1084
        %1889 = vmatmul.mubr.f32.gmra.mxu0 %v1083
        %v1890 = vpop.f32.mrf.mxu0
        %v1891 = vadd.f32 0.0, %v1890
        %v1892 = vpop.f32.mrf.mxu0
        %1893 = vmatprep.mubr.f32.mxu0 %v1100
        %1894 = vmatmul.mubr.f32.gmra.mxu0 %v1099
        %v1895 = vpop.f32.mrf.mxu0
        %v1896 = vadd.f32 0.0, %v1895
        %v1897 = vpop.f32.mrf.mxu0
        %1898 = vmatprep.mubr.f32.mxu0 %v1116
        %1899 = vmatmul.mubr.f32.gmra.mxu0 %v1115
        %v1900 = vpop.f32.mrf.mxu0
        %v1901 = vadd.f32 0.0, %v1900
        %v1902 = vpop.f32.mrf.mxu0
        %1903 = vmatprep.mubr.f32.mxu0 %v1132
        %1904 = vmatmul.mubr.f32.gmra.mxu0 %v1131
        %v1905 = vpop.f32.mrf.mxu0
        %v1906 = vadd.f32 0.0, %v1905
        %v1907 = vpop.f32.mrf.mxu0
        %1908 = vmatprep.mubr.f32.mxu0 %v1148
        %1909 = vmatmul.mubr.f32.gmra.mxu0 %v1147
        %v1910 = vpop.f32.mrf.mxu0
        %v1911 = vadd.f32 0.0, %v1910
        %v1912 = vpop.f32.mrf.mxu0
        %1913 = vmatprep.mubr.f32.mxu0 %v1164
        %1914 = vmatmul.mubr.f32.gmra.mxu0 %v1163
        %v1915 = vpop.f32.mrf.mxu0
        %v1916 = vadd.f32 0.0, %v1915
        %v1917 = vpop.f32.mrf.mxu0
        %1918 = vmatprep.mubr.f32.mxu0 %v1180
        %1919 = vmatmul.mubr.f32.gmra.mxu0 %v1179
        %v1920 = vpop.f32.mrf.mxu0
        %v1921 = vadd.f32 0.0, %v1920
        %v1922 = vpop.f32.mrf.mxu0
        %1923 = vmatprep.mubr.f32.mxu0 %v1196
        %1924 = vmatmul.mubr.f32.gmra.mxu0 %v1195
        %v1925 = vpop.f32.mrf.mxu0
        %v1926 = vadd.f32 0.0, %v1925
        %v1927 = vpop.f32.mrf.mxu0
        %1928 = vmatprep.mubr.f32.mxu0 %v1212
        %1929 = vmatmul.mubr.f32.gmra.mxu0 %v1211
        %v1930 = vpop.f32.mrf.mxu0
        %v1931 = vadd.f32 0.0, %v1930
        %v1932 = vpop.f32.mrf.mxu0
        %1933 = vmatprep.mubr.f32.mxu0 %v1228
        %1934 = vmatmul.mubr.f32.gmra.mxu0 %v1227
        %v1935 = vpop.f32.mrf.mxu0
        %v1936 = vadd.f32 0.0, %v1935
        %v1937 = vpop.f32.mrf.mxu0
        %1938 = vmatprep.mubr.f32.mxu0 %v1244
        %1939 = vmatmul.mubr.f32.gmra.mxu0 %v1243
        %v1940 = vpop.f32.mrf.mxu0
        %v1941 = vadd.f32 0.0, %v1940
        %v1942 = vpop.f32.mrf.mxu0
        %1943 = vmatprep.mubr.f32.mxu0 %v1260
        %1944 = vmatmul.mubr.f32.gmra.mxu0 %v1259
        %v1945 = vpop.f32.mrf.mxu0
        %v1946 = vadd.f32 0.0, %v1945
        %v1947 = vpop.f32.mrf.mxu0
        %1948 = vmatprep.mubr.f32.mxu0 %v1276
        %1949 = vmatmul.mubr.f32.gmra.mxu0 %v1275
        %v1950 = vpop.f32.mrf.mxu0
        %v1951 = vadd.f32 0.0, %v1950
        %v1952 = vpop.f32.mrf.mxu0
        %1953 = vmatprep.mubr.f32.mxu0 %v1292
        %1954 = vmatmul.mubr.f32.gmra.mxu0 %v1291
        %v1955 = vpop.f32.mrf.mxu0
        %v1956 = vadd.f32 0.0, %v1955
        %v1957 = vpop.f32.mrf.mxu0
        %1958 = vmatprep.mubr.f32.mxu0 %v1308
        %1959 = vmatmul.mubr.f32.gmra.mxu0 %v1307
        %v1960 = vpop.f32.mrf.mxu0
        %v1961 = vadd.f32 0.0, %v1960
        %v1962 = vpop.f32.mrf.mxu0
        %1963 = vdwg.mxu0
        %1964 = vmatprep.subr.mxu0 0.0
        %1965 = vmatpush1.msra.mxu0 %v1370
        %1966 = vmatprep.subr.mxu0 0.0
        %1967 = vmatpush1.msra.mxu0 %v1369
        %1968 = vmatprep.subr.mxu0 0.0
        %1969 = vmatpush1.msra.mxu0 %v1368
        %1970 = vmatprep.subr.mxu0 0.0
        %1971 = vmatpush1.msra.mxu0 %v1367
        %1972 = vmatprep.subr.mxu0 0.0
        %1973 = vmatpush1.msra.mxu0 %v1366
        %1974 = vmatprep.subr.mxu0 0.0
        %1975 = vmatpush1.msra.mxu0 %v1365
        %1976 = vmatprep.subr.mxu0 0.0
        %1977 = vmatpush1.msra.mxu0 %v1364
        %1978 = vmatprep.subr.mxu0 0.0
        %1979 = vmatpush1.msra.mxu0 %v1363
        %1980 = vmatprep.subr.mxu0 0.0
        %1981 = vmatpush1.msra.mxu0 %v1362
        %1982 = vmatprep.subr.mxu0 0.0
        %1983 = vmatpush1.msra.mxu0 %v1361
        %1984 = vmatprep.subr.mxu0 0.0
        %1985 = vmatpush1.msra.mxu0 %v1360
        %1986 = vmatprep.subr.mxu0 0.0
        %1987 = vmatpush1.msra.mxu0 %v1359
        %1988 = vmatprep.subr.mxu0 0.0
        %1989 = vmatpush1.msra.mxu0 %v1358
        %1990 = vmatprep.subr.mxu0 0.0
        %1991 = vmatpush1.msra.mxu0 %v1357
        %1992 = vmatprep.subr.mxu0 0.0
        %1993 = vmatpush1.msra.mxu0 %v1356
        %1994 = vmatprep.subr.mxu0 0.0
        %1995 = vmatpush1.msra.mxu0 %v1355
        %1996 = vmatprep.subr.mxu0 0.0
        %1997 = vmatpush2.msra.mxu0 %v1386
        %1998 = vmatprep.subr.mxu0 0.0
        %1999 = vmatpush2.msra.mxu0 %v1385
        %2000 = vmatprep.subr.mxu0 0.0
        %2001 = vmatpush2.msra.mxu0 %v1384
        %2002 = vmatprep.subr.mxu0 0.0
        %2003 = vmatpush2.msra.mxu0 %v1383
        %2004 = vmatprep.subr.mxu0 0.0
        %2005 = vmatpush2.msra.mxu0 %v1382
        %2006 = vmatprep.subr.mxu0 0.0
        %2007 = vmatpush2.msra.mxu0 %v1381
        %2008 = vmatprep.subr.mxu0 0.0
        %2009 = vmatpush2.msra.mxu0 %v1380
        %2010 = vmatprep.subr.mxu0 0.0
        %2011 = vmatpush2.msra.mxu0 %v1379
        %2012 = vmatprep.subr.mxu0 0.0
        %2013 = vmatpush2.msra.mxu0 %v1378
        %2014 = vmatprep.subr.mxu0 0.0
        %2015 = vmatpush2.msra.mxu0 %v1377
        %2016 = vmatprep.subr.mxu0 0.0
        %2017 = vmatpush2.msra.mxu0 %v1376
        %2018 = vmatprep.subr.mxu0 0.0
        %2019 = vmatpush2.msra.mxu0 %v1375
        %2020 = vmatprep.subr.mxu0 0.0
        %2021 = vmatpush2.msra.mxu0 %v1374
        %2022 = vmatprep.subr.mxu0 0.0
        %2023 = vmatpush2.msra.mxu0 %v1373
        %2024 = vmatprep.subr.mxu0 0.0
        %2025 = vmatpush2.msra.mxu0 %v1372
        %2026 = vmatprep.subr.mxu0 0.0
        %2027 = vmatpush2.msra.mxu0 %v1371
        %2028 = vmatprep.mubr.f32.mxu0 %v302
        %2029 = vmatmul.mubr.f32.gmra.mxu0 %v301
        %v2030 = vpop.f32.mrf.mxu0
        %v2031 = vadd.f32 %v1646, %v2030
        %v2032 = vpop.f32.mrf.mxu0
        %2033 = vmatprep.mubr.f32.mxu0 %v318
        %2034 = vmatmul.mubr.f32.gmra.mxu0 %v317
        %v2035 = vpop.f32.mrf.mxu0
        %v2036 = vadd.f32 %v1651, %v2035
        %v2037 = vpop.f32.mrf.mxu0
        %2038 = vmatprep.mubr.f32.mxu0 %v334
        %2039 = vmatmul.mubr.f32.gmra.mxu0 %v333
        %v2040 = vpop.f32.mrf.mxu0
        %v2041 = vadd.f32 %v1656, %v2040
        %v2042 = vpop.f32.mrf.mxu0
        %2043 = vmatprep.mubr.f32.mxu0 %v350
        %2044 = vmatmul.mubr.f32.gmra.mxu0 %v349
        %v2045 = vpop.f32.mrf.mxu0
        %v2046 = vadd.f32 %v1661, %v2045
        %v2047 = vpop.f32.mrf.mxu0
        %2048 = vmatprep.mubr.f32.mxu0 %v366
        %2049 = vmatmul.mubr.f32.gmra.mxu0 %v365
        %v2050 = vpop.f32.mrf.mxu0
        %v2051 = vadd.f32 %v1666, %v2050
        %v2052 = vpop.f32.mrf.mxu0
        %2053 = vmatprep.mubr.f32.mxu0 %v382
        %2054 = vmatmul.mubr.f32.gmra.mxu0 %v381
        %v2055 = vpop.f32.mrf.mxu0
        %v2056 = vadd.f32 %v1671, %v2055
        %v2057 = vpop.f32.mrf.mxu0
        %2058 = vmatprep.mubr.f32.mxu0 %v398
        %2059 = vmatmul.mubr.f32.gmra.mxu0 %v397
        %v2060 = vpop.f32.mrf.mxu0
        %v2061 = vadd.f32 %v1676, %v2060
        %v2062 = vpop.f32.mrf.mxu0
        %2063 = vmatprep.mubr.f32.mxu0 %v414
        %2064 = vmatmul.mubr.f32.gmra.mxu0 %v413
        %v2065 = vpop.f32.mrf.mxu0
        %v2066 = vadd.f32 %v1681, %v2065
        %v2067 = vpop.f32.mrf.mxu0
        %2068 = vmatprep.mubr.f32.mxu0 %v430
        %2069 = vmatmul.mubr.f32.gmra.mxu0 %v429
        %v2070 = vpop.f32.mrf.mxu0
        %v2071 = vadd.f32 %v1686, %v2070
        %v2072 = vpop.f32.mrf.mxu0
        %2073 = vmatprep.mubr.f32.mxu0 %v446
        %2074 = vmatmul.mubr.f32.gmra.mxu0 %v445
        %v2075 = vpop.f32.mrf.mxu0
        %v2076 = vadd.f32 %v1691, %v2075
        %v2077 = vpop.f32.mrf.mxu0
        %2078 = vmatprep.mubr.f32.mxu0 %v462
        %2079 = vmatmul.mubr.f32.gmra.mxu0 %v461
        %v2080 = vpop.f32.mrf.mxu0
        %v2081 = vadd.f32 %v1696, %v2080
        %v2082 = vpop.f32.mrf.mxu0
        %2083 = vmatprep.mubr.f32.mxu0 %v478
        %2084 = vmatmul.mubr.f32.gmra.mxu0 %v477
        %v2085 = vpop.f32.mrf.mxu0
        %v2086 = vadd.f32 %v1701, %v2085
        %v2087 = vpop.f32.mrf.mxu0
        %2088 = vmatprep.mubr.f32.mxu0 %v494
        %2089 = vmatmul.mubr.f32.gmra.mxu0 %v493
        %v2090 = vpop.f32.mrf.mxu0
        %v2091 = vadd.f32 %v1706, %v2090
        %v2092 = vpop.f32.mrf.mxu0
        %2093 = vmatprep.mubr.f32.mxu0 %v510
        %2094 = vmatmul.mubr.f32.gmra.mxu0 %v509
        %v2095 = vpop.f32.mrf.mxu0
        %v2096 = vadd.f32 %v1711, %v2095
        %v2097 = vpop.f32.mrf.mxu0
        %2098 = vmatprep.mubr.f32.mxu0 %v526
        %2099 = vmatmul.mubr.f32.gmra.mxu0 %v525
        %v2100 = vpop.f32.mrf.mxu0
        %v2101 = vadd.f32 %v1716, %v2100
        %v2102 = vpop.f32.mrf.mxu0
        %2103 = vmatprep.mubr.f32.mxu0 %v542
        %2104 = vmatmul.mubr.f32.gmra.mxu0 %v541
        %v2105 = vpop.f32.mrf.mxu0
        %v2106 = vadd.f32 %v1721, %v2105
        %v2107 = vpop.f32.mrf.mxu0
        %2108 = vmatprep.mubr.f32.mxu0 %v558
        %2109 = vmatmul.mubr.f32.gmra.mxu0 %v557
        %v2110 = vpop.f32.mrf.mxu0
        %v2111 = vadd.f32 %v1726, %v2110
        %v2112 = vpop.f32.mrf.mxu0
        %2113 = vmatprep.mubr.f32.mxu0 %v574
        %2114 = vmatmul.mubr.f32.gmra.mxu0 %v573
        %v2115 = vpop.f32.mrf.mxu0
        %v2116 = vadd.f32 %v1731, %v2115
        %v2117 = vpop.f32.mrf.mxu0
        %2118 = vmatprep.mubr.f32.mxu0 %v590
        %2119 = vmatmul.mubr.f32.gmra.mxu0 %v589
        %v2120 = vpop.f32.mrf.mxu0
        %v2121 = vadd.f32 %v1736, %v2120
        %v2122 = vpop.f32.mrf.mxu0
        %2123 = vmatprep.mubr.f32.mxu0 %v606
        %2124 = vmatmul.mubr.f32.gmra.mxu0 %v605
        %v2125 = vpop.f32.mrf.mxu0
        %v2126 = vadd.f32 %v1741, %v2125
        %v2127 = vpop.f32.mrf.mxu0
        %2128 = vmatprep.mubr.f32.mxu0 %v622
        %2129 = vmatmul.mubr.f32.gmra.mxu0 %v621
        %v2130 = vpop.f32.mrf.mxu0
        %v2131 = vadd.f32 %v1746, %v2130
        %v2132 = vpop.f32.mrf.mxu0
        %2133 = vmatprep.mubr.f32.mxu0 %v638
        %2134 = vmatmul.mubr.f32.gmra.mxu0 %v637
        %v2135 = vpop.f32.mrf.mxu0
        %v2136 = vadd.f32 %v1751, %v2135
        %v2137 = vpop.f32.mrf.mxu0
        %2138 = vmatprep.mubr.f32.mxu0 %v654
        %2139 = vmatmul.mubr.f32.gmra.mxu0 %v653
        %v2140 = vpop.f32.mrf.mxu0
        %v2141 = vadd.f32 %v1756, %v2140
        %v2142 = vpop.f32.mrf.mxu0
        %2143 = vmatprep.mubr.f32.mxu0 %v670
        %2144 = vmatmul.mubr.f32.gmra.mxu0 %v669
        %v2145 = vpop.f32.mrf.mxu0
        %v2146 = vadd.f32 %v1761, %v2145
        %v2147 = vpop.f32.mrf.mxu0
        %2148 = vmatprep.mubr.f32.mxu0 %v686
        %2149 = vmatmul.mubr.f32.gmra.mxu0 %v685
        %v2150 = vpop.f32.mrf.mxu0
        %v2151 = vadd.f32 %v1766, %v2150
        %v2152 = vpop.f32.mrf.mxu0
        %2153 = vmatprep.mubr.f32.mxu0 %v702
        %2154 = vmatmul.mubr.f32.gmra.mxu0 %v701
        %v2155 = vpop.f32.mrf.mxu0
        %v2156 = vadd.f32 %v1771, %v2155
        %v2157 = vpop.f32.mrf.mxu0
        %2158 = vmatprep.mubr.f32.mxu0 %v718
        %2159 = vmatmul.mubr.f32.gmra.mxu0 %v717
        %v2160 = vpop.f32.mrf.mxu0
        %v2161 = vadd.f32 %v1776, %v2160
        %v2162 = vpop.f32.mrf.mxu0
        %2163 = vmatprep.mubr.f32.mxu0 %v734
        %2164 = vmatmul.mubr.f32.gmra.mxu0 %v733
        %v2165 = vpop.f32.mrf.mxu0
        %v2166 = vadd.f32 %v1781, %v2165
        %v2167 = vpop.f32.mrf.mxu0
        %2168 = vmatprep.mubr.f32.mxu0 %v750
        %2169 = vmatmul.mubr.f32.gmra.mxu0 %v749
        %v2170 = vpop.f32.mrf.mxu0
        %v2171 = vadd.f32 %v1786, %v2170
        %v2172 = vpop.f32.mrf.mxu0
        %2173 = vmatprep.mubr.f32.mxu0 %v766
        %2174 = vmatmul.mubr.f32.gmra.mxu0 %v765
        %v2175 = vpop.f32.mrf.mxu0
        %v2176 = vadd.f32 %v1791, %v2175
        %v2177 = vpop.f32.mrf.mxu0
        %2178 = vmatprep.mubr.f32.mxu0 %v782
        %2179 = vmatmul.mubr.f32.gmra.mxu0 %v781
        %v2180 = vpop.f32.mrf.mxu0
        %v2181 = vadd.f32 %v1796, %v2180
        %v2182 = vpop.f32.mrf.mxu0
        %2183 = vmatprep.mubr.f32.mxu0 %v798
        %2184 = vmatmul.mubr.f32.gmra.mxu0 %v797
        %v2185 = vpop.f32.mrf.mxu0
        %v2186 = vadd.f32 %v1801, %v2185
        %v2187 = vpop.f32.mrf.mxu0
        %2188 = vmatprep.mubr.f32.mxu0 %v814
        %2189 = vmatmul.mubr.f32.gmra.mxu0 %v813
        %v2190 = vpop.f32.mrf.mxu0
        %v2191 = vadd.f32 %v1806, %v2190
        %v2192 = vpop.f32.mrf.mxu0
        %2193 = vmatprep.mubr.f32.mxu0 %v830
        %2194 = vmatmul.mubr.f32.gmra.mxu0 %v829
        %v2195 = vpop.f32.mrf.mxu0
        %v2196 = vadd.f32 %v1811, %v2195
        %v2197 = vpop.f32.mrf.mxu0
        %2198 = vmatprep.mubr.f32.mxu0 %v846
        %2199 = vmatmul.mubr.f32.gmra.mxu0 %v845
        %v2200 = vpop.f32.mrf.mxu0
        %v2201 = vadd.f32 %v1816, %v2200
        %v2202 = vpop.f32.mrf.mxu0
        %2203 = vmatprep.mubr.f32.mxu0 %v862
        %2204 = vmatmul.mubr.f32.gmra.mxu0 %v861
        %v2205 = vpop.f32.mrf.mxu0
        %v2206 = vadd.f32 %v1821, %v2205
        %v2207 = vpop.f32.mrf.mxu0
        %2208 = vmatprep.mubr.f32.mxu0 %v878
        %2209 = vmatmul.mubr.f32.gmra.mxu0 %v877
        %v2210 = vpop.f32.mrf.mxu0
        %v2211 = vadd.f32 %v1826, %v2210
        %v2212 = vpop.f32.mrf.mxu0
        %2213 = vmatprep.mubr.f32.mxu0 %v894
        %2214 = vmatmul.mubr.f32.gmra.mxu0 %v893
        %v2215 = vpop.f32.mrf.mxu0
        %v2216 = vadd.f32 %v1831, %v2215
        %v2217 = vpop.f32.mrf.mxu0
        %2218 = vmatprep.mubr.f32.mxu0 %v910
        %2219 = vmatmul.mubr.f32.gmra.mxu0 %v909
        %v2220 = vpop.f32.mrf.mxu0
        %v2221 = vadd.f32 %v1836, %v2220
        %v2222 = vpop.f32.mrf.mxu0
        %2223 = vmatprep.mubr.f32.mxu0 %v926
        %2224 = vmatmul.mubr.f32.gmra.mxu0 %v925
        %v2225 = vpop.f32.mrf.mxu0
        %v2226 = vadd.f32 %v1841, %v2225
        %v2227 = vpop.f32.mrf.mxu0
        %2228 = vmatprep.mubr.f32.mxu0 %v942
        %2229 = vmatmul.mubr.f32.gmra.mxu0 %v941
        %v2230 = vpop.f32.mrf.mxu0
        %v2231 = vadd.f32 %v1846, %v2230
        %v2232 = vpop.f32.mrf.mxu0
        %2233 = vmatprep.mubr.f32.mxu0 %v958
        %2234 = vmatmul.mubr.f32.gmra.mxu0 %v957
        %v2235 = vpop.f32.mrf.mxu0
        %v2236 = vadd.f32 %v1851, %v2235
        %v2237 = vpop.f32.mrf.mxu0
        %2238 = vmatprep.mubr.f32.mxu0 %v974
        %2239 = vmatmul.mubr.f32.gmra.mxu0 %v973
        %v2240 = vpop.f32.mrf.mxu0
        %v2241 = vadd.f32 %v1856, %v2240
        %v2242 = vpop.f32.mrf.mxu0
        %2243 = vmatprep.mubr.f32.mxu0 %v990
        %2244 = vmatmul.mubr.f32.gmra.mxu0 %v989
        %v2245 = vpop.f32.mrf.mxu0
        %v2246 = vadd.f32 %v1861, %v2245
        %v2247 = vpop.f32.mrf.mxu0
        %2248 = vmatprep.mubr.f32.mxu0 %v1006
        %2249 = vmatmul.mubr.f32.gmra.mxu0 %v1005
        %v2250 = vpop.f32.mrf.mxu0
        %v2251 = vadd.f32 %v1866, %v2250
        %v2252 = vpop.f32.mrf.mxu0
        %2253 = vmatprep.mubr.f32.mxu0 %v1022
        %2254 = vmatmul.mubr.f32.gmra.mxu0 %v1021
        %v2255 = vpop.f32.mrf.mxu0
        %v2256 = vadd.f32 %v1871, %v2255
        %v2257 = vpop.f32.mrf.mxu0
        %2258 = vmatprep.mubr.f32.mxu0 %v1038
        %2259 = vmatmul.mubr.f32.gmra.mxu0 %v1037
        %v2260 = vpop.f32.mrf.mxu0
        %v2261 = vadd.f32 %v1876, %v2260
        %v2262 = vpop.f32.mrf.mxu0
        %2263 = vmatprep.mubr.f32.mxu0 %v1054
        %2264 = vmatmul.mubr.f32.gmra.mxu0 %v1053
        %v2265 = vpop.f32.mrf.mxu0
        %v2266 = vadd.f32 %v1881, %v2265
        %v2267 = vpop.f32.mrf.mxu0
        %2268 = vmatprep.mubr.f32.mxu0 %v1070
        %2269 = vmatmul.mubr.f32.gmra.mxu0 %v1069
        %v2270 = vpop.f32.mrf.mxu0
        %v2271 = vadd.f32 %v1886, %v2270
        %v2272 = vpop.f32.mrf.mxu0
        %2273 = vmatprep.mubr.f32.mxu0 %v1086
        %2274 = vmatmul.mubr.f32.gmra.mxu0 %v1085
        %v2275 = vpop.f32.mrf.mxu0
        %v2276 = vadd.f32 %v1891, %v2275
        %v2277 = vpop.f32.mrf.mxu0
        %2278 = vmatprep.mubr.f32.mxu0 %v1102
        %2279 = vmatmul.mubr.f32.gmra.mxu0 %v1101
        %v2280 = vpop.f32.mrf.mxu0
        %v2281 = vadd.f32 %v1896, %v2280
        %v2282 = vpop.f32.mrf.mxu0
        %2283 = vmatprep.mubr.f32.mxu0 %v1118
        %2284 = vmatmul.mubr.f32.gmra.mxu0 %v1117
        %v2285 = vpop.f32.mrf.mxu0
        %v2286 = vadd.f32 %v1901, %v2285
        %v2287 = vpop.f32.mrf.mxu0
        %2288 = vmatprep.mubr.f32.mxu0 %v1134
        %2289 = vmatmul.mubr.f32.gmra.mxu0 %v1133
        %v2290 = vpop.f32.mrf.mxu0
        %v2291 = vadd.f32 %v1906, %v2290
        %v2292 = vpop.f32.mrf.mxu0
        %2293 = vmatprep.mubr.f32.mxu0 %v1150
        %2294 = vmatmul.mubr.f32.gmra.mxu0 %v1149
        %v2295 = vpop.f32.mrf.mxu0
        %v2296 = vadd.f32 %v1911, %v2295
        %v2297 = vpop.f32.mrf.mxu0
        %2298 = vmatprep.mubr.f32.mxu0 %v1166
        %2299 = vmatmul.mubr.f32.gmra.mxu0 %v1165
        %v2300 = vpop.f32.mrf.mxu0
        %v2301 = vadd.f32 %v1916, %v2300
        %v2302 = vpop.f32.mrf.mxu0
        %2303 = vmatprep.mubr.f32.mxu0 %v1182
        %2304 = vmatmul.mubr.f32.gmra.mxu0 %v1181
        %v2305 = vpop.f32.mrf.mxu0
        %v2306 = vadd.f32 %v1921, %v2305
        %v2307 = vpop.f32.mrf.mxu0
        %2308 = vmatprep.mubr.f32.mxu0 %v1198
        %2309 = vmatmul.mubr.f32.gmra.mxu0 %v1197
        %v2310 = vpop.f32.mrf.mxu0
        %v2311 = vadd.f32 %v1926, %v2310
        %v2312 = vpop.f32.mrf.mxu0
        %2313 = vmatprep.mubr.f32.mxu0 %v1214
        %2314 = vmatmul.mubr.f32.gmra.mxu0 %v1213
        %v2315 = vpop.f32.mrf.mxu0
        %v2316 = vadd.f32 %v1931, %v2315
        %v2317 = vpop.f32.mrf.mxu0
        %2318 = vmatprep.mubr.f32.mxu0 %v1230
        %2319 = vmatmul.mubr.f32.gmra.mxu0 %v1229
        %v2320 = vpop.f32.mrf.mxu0
        %v2321 = vadd.f32 %v1936, %v2320
        %v2322 = vpop.f32.mrf.mxu0
        %2323 = vmatprep.mubr.f32.mxu0 %v1246
        %2324 = vmatmul.mubr.f32.gmra.mxu0 %v1245
        %v2325 = vpop.f32.mrf.mxu0
        %v2326 = vadd.f32 %v1941, %v2325
        %v2327 = vpop.f32.mrf.mxu0
        %2328 = vmatprep.mubr.f32.mxu0 %v1262
        %2329 = vmatmul.mubr.f32.gmra.mxu0 %v1261
        %v2330 = vpop.f32.mrf.mxu0
        %v2331 = vadd.f32 %v1946, %v2330
        %v2332 = vpop.f32.mrf.mxu0
        %2333 = vmatprep.mubr.f32.mxu0 %v1278
        %2334 = vmatmul.mubr.f32.gmra.mxu0 %v1277
        %v2335 = vpop.f32.mrf.mxu0
        %v2336 = vadd.f32 %v1951, %v2335
        %v2337 = vpop.f32.mrf.mxu0
        %2338 = vmatprep.mubr.f32.mxu0 %v1294
        %2339 = vmatmul.mubr.f32.gmra.mxu0 %v1293
        %v2340 = vpop.f32.mrf.mxu0
        %v2341 = vadd.f32 %v1956, %v2340
        %v2342 = vpop.f32.mrf.mxu0
        %2343 = vmatprep.mubr.f32.mxu0 %v1310
        %2344 = vmatmul.mubr.f32.gmra.mxu0 %v1309
        %v2345 = vpop.f32.mrf.mxu0
        %v2346 = vadd.f32 %v1961, %v2345
        %v2347 = vpop.f32.mrf.mxu0
        %2348 = vdwg.mxu0
        %2349 = vmatprep.subr.mxu0 0.0
        %2350 = vmatpush1.msra.mxu0 %v1402
        %2351 = vmatprep.subr.mxu0 0.0
        %2352 = vmatpush1.msra.mxu0 %v1401
        %2353 = vmatprep.subr.mxu0 0.0
        %2354 = vmatpush1.msra.mxu0 %v1400
        %2355 = vmatprep.subr.mxu0 0.0
        %2356 = vmatpush1.msra.mxu0 %v1399
        %2357 = vmatprep.subr.mxu0 0.0
        %2358 = vmatpush1.msra.mxu0 %v1398
        %2359 = vmatprep.subr.mxu0 0.0
        %2360 = vmatpush1.msra.mxu0 %v1397
        %2361 = vmatprep.subr.mxu0 0.0
        %2362 = vmatpush1.msra.mxu0 %v1396
        %2363 = vmatprep.subr.mxu0 0.0
        %2364 = vmatpush1.msra.mxu0 %v1395
        %2365 = vmatprep.subr.mxu0 0.0
        %2366 = vmatpush1.msra.mxu0 %v1394
        %2367 = vmatprep.subr.mxu0 0.0
        %2368 = vmatpush1.msra.mxu0 %v1393
        %2369 = vmatprep.subr.mxu0 0.0
        %2370 = vmatpush1.msra.mxu0 %v1392
        %2371 = vmatprep.subr.mxu0 0.0
        %2372 = vmatpush1.msra.mxu0 %v1391
        %2373 = vmatprep.subr.mxu0 0.0
        %2374 = vmatpush1.msra.mxu0 %v1390
        %2375 = vmatprep.subr.mxu0 0.0
        %2376 = vmatpush1.msra.mxu0 %v1389
        %2377 = vmatprep.subr.mxu0 0.0
        %2378 = vmatpush1.msra.mxu0 %v1388
        %2379 = vmatprep.subr.mxu0 0.0
        %2380 = vmatpush1.msra.mxu0 %v1387
        %2381 = vmatprep.subr.mxu0 0.0
        %2382 = vmatpush2.msra.mxu0 %v1418
        %2383 = vmatprep.subr.mxu0 0.0
        %2384 = vmatpush2.msra.mxu0 %v1417
        %2385 = vmatprep.subr.mxu0 0.0
        %2386 = vmatpush2.msra.mxu0 %v1416
        %2387 = vmatprep.subr.mxu0 0.0
        %2388 = vmatpush2.msra.mxu0 %v1415
        %2389 = vmatprep.subr.mxu0 0.0
        %2390 = vmatpush2.msra.mxu0 %v1414
        %2391 = vmatprep.subr.mxu0 0.0
        %2392 = vmatpush2.msra.mxu0 %v1413
        %2393 = vmatprep.subr.mxu0 0.0
        %2394 = vmatpush2.msra.mxu0 %v1412
        %2395 = vmatprep.subr.mxu0 0.0
        %2396 = vmatpush2.msra.mxu0 %v1411
        %2397 = vmatprep.subr.mxu0 0.0
        %2398 = vmatpush2.msra.mxu0 %v1410
        %2399 = vmatprep.subr.mxu0 0.0
        %2400 = vmatpush2.msra.mxu0 %v1409
        %2401 = vmatprep.subr.mxu0 0.0
        %2402 = vmatpush2.msra.mxu0 %v1408
        %2403 = vmatprep.subr.mxu0 0.0
        %2404 = vmatpush2.msra.mxu0 %v1407
        %2405 = vmatprep.subr.mxu0 0.0
        %2406 = vmatpush2.msra.mxu0 %v1406
        %2407 = vmatprep.subr.mxu0 0.0
        %2408 = vmatpush2.msra.mxu0 %v1405
        %2409 = vmatprep.subr.mxu0 0.0
        %2410 = vmatpush2.msra.mxu0 %v1404
        %2411 = vmatprep.subr.mxu0 0.0
        %2412 = vmatpush2.msra.mxu0 %v1403
        %2413 = vmatprep.mubr.f32.mxu0 %v304
        %2414 = vmatmul.mubr.f32.gmra.mxu0 %v303
        %v2415 = vpop.f32.mrf.mxu0
        %v2416 = vadd.f32 %v2031, %v2415
        %v2417 = vpop.f32.mrf.mxu0
        %2418 = vmatprep.mubr.f32.mxu0 %v320
        %2419 = vmatmul.mubr.f32.gmra.mxu0 %v319
        %v2420 = vpop.f32.mrf.mxu0
        %v2421 = vadd.f32 %v2036, %v2420
        %v2422 = vpop.f32.mrf.mxu0
        %2423 = vmatprep.mubr.f32.mxu0 %v336
        %2424 = vmatmul.mubr.f32.gmra.mxu0 %v335
        %v2425 = vpop.f32.mrf.mxu0
        %v2426 = vadd.f32 %v2041, %v2425
        %v2427 = vpop.f32.mrf.mxu0
        %2428 = vmatprep.mubr.f32.mxu0 %v352
        %2429 = vmatmul.mubr.f32.gmra.mxu0 %v351
        %v2430 = vpop.f32.mrf.mxu0
        %v2431 = vadd.f32 %v2046, %v2430
        %v2432 = vpop.f32.mrf.mxu0
        %2433 = vmatprep.mubr.f32.mxu0 %v368
        %2434 = vmatmul.mubr.f32.gmra.mxu0 %v367
        %v2435 = vpop.f32.mrf.mxu0
        %v2436 = vadd.f32 %v2051, %v2435
        %v2437 = vpop.f32.mrf.mxu0
        %2438 = vmatprep.mubr.f32.mxu0 %v384
        %2439 = vmatmul.mubr.f32.gmra.mxu0 %v383
        %v2440 = vpop.f32.mrf.mxu0
        %v2441 = vadd.f32 %v2056, %v2440
        %v2442 = vpop.f32.mrf.mxu0
        %2443 = vmatprep.mubr.f32.mxu0 %v400
        %2444 = vmatmul.mubr.f32.gmra.mxu0 %v399
        %v2445 = vpop.f32.mrf.mxu0
        %v2446 = vadd.f32 %v2061, %v2445
        %v2447 = vpop.f32.mrf.mxu0
        %2448 = vmatprep.mubr.f32.mxu0 %v416
        %2449 = vmatmul.mubr.f32.gmra.mxu0 %v415
        %v2450 = vpop.f32.mrf.mxu0
        %v2451 = vadd.f32 %v2066, %v2450
        %v2452 = vpop.f32.mrf.mxu0
        %2453 = vmatprep.mubr.f32.mxu0 %v432
        %2454 = vmatmul.mubr.f32.gmra.mxu0 %v431
        %v2455 = vpop.f32.mrf.mxu0
        %v2456 = vadd.f32 %v2071, %v2455
        %v2457 = vpop.f32.mrf.mxu0
        %2458 = vmatprep.mubr.f32.mxu0 %v448
        %2459 = vmatmul.mubr.f32.gmra.mxu0 %v447
        %v2460 = vpop.f32.mrf.mxu0
        %v2461 = vadd.f32 %v2076, %v2460
        %v2462 = vpop.f32.mrf.mxu0
        %2463 = vmatprep.mubr.f32.mxu0 %v464
        %2464 = vmatmul.mubr.f32.gmra.mxu0 %v463
        %v2465 = vpop.f32.mrf.mxu0
        %v2466 = vadd.f32 %v2081, %v2465
        %v2467 = vpop.f32.mrf.mxu0
        %2468 = vmatprep.mubr.f32.mxu0 %v480
        %2469 = vmatmul.mubr.f32.gmra.mxu0 %v479
        %v2470 = vpop.f32.mrf.mxu0
        %v2471 = vadd.f32 %v2086, %v2470
        %v2472 = vpop.f32.mrf.mxu0
        %2473 = vmatprep.mubr.f32.mxu0 %v496
        %2474 = vmatmul.mubr.f32.gmra.mxu0 %v495
        %v2475 = vpop.f32.mrf.mxu0
        %v2476 = vadd.f32 %v2091, %v2475
        %v2477 = vpop.f32.mrf.mxu0
        %2478 = vmatprep.mubr.f32.mxu0 %v512
        %2479 = vmatmul.mubr.f32.gmra.mxu0 %v511
        %v2480 = vpop.f32.mrf.mxu0
        %v2481 = vadd.f32 %v2096, %v2480
        %v2482 = vpop.f32.mrf.mxu0
        %2483 = vmatprep.mubr.f32.mxu0 %v528
        %2484 = vmatmul.mubr.f32.gmra.mxu0 %v527
        %v2485 = vpop.f32.mrf.mxu0
        %v2486 = vadd.f32 %v2101, %v2485
        %v2487 = vpop.f32.mrf.mxu0
        %2488 = vmatprep.mubr.f32.mxu0 %v544
        %2489 = vmatmul.mubr.f32.gmra.mxu0 %v543
        %v2490 = vpop.f32.mrf.mxu0
        %v2491 = vadd.f32 %v2106, %v2490
        %v2492 = vpop.f32.mrf.mxu0
        %2493 = vmatprep.mubr.f32.mxu0 %v560
        %2494 = vmatmul.mubr.f32.gmra.mxu0 %v559
        %v2495 = vpop.f32.mrf.mxu0
        %v2496 = vadd.f32 %v2111, %v2495
        %v2497 = vpop.f32.mrf.mxu0
        %2498 = vmatprep.mubr.f32.mxu0 %v576
        %2499 = vmatmul.mubr.f32.gmra.mxu0 %v575
        %v2500 = vpop.f32.mrf.mxu0
        %v2501 = vadd.f32 %v2116, %v2500
        %v2502 = vpop.f32.mrf.mxu0
        %2503 = vmatprep.mubr.f32.mxu0 %v592
        %2504 = vmatmul.mubr.f32.gmra.mxu0 %v591
        %v2505 = vpop.f32.mrf.mxu0
        %v2506 = vadd.f32 %v2121, %v2505
        %v2507 = vpop.f32.mrf.mxu0
        %2508 = vmatprep.mubr.f32.mxu0 %v608
        %2509 = vmatmul.mubr.f32.gmra.mxu0 %v607
        %v2510 = vpop.f32.mrf.mxu0
        %v2511 = vadd.f32 %v2126, %v2510
        %v2512 = vpop.f32.mrf.mxu0
        %2513 = vmatprep.mubr.f32.mxu0 %v624
        %2514 = vmatmul.mubr.f32.gmra.mxu0 %v623
        %v2515 = vpop.f32.mrf.mxu0
        %v2516 = vadd.f32 %v2131, %v2515
        %v2517 = vpop.f32.mrf.mxu0
        %2518 = vmatprep.mubr.f32.mxu0 %v640
        %2519 = vmatmul.mubr.f32.gmra.mxu0 %v639
        %v2520 = vpop.f32.mrf.mxu0
        %v2521 = vadd.f32 %v2136, %v2520
        %v2522 = vpop.f32.mrf.mxu0
        %2523 = vmatprep.mubr.f32.mxu0 %v656
        %2524 = vmatmul.mubr.f32.gmra.mxu0 %v655
        %v2525 = vpop.f32.mrf.mxu0
        %v2526 = vadd.f32 %v2141, %v2525
        %v2527 = vpop.f32.mrf.mxu0
        %2528 = vmatprep.mubr.f32.mxu0 %v672
        %2529 = vmatmul.mubr.f32.gmra.mxu0 %v671
        %v2530 = vpop.f32.mrf.mxu0
        %v2531 = vadd.f32 %v2146, %v2530
        %v2532 = vpop.f32.mrf.mxu0
        %2533 = vmatprep.mubr.f32.mxu0 %v688
        %2534 = vmatmul.mubr.f32.gmra.mxu0 %v687
        %v2535 = vpop.f32.mrf.mxu0
        %v2536 = vadd.f32 %v2151, %v2535
        %v2537 = vpop.f32.mrf.mxu0
        %2538 = vmatprep.mubr.f32.mxu0 %v704
        %2539 = vmatmul.mubr.f32.gmra.mxu0 %v703
        %v2540 = vpop.f32.mrf.mxu0
        %v2541 = vadd.f32 %v2156, %v2540
        %v2542 = vpop.f32.mrf.mxu0
        %2543 = vmatprep.mubr.f32.mxu0 %v720
        %2544 = vmatmul.mubr.f32.gmra.mxu0 %v719
        %v2545 = vpop.f32.mrf.mxu0
        %v2546 = vadd.f32 %v2161, %v2545
        %v2547 = vpop.f32.mrf.mxu0
        %2548 = vmatprep.mubr.f32.mxu0 %v736
        %2549 = vmatmul.mubr.f32.gmra.mxu0 %v735
        %v2550 = vpop.f32.mrf.mxu0
        %v2551 = vadd.f32 %v2166, %v2550
        %v2552 = vpop.f32.mrf.mxu0
        %2553 = vmatprep.mubr.f32.mxu0 %v752
        %2554 = vmatmul.mubr.f32.gmra.mxu0 %v751
        %v2555 = vpop.f32.mrf.mxu0
        %v2556 = vadd.f32 %v2171, %v2555
        %v2557 = vpop.f32.mrf.mxu0
        %2558 = vmatprep.mubr.f32.mxu0 %v768
        %2559 = vmatmul.mubr.f32.gmra.mxu0 %v767
        %v2560 = vpop.f32.mrf.mxu0
        %v2561 = vadd.f32 %v2176, %v2560
        %v2562 = vpop.f32.mrf.mxu0
        %2563 = vmatprep.mubr.f32.mxu0 %v784
        %2564 = vmatmul.mubr.f32.gmra.mxu0 %v783
        %v2565 = vpop.f32.mrf.mxu0
        %v2566 = vadd.f32 %v2181, %v2565
        %v2567 = vpop.f32.mrf.mxu0
        %2568 = vmatprep.mubr.f32.mxu0 %v800
        %2569 = vmatmul.mubr.f32.gmra.mxu0 %v799
        %v2570 = vpop.f32.mrf.mxu0
        %v2571 = vadd.f32 %v2186, %v2570
        %v2572 = vpop.f32.mrf.mxu0
        %2573 = vmatprep.mubr.f32.mxu0 %v816
        %2574 = vmatmul.mubr.f32.gmra.mxu0 %v815
        %v2575 = vpop.f32.mrf.mxu0
        %v2576 = vadd.f32 %v2191, %v2575
        %v2577 = vpop.f32.mrf.mxu0
        %2578 = vmatprep.mubr.f32.mxu0 %v832
        %2579 = vmatmul.mubr.f32.gmra.mxu0 %v831
        %v2580 = vpop.f32.mrf.mxu0
        %v2581 = vadd.f32 %v2196, %v2580
        %v2582 = vpop.f32.mrf.mxu0
        %2583 = vmatprep.mubr.f32.mxu0 %v848
        %2584 = vmatmul.mubr.f32.gmra.mxu0 %v847
        %v2585 = vpop.f32.mrf.mxu0
        %v2586 = vadd.f32 %v2201, %v2585
        %v2587 = vpop.f32.mrf.mxu0
        %2588 = vmatprep.mubr.f32.mxu0 %v864
        %2589 = vmatmul.mubr.f32.gmra.mxu0 %v863
        %v2590 = vpop.f32.mrf.mxu0
        %v2591 = vadd.f32 %v2206, %v2590
        %v2592 = vpop.f32.mrf.mxu0
        %2593 = vmatprep.mubr.f32.mxu0 %v880
        %2594 = vmatmul.mubr.f32.gmra.mxu0 %v879
        %v2595 = vpop.f32.mrf.mxu0
        %v2596 = vadd.f32 %v2211, %v2595
        %v2597 = vpop.f32.mrf.mxu0
        %2598 = vmatprep.mubr.f32.mxu0 %v896
        %2599 = vmatmul.mubr.f32.gmra.mxu0 %v895
        %v2600 = vpop.f32.mrf.mxu0
        %v2601 = vadd.f32 %v2216, %v2600
        %v2602 = vpop.f32.mrf.mxu0
        %2603 = vmatprep.mubr.f32.mxu0 %v912
        %2604 = vmatmul.mubr.f32.gmra.mxu0 %v911
        %v2605 = vpop.f32.mrf.mxu0
        %v2606 = vadd.f32 %v2221, %v2605
        %v2607 = vpop.f32.mrf.mxu0
        %2608 = vmatprep.mubr.f32.mxu0 %v928
        %2609 = vmatmul.mubr.f32.gmra.mxu0 %v927
        %v2610 = vpop.f32.mrf.mxu0
        %v2611 = vadd.f32 %v2226, %v2610
        %v2612 = vpop.f32.mrf.mxu0
        %2613 = vmatprep.mubr.f32.mxu0 %v944
        %2614 = vmatmul.mubr.f32.gmra.mxu0 %v943
        %v2615 = vpop.f32.mrf.mxu0
        %v2616 = vadd.f32 %v2231, %v2615
        %v2617 = vpop.f32.mrf.mxu0
        %2618 = vmatprep.mubr.f32.mxu0 %v960
        %2619 = vmatmul.mubr.f32.gmra.mxu0 %v959
        %v2620 = vpop.f32.mrf.mxu0
        %v2621 = vadd.f32 %v2236, %v2620
        %v2622 = vpop.f32.mrf.mxu0
        %2623 = vmatprep.mubr.f32.mxu0 %v976
        %2624 = vmatmul.mubr.f32.gmra.mxu0 %v975
        %v2625 = vpop.f32.mrf.mxu0
        %v2626 = vadd.f32 %v2241, %v2625
        %v2627 = vpop.f32.mrf.mxu0
        %2628 = vmatprep.mubr.f32.mxu0 %v992
        %2629 = vmatmul.mubr.f32.gmra.mxu0 %v991
        %v2630 = vpop.f32.mrf.mxu0
        %v2631 = vadd.f32 %v2246, %v2630
        %v2632 = vpop.f32.mrf.mxu0
        %2633 = vmatprep.mubr.f32.mxu0 %v1008
        %2634 = vmatmul.mubr.f32.gmra.mxu0 %v1007
        %v2635 = vpop.f32.mrf.mxu0
        %v2636 = vadd.f32 %v2251, %v2635
        %v2637 = vpop.f32.mrf.mxu0
        %2638 = vmatprep.mubr.f32.mxu0 %v1024
        %2639 = vmatmul.mubr.f32.gmra.mxu0 %v1023
        %v2640 = vpop.f32.mrf.mxu0
        %v2641 = vadd.f32 %v2256, %v2640
        %v2642 = vpop.f32.mrf.mxu0
        %2643 = vmatprep.mubr.f32.mxu0 %v1040
        %2644 = vmatmul.mubr.f32.gmra.mxu0 %v1039
        %v2645 = vpop.f32.mrf.mxu0
        %v2646 = vadd.f32 %v2261, %v2645
        %v2647 = vpop.f32.mrf.mxu0
        %2648 = vmatprep.mubr.f32.mxu0 %v1056
        %2649 = vmatmul.mubr.f32.gmra.mxu0 %v1055
        %v2650 = vpop.f32.mrf.mxu0
        %v2651 = vadd.f32 %v2266, %v2650
        %v2652 = vpop.f32.mrf.mxu0
        %2653 = vmatprep.mubr.f32.mxu0 %v1072
        %2654 = vmatmul.mubr.f32.gmra.mxu0 %v1071
        %v2655 = vpop.f32.mrf.mxu0
        %v2656 = vadd.f32 %v2271, %v2655
        %v2657 = vpop.f32.mrf.mxu0
        %2658 = vmatprep.mubr.f32.mxu0 %v1088
        %2659 = vmatmul.mubr.f32.gmra.mxu0 %v1087
        %v2660 = vpop.f32.mrf.mxu0
        %v2661 = vadd.f32 %v2276, %v2660
        %v2662 = vpop.f32.mrf.mxu0
        %2663 = vmatprep.mubr.f32.mxu0 %v1104
        %2664 = vmatmul.mubr.f32.gmra.mxu0 %v1103
        %v2665 = vpop.f32.mrf.mxu0
        %v2666 = vadd.f32 %v2281, %v2665
        %v2667 = vpop.f32.mrf.mxu0
        %2668 = vmatprep.mubr.f32.mxu0 %v1120
        %2669 = vmatmul.mubr.f32.gmra.mxu0 %v1119
        %v2670 = vpop.f32.mrf.mxu0
        %v2671 = vadd.f32 %v2286, %v2670
        %v2672 = vpop.f32.mrf.mxu0
        %2673 = vmatprep.mubr.f32.mxu0 %v1136
        %2674 = vmatmul.mubr.f32.gmra.mxu0 %v1135
        %v2675 = vpop.f32.mrf.mxu0
        %v2676 = vadd.f32 %v2291, %v2675
        %v2677 = vpop.f32.mrf.mxu0
        %2678 = vmatprep.mubr.f32.mxu0 %v1152
        %2679 = vmatmul.mubr.f32.gmra.mxu0 %v1151
        %v2680 = vpop.f32.mrf.mxu0
        %v2681 = vadd.f32 %v2296, %v2680
        %v2682 = vpop.f32.mrf.mxu0
        %2683 = vmatprep.mubr.f32.mxu0 %v1168
        %2684 = vmatmul.mubr.f32.gmra.mxu0 %v1167
        %v2685 = vpop.f32.mrf.mxu0
        %v2686 = vadd.f32 %v2301, %v2685
        %v2687 = vpop.f32.mrf.mxu0
        %2688 = vmatprep.mubr.f32.mxu0 %v1184
        %2689 = vmatmul.mubr.f32.gmra.mxu0 %v1183
        %v2690 = vpop.f32.mrf.mxu0
        %v2691 = vadd.f32 %v2306, %v2690
        %v2692 = vpop.f32.mrf.mxu0
        %2693 = vmatprep.mubr.f32.mxu0 %v1200
        %2694 = vmatmul.mubr.f32.gmra.mxu0 %v1199
        %v2695 = vpop.f32.mrf.mxu0
        %v2696 = vadd.f32 %v2311, %v2695
        %v2697 = vpop.f32.mrf.mxu0
        %2698 = vmatprep.mubr.f32.mxu0 %v1216
        %2699 = vmatmul.mubr.f32.gmra.mxu0 %v1215
        %v2700 = vpop.f32.mrf.mxu0
        %v2701 = vadd.f32 %v2316, %v2700
        %v2702 = vpop.f32.mrf.mxu0
        %2703 = vmatprep.mubr.f32.mxu0 %v1232
        %2704 = vmatmul.mubr.f32.gmra.mxu0 %v1231
        %v2705 = vpop.f32.mrf.mxu0
        %v2706 = vadd.f32 %v2321, %v2705
        %v2707 = vpop.f32.mrf.mxu0
        %2708 = vmatprep.mubr.f32.mxu0 %v1248
        %2709 = vmatmul.mubr.f32.gmra.mxu0 %v1247
        %v2710 = vpop.f32.mrf.mxu0
        %v2711 = vadd.f32 %v2326, %v2710
        %v2712 = vpop.f32.mrf.mxu0
        %2713 = vmatprep.mubr.f32.mxu0 %v1264
        %2714 = vmatmul.mubr.f32.gmra.mxu0 %v1263
        %v2715 = vpop.f32.mrf.mxu0
        %v2716 = vadd.f32 %v2331, %v2715
        %v2717 = vpop.f32.mrf.mxu0
        %2718 = vmatprep.mubr.f32.mxu0 %v1280
        %2719 = vmatmul.mubr.f32.gmra.mxu0 %v1279
        %v2720 = vpop.f32.mrf.mxu0
        %v2721 = vadd.f32 %v2336, %v2720
        %v2722 = vpop.f32.mrf.mxu0
        %2723 = vmatprep.mubr.f32.mxu0 %v1296
        %2724 = vmatmul.mubr.f32.gmra.mxu0 %v1295
        %v2725 = vpop.f32.mrf.mxu0
        %v2726 = vadd.f32 %v2341, %v2725
        %v2727 = vpop.f32.mrf.mxu0
        %2728 = vmatprep.mubr.f32.mxu0 %v1312
        %2729 = vmatmul.mubr.f32.gmra.mxu0 %v1311
        %v2730 = vpop.f32.mrf.mxu0
        %v2731 = vadd.f32 %v2346, %v2730
        %v2732 = vpop.f32.mrf.mxu0
        %2733 = vdwg.mxu0
        %2734 = vmatprep.subr.mxu0 0.0
        %2735 = vmatpush1.msra.mxu0 %v1434
        %2736 = vmatprep.subr.mxu0 0.0
        %2737 = vmatpush1.msra.mxu0 %v1433
        %2738 = vmatprep.subr.mxu0 0.0
        %2739 = vmatpush1.msra.mxu0 %v1432
        %2740 = vmatprep.subr.mxu0 0.0
        %2741 = vmatpush1.msra.mxu0 %v1431
        %2742 = vmatprep.subr.mxu0 0.0
        %2743 = vmatpush1.msra.mxu0 %v1430
        %2744 = vmatprep.subr.mxu0 0.0
        %2745 = vmatpush1.msra.mxu0 %v1429
        %2746 = vmatprep.subr.mxu0 0.0
        %2747 = vmatpush1.msra.mxu0 %v1428
        %2748 = vmatprep.subr.mxu0 0.0
        %2749 = vmatpush1.msra.mxu0 %v1427
        %2750 = vmatprep.subr.mxu0 0.0
        %2751 = vmatpush1.msra.mxu0 %v1426
        %2752 = vmatprep.subr.mxu0 0.0
        %2753 = vmatpush1.msra.mxu0 %v1425
        %2754 = vmatprep.subr.mxu0 0.0
        %2755 = vmatpush1.msra.mxu0 %v1424
        %2756 = vmatprep.subr.mxu0 0.0
        %2757 = vmatpush1.msra.mxu0 %v1423
        %2758 = vmatprep.subr.mxu0 0.0
        %2759 = vmatpush1.msra.mxu0 %v1422
        %2760 = vmatprep.subr.mxu0 0.0
        %2761 = vmatpush1.msra.mxu0 %v1421
        %2762 = vmatprep.subr.mxu0 0.0
        %2763 = vmatpush1.msra.mxu0 %v1420
        %2764 = vmatprep.subr.mxu0 0.0
        %2765 = vmatpush1.msra.mxu0 %v1419
        %2766 = vmatprep.subr.mxu0 0.0
        %2767 = vmatpush2.msra.mxu0 %v1450
        %2768 = vmatprep.subr.mxu0 0.0
        %2769 = vmatpush2.msra.mxu0 %v1449
        %2770 = vmatprep.subr.mxu0 0.0
        %2771 = vmatpush2.msra.mxu0 %v1448
        %2772 = vmatprep.subr.mxu0 0.0
        %2773 = vmatpush2.msra.mxu0 %v1447
        %2774 = vmatprep.subr.mxu0 0.0
        %2775 = vmatpush2.msra.mxu0 %v1446
        %2776 = vmatprep.subr.mxu0 0.0
        %2777 = vmatpush2.msra.mxu0 %v1445
        %2778 = vmatprep.subr.mxu0 0.0
        %2779 = vmatpush2.msra.mxu0 %v1444
        %2780 = vmatprep.subr.mxu0 0.0
        %2781 = vmatpush2.msra.mxu0 %v1443
        %2782 = vmatprep.subr.mxu0 0.0
        %2783 = vmatpush2.msra.mxu0 %v1442
        %2784 = vmatprep.subr.mxu0 0.0
        %2785 = vmatpush2.msra.mxu0 %v1441
        %2786 = vmatprep.subr.mxu0 0.0
        %2787 = vmatpush2.msra.mxu0 %v1440
        %2788 = vmatprep.subr.mxu0 0.0
        %2789 = vmatpush2.msra.mxu0 %v1439
        %2790 = vmatprep.subr.mxu0 0.0
        %2791 = vmatpush2.msra.mxu0 %v1438
        %2792 = vmatprep.subr.mxu0 0.0
        %2793 = vmatpush2.msra.mxu0 %v1437
        %2794 = vmatprep.subr.mxu0 0.0
        %2795 = vmatpush2.msra.mxu0 %v1436
        %2796 = vmatprep.subr.mxu0 0.0
        %2797 = vmatpush2.msra.mxu0 %v1435
        %2798 = vmatprep.mubr.f32.mxu0 %v306
        %2799 = vmatmul.mubr.f32.gmra.mxu0 %v305
        %v2800 = vpop.f32.mrf.mxu0
        %v2801 = vadd.f32 %v2416, %v2800
        %v2802 = vpop.f32.mrf.mxu0
        %2803 = vmatprep.mubr.f32.mxu0 %v322
        %2804 = vmatmul.mubr.f32.gmra.mxu0 %v321
        %v2805 = vpop.f32.mrf.mxu0
        %v2806 = vadd.f32 %v2421, %v2805
        %v2807 = vpop.f32.mrf.mxu0
        %2808 = vmatprep.mubr.f32.mxu0 %v338
        %2809 = vmatmul.mubr.f32.gmra.mxu0 %v337
        %v2810 = vpop.f32.mrf.mxu0
        %v2811 = vadd.f32 %v2426, %v2810
        %v2812 = vpop.f32.mrf.mxu0
        %2813 = vmatprep.mubr.f32.mxu0 %v354
        %2814 = vmatmul.mubr.f32.gmra.mxu0 %v353
        %v2815 = vpop.f32.mrf.mxu0
        %v2816 = vadd.f32 %v2431, %v2815
        %v2817 = vpop.f32.mrf.mxu0
        %2818 = vmatprep.mubr.f32.mxu0 %v370
        %2819 = vmatmul.mubr.f32.gmra.mxu0 %v369
        %v2820 = vpop.f32.mrf.mxu0
        %v2821 = vadd.f32 %v2436, %v2820
        %v2822 = vpop.f32.mrf.mxu0
        %2823 = vmatprep.mubr.f32.mxu0 %v386
        %2824 = vmatmul.mubr.f32.gmra.mxu0 %v385
        %v2825 = vpop.f32.mrf.mxu0
        %v2826 = vadd.f32 %v2441, %v2825
        %v2827 = vpop.f32.mrf.mxu0
        %2828 = vmatprep.mubr.f32.mxu0 %v402
        %2829 = vmatmul.mubr.f32.gmra.mxu0 %v401
        %v2830 = vpop.f32.mrf.mxu0
        %v2831 = vadd.f32 %v2446, %v2830
        %v2832 = vpop.f32.mrf.mxu0
        %2833 = vmatprep.mubr.f32.mxu0 %v418
        %2834 = vmatmul.mubr.f32.gmra.mxu0 %v417
        %v2835 = vpop.f32.mrf.mxu0
        %v2836 = vadd.f32 %v2451, %v2835
        %v2837 = vpop.f32.mrf.mxu0
        %2838 = vmatprep.mubr.f32.mxu0 %v434
        %2839 = vmatmul.mubr.f32.gmra.mxu0 %v433
        %v2840 = vpop.f32.mrf.mxu0
        %v2841 = vadd.f32 %v2456, %v2840
        %v2842 = vpop.f32.mrf.mxu0
        %2843 = vmatprep.mubr.f32.mxu0 %v450
        %2844 = vmatmul.mubr.f32.gmra.mxu0 %v449
        %v2845 = vpop.f32.mrf.mxu0
        %v2846 = vadd.f32 %v2461, %v2845
        %v2847 = vpop.f32.mrf.mxu0
        %2848 = vmatprep.mubr.f32.mxu0 %v466
        %2849 = vmatmul.mubr.f32.gmra.mxu0 %v465
        %v2850 = vpop.f32.mrf.mxu0
        %v2851 = vadd.f32 %v2466, %v2850
        %v2852 = vpop.f32.mrf.mxu0
        %2853 = vmatprep.mubr.f32.mxu0 %v482
        %2854 = vmatmul.mubr.f32.gmra.mxu0 %v481
        %v2855 = vpop.f32.mrf.mxu0
        %v2856 = vadd.f32 %v2471, %v2855
        %v2857 = vpop.f32.mrf.mxu0
        %2858 = vmatprep.mubr.f32.mxu0 %v498
        %2859 = vmatmul.mubr.f32.gmra.mxu0 %v497
        %v2860 = vpop.f32.mrf.mxu0
        %v2861 = vadd.f32 %v2476, %v2860
        %v2862 = vpop.f32.mrf.mxu0
        %2863 = vmatprep.mubr.f32.mxu0 %v514
        %2864 = vmatmul.mubr.f32.gmra.mxu0 %v513
        %v2865 = vpop.f32.mrf.mxu0
        %v2866 = vadd.f32 %v2481, %v2865
        %v2867 = vpop.f32.mrf.mxu0
        %2868 = vmatprep.mubr.f32.mxu0 %v530
        %2869 = vmatmul.mubr.f32.gmra.mxu0 %v529
        %v2870 = vpop.f32.mrf.mxu0
        %v2871 = vadd.f32 %v2486, %v2870
        %v2872 = vpop.f32.mrf.mxu0
        %2873 = vmatprep.mubr.f32.mxu0 %v546
        %2874 = vmatmul.mubr.f32.gmra.mxu0 %v545
        %v2875 = vpop.f32.mrf.mxu0
        %v2876 = vadd.f32 %v2491, %v2875
        %v2877 = vpop.f32.mrf.mxu0
        %2878 = vmatprep.mubr.f32.mxu0 %v562
        %2879 = vmatmul.mubr.f32.gmra.mxu0 %v561
        %v2880 = vpop.f32.mrf.mxu0
        %v2881 = vadd.f32 %v2496, %v2880
        %v2882 = vpop.f32.mrf.mxu0
        %2883 = vmatprep.mubr.f32.mxu0 %v578
        %2884 = vmatmul.mubr.f32.gmra.mxu0 %v577
        %v2885 = vpop.f32.mrf.mxu0
        %v2886 = vadd.f32 %v2501, %v2885
        %v2887 = vpop.f32.mrf.mxu0
        %2888 = vmatprep.mubr.f32.mxu0 %v594
        %2889 = vmatmul.mubr.f32.gmra.mxu0 %v593
        %v2890 = vpop.f32.mrf.mxu0
        %v2891 = vadd.f32 %v2506, %v2890
        %v2892 = vpop.f32.mrf.mxu0
        %2893 = vmatprep.mubr.f32.mxu0 %v610
        %2894 = vmatmul.mubr.f32.gmra.mxu0 %v609
        %v2895 = vpop.f32.mrf.mxu0
        %v2896 = vadd.f32 %v2511, %v2895
        %v2897 = vpop.f32.mrf.mxu0
        %2898 = vmatprep.mubr.f32.mxu0 %v626
        %2899 = vmatmul.mubr.f32.gmra.mxu0 %v625
        %v2900 = vpop.f32.mrf.mxu0
        %v2901 = vadd.f32 %v2516, %v2900
        %v2902 = vpop.f32.mrf.mxu0
        %2903 = vmatprep.mubr.f32.mxu0 %v642
        %2904 = vmatmul.mubr.f32.gmra.mxu0 %v641
        %v2905 = vpop.f32.mrf.mxu0
        %v2906 = vadd.f32 %v2521, %v2905
        %v2907 = vpop.f32.mrf.mxu0
        %2908 = vmatprep.mubr.f32.mxu0 %v658
        %2909 = vmatmul.mubr.f32.gmra.mxu0 %v657
        %v2910 = vpop.f32.mrf.mxu0
        %v2911 = vadd.f32 %v2526, %v2910
        %v2912 = vpop.f32.mrf.mxu0
        %2913 = vmatprep.mubr.f32.mxu0 %v674
        %2914 = vmatmul.mubr.f32.gmra.mxu0 %v673
        %v2915 = vpop.f32.mrf.mxu0
        %v2916 = vadd.f32 %v2531, %v2915
        %v2917 = vpop.f32.mrf.mxu0
        %2918 = vmatprep.mubr.f32.mxu0 %v690
        %2919 = vmatmul.mubr.f32.gmra.mxu0 %v689
        %v2920 = vpop.f32.mrf.mxu0
        %v2921 = vadd.f32 %v2536, %v2920
        %v2922 = vpop.f32.mrf.mxu0
        %2923 = vmatprep.mubr.f32.mxu0 %v706
        %2924 = vmatmul.mubr.f32.gmra.mxu0 %v705
        %v2925 = vpop.f32.mrf.mxu0
        %v2926 = vadd.f32 %v2541, %v2925
        %v2927 = vpop.f32.mrf.mxu0
        %2928 = vmatprep.mubr.f32.mxu0 %v722
        %2929 = vmatmul.mubr.f32.gmra.mxu0 %v721
        %v2930 = vpop.f32.mrf.mxu0
        %v2931 = vadd.f32 %v2546, %v2930
        %v2932 = vpop.f32.mrf.mxu0
        %2933 = vmatprep.mubr.f32.mxu0 %v738
        %2934 = vmatmul.mubr.f32.gmra.mxu0 %v737
        %v2935 = vpop.f32.mrf.mxu0
        %v2936 = vadd.f32 %v2551, %v2935
        %v2937 = vpop.f32.mrf.mxu0
        %2938 = vmatprep.mubr.f32.mxu0 %v754
        %2939 = vmatmul.mubr.f32.gmra.mxu0 %v753
        %v2940 = vpop.f32.mrf.mxu0
        %v2941 = vadd.f32 %v2556, %v2940
        %v2942 = vpop.f32.mrf.mxu0
        %2943 = vmatprep.mubr.f32.mxu0 %v770
        %2944 = vmatmul.mubr.f32.gmra.mxu0 %v769
        %v2945 = vpop.f32.mrf.mxu0
        %v2946 = vadd.f32 %v2561, %v2945
        %v2947 = vpop.f32.mrf.mxu0
        %2948 = vmatprep.mubr.f32.mxu0 %v786
        %2949 = vmatmul.mubr.f32.gmra.mxu0 %v785
        %v2950 = vpop.f32.mrf.mxu0
        %v2951 = vadd.f32 %v2566, %v2950
        %v2952 = vpop.f32.mrf.mxu0
        %2953 = vmatprep.mubr.f32.mxu0 %v802
        %2954 = vmatmul.mubr.f32.gmra.mxu0 %v801
        %v2955 = vpop.f32.mrf.mxu0
        %v2956 = vadd.f32 %v2571, %v2955
        %v2957 = vpop.f32.mrf.mxu0
        %2958 = vmatprep.mubr.f32.mxu0 %v818
        %2959 = vmatmul.mubr.f32.gmra.mxu0 %v817
        %v2960 = vpop.f32.mrf.mxu0
        %v2961 = vadd.f32 %v2576, %v2960
        %v2962 = vpop.f32.mrf.mxu0
        %2963 = vmatprep.mubr.f32.mxu0 %v834
        %2964 = vmatmul.mubr.f32.gmra.mxu0 %v833
        %v2965 = vpop.f32.mrf.mxu0
        %v2966 = vadd.f32 %v2581, %v2965
        %v2967 = vpop.f32.mrf.mxu0
        %2968 = vmatprep.mubr.f32.mxu0 %v850
        %2969 = vmatmul.mubr.f32.gmra.mxu0 %v849
        %v2970 = vpop.f32.mrf.mxu0
        %v2971 = vadd.f32 %v2586, %v2970
        %v2972 = vpop.f32.mrf.mxu0
        %2973 = vmatprep.mubr.f32.mxu0 %v866
        %2974 = vmatmul.mubr.f32.gmra.mxu0 %v865
        %v2975 = vpop.f32.mrf.mxu0
        %v2976 = vadd.f32 %v2591, %v2975
        %v2977 = vpop.f32.mrf.mxu0
        %2978 = vmatprep.mubr.f32.mxu0 %v882
        %2979 = vmatmul.mubr.f32.gmra.mxu0 %v881
        %v2980 = vpop.f32.mrf.mxu0
        %v2981 = vadd.f32 %v2596, %v2980
        %v2982 = vpop.f32.mrf.mxu0
        %2983 = vmatprep.mubr.f32.mxu0 %v898
        %2984 = vmatmul.mubr.f32.gmra.mxu0 %v897
        %v2985 = vpop.f32.mrf.mxu0
        %v2986 = vadd.f32 %v2601, %v2985
        %v2987 = vpop.f32.mrf.mxu0
        %2988 = vmatprep.mubr.f32.mxu0 %v914
        %2989 = vmatmul.mubr.f32.gmra.mxu0 %v913
        %v2990 = vpop.f32.mrf.mxu0
        %v2991 = vadd.f32 %v2606, %v2990
        %v2992 = vpop.f32.mrf.mxu0
        %2993 = vmatprep.mubr.f32.mxu0 %v930
        %2994 = vmatmul.mubr.f32.gmra.mxu0 %v929
        %v2995 = vpop.f32.mrf.mxu0
        %v2996 = vadd.f32 %v2611, %v2995
        %v2997 = vpop.f32.mrf.mxu0
        %2998 = vmatprep.mubr.f32.mxu0 %v946
        %2999 = vmatmul.mubr.f32.gmra.mxu0 %v945
        %v3000 = vpop.f32.mrf.mxu0
        %v3001 = vadd.f32 %v2616, %v3000
        %v3002 = vpop.f32.mrf.mxu0
        %3003 = vmatprep.mubr.f32.mxu0 %v962
        %3004 = vmatmul.mubr.f32.gmra.mxu0 %v961
        %v3005 = vpop.f32.mrf.mxu0
        %v3006 = vadd.f32 %v2621, %v3005
        %v3007 = vpop.f32.mrf.mxu0
        %3008 = vmatprep.mubr.f32.mxu0 %v978
        %3009 = vmatmul.mubr.f32.gmra.mxu0 %v977
        %v3010 = vpop.f32.mrf.mxu0
        %v3011 = vadd.f32 %v2626, %v3010
        %v3012 = vpop.f32.mrf.mxu0
        %3013 = vmatprep.mubr.f32.mxu0 %v994
        %3014 = vmatmul.mubr.f32.gmra.mxu0 %v993
        %v3015 = vpop.f32.mrf.mxu0
        %v3016 = vadd.f32 %v2631, %v3015
        %v3017 = vpop.f32.mrf.mxu0
        %3018 = vmatprep.mubr.f32.mxu0 %v1010
        %3019 = vmatmul.mubr.f32.gmra.mxu0 %v1009
        %v3020 = vpop.f32.mrf.mxu0
        %v3021 = vadd.f32 %v2636, %v3020
        %v3022 = vpop.f32.mrf.mxu0
        %3023 = vmatprep.mubr.f32.mxu0 %v1026
        %3024 = vmatmul.mubr.f32.gmra.mxu0 %v1025
        %v3025 = vpop.f32.mrf.mxu0
        %v3026 = vadd.f32 %v2641, %v3025
        %v3027 = vpop.f32.mrf.mxu0
        %3028 = vmatprep.mubr.f32.mxu0 %v1042
        %3029 = vmatmul.mubr.f32.gmra.mxu0 %v1041
        %v3030 = vpop.f32.mrf.mxu0
        %v3031 = vadd.f32 %v2646, %v3030
        %v3032 = vpop.f32.mrf.mxu0
        %3033 = vmatprep.mubr.f32.mxu0 %v1058
        %3034 = vmatmul.mubr.f32.gmra.mxu0 %v1057
        %v3035 = vpop.f32.mrf.mxu0
        %v3036 = vadd.f32 %v2651, %v3035
        %v3037 = vpop.f32.mrf.mxu0
        %3038 = vmatprep.mubr.f32.mxu0 %v1074
        %3039 = vmatmul.mubr.f32.gmra.mxu0 %v1073
        %v3040 = vpop.f32.mrf.mxu0
        %v3041 = vadd.f32 %v2656, %v3040
        %v3042 = vpop.f32.mrf.mxu0
        %3043 = vmatprep.mubr.f32.mxu0 %v1090
        %3044 = vmatmul.mubr.f32.gmra.mxu0 %v1089
        %v3045 = vpop.f32.mrf.mxu0
        %v3046 = vadd.f32 %v2661, %v3045
        %v3047 = vpop.f32.mrf.mxu0
        %3048 = vmatprep.mubr.f32.mxu0 %v1106
        %3049 = vmatmul.mubr.f32.gmra.mxu0 %v1105
        %v3050 = vpop.f32.mrf.mxu0
        %v3051 = vadd.f32 %v2666, %v3050
        %v3052 = vpop.f32.mrf.mxu0
        %3053 = vmatprep.mubr.f32.mxu0 %v1122
        %3054 = vmatmul.mubr.f32.gmra.mxu0 %v1121
        %v3055 = vpop.f32.mrf.mxu0
        %v3056 = vadd.f32 %v2671, %v3055
        %v3057 = vpop.f32.mrf.mxu0
        %3058 = vmatprep.mubr.f32.mxu0 %v1138
        %3059 = vmatmul.mubr.f32.gmra.mxu0 %v1137
        %v3060 = vpop.f32.mrf.mxu0
        %v3061 = vadd.f32 %v2676, %v3060
        %v3062 = vpop.f32.mrf.mxu0
        %3063 = vmatprep.mubr.f32.mxu0 %v1154
        %3064 = vmatmul.mubr.f32.gmra.mxu0 %v1153
        %v3065 = vpop.f32.mrf.mxu0
        %v3066 = vadd.f32 %v2681, %v3065
        %v3067 = vpop.f32.mrf.mxu0
        %3068 = vmatprep.mubr.f32.mxu0 %v1170
        %3069 = vmatmul.mubr.f32.gmra.mxu0 %v1169
        %v3070 = vpop.f32.mrf.mxu0
        %v3071 = vadd.f32 %v2686, %v3070
        %v3072 = vpop.f32.mrf.mxu0
        %3073 = vmatprep.mubr.f32.mxu0 %v1186
        %3074 = vmatmul.mubr.f32.gmra.mxu0 %v1185
        %v3075 = vpop.f32.mrf.mxu0
        %v3076 = vadd.f32 %v2691, %v3075
        %v3077 = vpop.f32.mrf.mxu0
        %3078 = vmatprep.mubr.f32.mxu0 %v1202
        %3079 = vmatmul.mubr.f32.gmra.mxu0 %v1201
        %v3080 = vpop.f32.mrf.mxu0
        %v3081 = vadd.f32 %v2696, %v3080
        %v3082 = vpop.f32.mrf.mxu0
        %3083 = vmatprep.mubr.f32.mxu0 %v1218
        %3084 = vmatmul.mubr.f32.gmra.mxu0 %v1217
        %v3085 = vpop.f32.mrf.mxu0
        %v3086 = vadd.f32 %v2701, %v3085
        %v3087 = vpop.f32.mrf.mxu0
        %3088 = vmatprep.mubr.f32.mxu0 %v1234
        %3089 = vmatmul.mubr.f32.gmra.mxu0 %v1233
        %v3090 = vpop.f32.mrf.mxu0
        %v3091 = vadd.f32 %v2706, %v3090
        %v3092 = vpop.f32.mrf.mxu0
        %3093 = vmatprep.mubr.f32.mxu0 %v1250
        %3094 = vmatmul.mubr.f32.gmra.mxu0 %v1249
        %v3095 = vpop.f32.mrf.mxu0
        %v3096 = vadd.f32 %v2711, %v3095
        %v3097 = vpop.f32.mrf.mxu0
        %3098 = vmatprep.mubr.f32.mxu0 %v1266
        %3099 = vmatmul.mubr.f32.gmra.mxu0 %v1265
        %v3100 = vpop.f32.mrf.mxu0
        %v3101 = vadd.f32 %v2716, %v3100
        %v3102 = vpop.f32.mrf.mxu0
        %3103 = vmatprep.mubr.f32.mxu0 %v1282
        %3104 = vmatmul.mubr.f32.gmra.mxu0 %v1281
        %v3105 = vpop.f32.mrf.mxu0
        %v3106 = vadd.f32 %v2721, %v3105
        %v3107 = vpop.f32.mrf.mxu0
        %3108 = vmatprep.mubr.f32.mxu0 %v1298
        %3109 = vmatmul.mubr.f32.gmra.mxu0 %v1297
        %v3110 = vpop.f32.mrf.mxu0
        %v3111 = vadd.f32 %v2726, %v3110
        %v3112 = vpop.f32.mrf.mxu0
        %3113 = vmatprep.mubr.f32.mxu0 %v1314
        %3114 = vmatmul.mubr.f32.gmra.mxu0 %v1313
        %v3115 = vpop.f32.mrf.mxu0
        %v3116 = vadd.f32 %v2731, %v3115
        %v3117 = vpop.f32.mrf.mxu0
        %3118 = vdwg.mxu0
        %3119 = vmatprep.subr.mxu0 0.0
        %3120 = vmatpush1.msra.mxu0 %v1466
        %3121 = vmatprep.subr.mxu0 0.0
        %3122 = vmatpush1.msra.mxu0 %v1465
        %3123 = vmatprep.subr.mxu0 0.0
        %3124 = vmatpush1.msra.mxu0 %v1464
        %3125 = vmatprep.subr.mxu0 0.0
        %3126 = vmatpush1.msra.mxu0 %v1463
        %3127 = vmatprep.subr.mxu0 0.0
        %3128 = vmatpush1.msra.mxu0 %v1462
        %3129 = vmatprep.subr.mxu0 0.0
        %3130 = vmatpush1.msra.mxu0 %v1461
        %3131 = vmatprep.subr.mxu0 0.0
        %3132 = vmatpush1.msra.mxu0 %v1460
        %3133 = vmatprep.subr.mxu0 0.0
        %3134 = vmatpush1.msra.mxu0 %v1459
        %3135 = vmatprep.subr.mxu0 0.0
        %3136 = vmatpush1.msra.mxu0 %v1458
        %3137 = vmatprep.subr.mxu0 0.0
        %3138 = vmatpush1.msra.mxu0 %v1457
        %3139 = vmatprep.subr.mxu0 0.0
        %3140 = vmatpush1.msra.mxu0 %v1456
        %3141 = vmatprep.subr.mxu0 0.0
        %3142 = vmatpush1.msra.mxu0 %v1455
        %3143 = vmatprep.subr.mxu0 0.0
        %3144 = vmatpush1.msra.mxu0 %v1454
        %3145 = vmatprep.subr.mxu0 0.0
        %3146 = vmatpush1.msra.mxu0 %v1453
        %3147 = vmatprep.subr.mxu0 0.0
        %3148 = vmatpush1.msra.mxu0 %v1452
        %3149 = vmatprep.subr.mxu0 0.0
        %3150 = vmatpush1.msra.mxu0 %v1451
        %3151 = vmatprep.subr.mxu0 0.0
        %3152 = vmatpush2.msra.mxu0 %v1482
        %3153 = vmatprep.subr.mxu0 0.0
        %3154 = vmatpush2.msra.mxu0 %v1481
        %3155 = vmatprep.subr.mxu0 0.0
        %3156 = vmatpush2.msra.mxu0 %v1480
        %3157 = vmatprep.subr.mxu0 0.0
        %3158 = vmatpush2.msra.mxu0 %v1479
        %3159 = vmatprep.subr.mxu0 0.0
        %3160 = vmatpush2.msra.mxu0 %v1478
        %3161 = vmatprep.subr.mxu0 0.0
        %3162 = vmatpush2.msra.mxu0 %v1477
        %3163 = vmatprep.subr.mxu0 0.0
        %3164 = vmatpush2.msra.mxu0 %v1476
        %3165 = vmatprep.subr.mxu0 0.0
        %3166 = vmatpush2.msra.mxu0 %v1475
        %3167 = vmatprep.subr.mxu0 0.0
        %3168 = vmatpush2.msra.mxu0 %v1474
        %3169 = vmatprep.subr.mxu0 0.0
        %3170 = vmatpush2.msra.mxu0 %v1473
        %3171 = vmatprep.subr.mxu0 0.0
        %3172 = vmatpush2.msra.mxu0 %v1472
        %3173 = vmatprep.subr.mxu0 0.0
        %3174 = vmatpush2.msra.mxu0 %v1471
        %3175 = vmatprep.subr.mxu0 0.0
        %3176 = vmatpush2.msra.mxu0 %v1470
        %3177 = vmatprep.subr.mxu0 0.0
        %3178 = vmatpush2.msra.mxu0 %v1469
        %3179 = vmatprep.subr.mxu0 0.0
        %3180 = vmatpush2.msra.mxu0 %v1468
        %3181 = vmatprep.subr.mxu0 0.0
        %3182 = vmatpush2.msra.mxu0 %v1467
        %3183 = vmatprep.mubr.f32.mxu0 %v308
        %3184 = vmatmul.mubr.f32.gmra.mxu0 %v307
        %v3185 = vpop.f32.mrf.mxu0
        %v3186 = vadd.f32 %v2801, %v3185
        %v3187 = vpop.f32.mrf.mxu0
        %3188 = vmatprep.mubr.f32.mxu0 %v324
        %3189 = vmatmul.mubr.f32.gmra.mxu0 %v323
        %v3190 = vpop.f32.mrf.mxu0
        %v3191 = vadd.f32 %v2806, %v3190
        %v3192 = vpop.f32.mrf.mxu0
        %3193 = vmatprep.mubr.f32.mxu0 %v340
        %3194 = vmatmul.mubr.f32.gmra.mxu0 %v339
        %v3195 = vpop.f32.mrf.mxu0
        %v3196 = vadd.f32 %v2811, %v3195
        %v3197 = vpop.f32.mrf.mxu0
        %3198 = vmatprep.mubr.f32.mxu0 %v356
        %3199 = vmatmul.mubr.f32.gmra.mxu0 %v355
        %v3200 = vpop.f32.mrf.mxu0
        %v3201 = vadd.f32 %v2816, %v3200
        %v3202 = vpop.f32.mrf.mxu0
        %3203 = vmatprep.mubr.f32.mxu0 %v372
        %3204 = vmatmul.mubr.f32.gmra.mxu0 %v371
        %v3205 = vpop.f32.mrf.mxu0
        %v3206 = vadd.f32 %v2821, %v3205
        %v3207 = vpop.f32.mrf.mxu0
        %3208 = vmatprep.mubr.f32.mxu0 %v388
        %3209 = vmatmul.mubr.f32.gmra.mxu0 %v387
        %v3210 = vpop.f32.mrf.mxu0
        %v3211 = vadd.f32 %v2826, %v3210
        %v3212 = vpop.f32.mrf.mxu0
        %3213 = vmatprep.mubr.f32.mxu0 %v404
        %3214 = vmatmul.mubr.f32.gmra.mxu0 %v403
        %v3215 = vpop.f32.mrf.mxu0
        %v3216 = vadd.f32 %v2831, %v3215
        %v3217 = vpop.f32.mrf.mxu0
        %3218 = vmatprep.mubr.f32.mxu0 %v420
        %3219 = vmatmul.mubr.f32.gmra.mxu0 %v419
        %v3220 = vpop.f32.mrf.mxu0
        %v3221 = vadd.f32 %v2836, %v3220
        %v3222 = vpop.f32.mrf.mxu0
        %3223 = vmatprep.mubr.f32.mxu0 %v436
        %3224 = vmatmul.mubr.f32.gmra.mxu0 %v435
        %v3225 = vpop.f32.mrf.mxu0
        %v3226 = vadd.f32 %v2841, %v3225
        %v3227 = vpop.f32.mrf.mxu0
        %3228 = vmatprep.mubr.f32.mxu0 %v452
        %3229 = vmatmul.mubr.f32.gmra.mxu0 %v451
        %v3230 = vpop.f32.mrf.mxu0
        %v3231 = vadd.f32 %v2846, %v3230
        %v3232 = vpop.f32.mrf.mxu0
        %3233 = vmatprep.mubr.f32.mxu0 %v468
        %3234 = vmatmul.mubr.f32.gmra.mxu0 %v467
        %v3235 = vpop.f32.mrf.mxu0
        %v3236 = vadd.f32 %v2851, %v3235
        %v3237 = vpop.f32.mrf.mxu0
        %3238 = vmatprep.mubr.f32.mxu0 %v484
        %3239 = vmatmul.mubr.f32.gmra.mxu0 %v483
        %v3240 = vpop.f32.mrf.mxu0
        %v3241 = vadd.f32 %v2856, %v3240
        %v3242 = vpop.f32.mrf.mxu0
        %3243 = vmatprep.mubr.f32.mxu0 %v500
        %3244 = vmatmul.mubr.f32.gmra.mxu0 %v499
        %v3245 = vpop.f32.mrf.mxu0
        %v3246 = vadd.f32 %v2861, %v3245
        %v3247 = vpop.f32.mrf.mxu0
        %3248 = vmatprep.mubr.f32.mxu0 %v516
        %3249 = vmatmul.mubr.f32.gmra.mxu0 %v515
        %v3250 = vpop.f32.mrf.mxu0
        %v3251 = vadd.f32 %v2866, %v3250
        %v3252 = vpop.f32.mrf.mxu0
        %3253 = vmatprep.mubr.f32.mxu0 %v532
        %3254 = vmatmul.mubr.f32.gmra.mxu0 %v531
        %v3255 = vpop.f32.mrf.mxu0
        %v3256 = vadd.f32 %v2871, %v3255
        %v3257 = vpop.f32.mrf.mxu0
        %3258 = vmatprep.mubr.f32.mxu0 %v548
        %3259 = vmatmul.mubr.f32.gmra.mxu0 %v547
        %v3260 = vpop.f32.mrf.mxu0
        %v3261 = vadd.f32 %v2876, %v3260
        %v3262 = vpop.f32.mrf.mxu0
        %3263 = vmatprep.mubr.f32.mxu0 %v564
        %3264 = vmatmul.mubr.f32.gmra.mxu0 %v563
        %v3265 = vpop.f32.mrf.mxu0
        %v3266 = vadd.f32 %v2881, %v3265
        %v3267 = vpop.f32.mrf.mxu0
        %3268 = vmatprep.mubr.f32.mxu0 %v580
        %3269 = vmatmul.mubr.f32.gmra.mxu0 %v579
        %v3270 = vpop.f32.mrf.mxu0
        %v3271 = vadd.f32 %v2886, %v3270
        %v3272 = vpop.f32.mrf.mxu0
        %3273 = vmatprep.mubr.f32.mxu0 %v596
        %3274 = vmatmul.mubr.f32.gmra.mxu0 %v595
        %v3275 = vpop.f32.mrf.mxu0
        %v3276 = vadd.f32 %v2891, %v3275
        %v3277 = vpop.f32.mrf.mxu0
        %3278 = vmatprep.mubr.f32.mxu0 %v612
        %3279 = vmatmul.mubr.f32.gmra.mxu0 %v611
        %v3280 = vpop.f32.mrf.mxu0
        %v3281 = vadd.f32 %v2896, %v3280
        %v3282 = vpop.f32.mrf.mxu0
        %3283 = vmatprep.mubr.f32.mxu0 %v628
        %3284 = vmatmul.mubr.f32.gmra.mxu0 %v627
        %v3285 = vpop.f32.mrf.mxu0
        %v3286 = vadd.f32 %v2901, %v3285
        %v3287 = vpop.f32.mrf.mxu0
        %3288 = vmatprep.mubr.f32.mxu0 %v644
        %3289 = vmatmul.mubr.f32.gmra.mxu0 %v643
        %v3290 = vpop.f32.mrf.mxu0
        %v3291 = vadd.f32 %v2906, %v3290
        %v3292 = vpop.f32.mrf.mxu0
        %3293 = vmatprep.mubr.f32.mxu0 %v660
        %3294 = vmatmul.mubr.f32.gmra.mxu0 %v659
        %v3295 = vpop.f32.mrf.mxu0
        %v3296 = vadd.f32 %v2911, %v3295
        %v3297 = vpop.f32.mrf.mxu0
        %3298 = vmatprep.mubr.f32.mxu0 %v676
        %3299 = vmatmul.mubr.f32.gmra.mxu0 %v675
        %v3300 = vpop.f32.mrf.mxu0
        %v3301 = vadd.f32 %v2916, %v3300
        %v3302 = vpop.f32.mrf.mxu0
        %3303 = vmatprep.mubr.f32.mxu0 %v692
        %3304 = vmatmul.mubr.f32.gmra.mxu0 %v691
        %v3305 = vpop.f32.mrf.mxu0
        %v3306 = vadd.f32 %v2921, %v3305
        %v3307 = vpop.f32.mrf.mxu0
        %3308 = vmatprep.mubr.f32.mxu0 %v708
        %3309 = vmatmul.mubr.f32.gmra.mxu0 %v707
        %v3310 = vpop.f32.mrf.mxu0
        %v3311 = vadd.f32 %v2926, %v3310
        %v3312 = vpop.f32.mrf.mxu0
        %3313 = vmatprep.mubr.f32.mxu0 %v724
        %3314 = vmatmul.mubr.f32.gmra.mxu0 %v723
        %v3315 = vpop.f32.mrf.mxu0
        %v3316 = vadd.f32 %v2931, %v3315
        %v3317 = vpop.f32.mrf.mxu0
        %3318 = vmatprep.mubr.f32.mxu0 %v740
        %3319 = vmatmul.mubr.f32.gmra.mxu0 %v739
        %v3320 = vpop.f32.mrf.mxu0
        %v3321 = vadd.f32 %v2936, %v3320
        %v3322 = vpop.f32.mrf.mxu0
        %3323 = vmatprep.mubr.f32.mxu0 %v756
        %3324 = vmatmul.mubr.f32.gmra.mxu0 %v755
        %v3325 = vpop.f32.mrf.mxu0
        %v3326 = vadd.f32 %v2941, %v3325
        %v3327 = vpop.f32.mrf.mxu0
        %3328 = vmatprep.mubr.f32.mxu0 %v772
        %3329 = vmatmul.mubr.f32.gmra.mxu0 %v771
        %v3330 = vpop.f32.mrf.mxu0
        %v3331 = vadd.f32 %v2946, %v3330
        %v3332 = vpop.f32.mrf.mxu0
        %3333 = vmatprep.mubr.f32.mxu0 %v788
        %3334 = vmatmul.mubr.f32.gmra.mxu0 %v787
        %v3335 = vpop.f32.mrf.mxu0
        %v3336 = vadd.f32 %v2951, %v3335
        %v3337 = vpop.f32.mrf.mxu0
        %3338 = vmatprep.mubr.f32.mxu0 %v804
        %3339 = vmatmul.mubr.f32.gmra.mxu0 %v803
        %v3340 = vpop.f32.mrf.mxu0
        %v3341 = vadd.f32 %v2956, %v3340
        %v3342 = vpop.f32.mrf.mxu0
        %3343 = vmatprep.mubr.f32.mxu0 %v820
        %3344 = vmatmul.mubr.f32.gmra.mxu0 %v819
        %v3345 = vpop.f32.mrf.mxu0
        %v3346 = vadd.f32 %v2961, %v3345
        %v3347 = vpop.f32.mrf.mxu0
        %3348 = vmatprep.mubr.f32.mxu0 %v836
        %3349 = vmatmul.mubr.f32.gmra.mxu0 %v835
        %v3350 = vpop.f32.mrf.mxu0
        %v3351 = vadd.f32 %v2966, %v3350
        %v3352 = vpop.f32.mrf.mxu0
        %3353 = vmatprep.mubr.f32.mxu0 %v852
        %3354 = vmatmul.mubr.f32.gmra.mxu0 %v851
        %v3355 = vpop.f32.mrf.mxu0
        %v3356 = vadd.f32 %v2971, %v3355
        %v3357 = vpop.f32.mrf.mxu0
        %3358 = vmatprep.mubr.f32.mxu0 %v868
        %3359 = vmatmul.mubr.f32.gmra.mxu0 %v867
        %v3360 = vpop.f32.mrf.mxu0
        %v3361 = vadd.f32 %v2976, %v3360
        %v3362 = vpop.f32.mrf.mxu0
        %3363 = vmatprep.mubr.f32.mxu0 %v884
        %3364 = vmatmul.mubr.f32.gmra.mxu0 %v883
        %v3365 = vpop.f32.mrf.mxu0
        %v3366 = vadd.f32 %v2981, %v3365
        %v3367 = vpop.f32.mrf.mxu0
        %3368 = vmatprep.mubr.f32.mxu0 %v900
        %3369 = vmatmul.mubr.f32.gmra.mxu0 %v899
        %v3370 = vpop.f32.mrf.mxu0
        %v3371 = vadd.f32 %v2986, %v3370
        %v3372 = vpop.f32.mrf.mxu0
        %3373 = vmatprep.mubr.f32.mxu0 %v916
        %3374 = vmatmul.mubr.f32.gmra.mxu0 %v915
        %v3375 = vpop.f32.mrf.mxu0
        %v3376 = vadd.f32 %v2991, %v3375
        %v3377 = vpop.f32.mrf.mxu0
        %3378 = vmatprep.mubr.f32.mxu0 %v932
        %3379 = vmatmul.mubr.f32.gmra.mxu0 %v931
        %v3380 = vpop.f32.mrf.mxu0
        %v3381 = vadd.f32 %v2996, %v3380
        %v3382 = vpop.f32.mrf.mxu0
        %3383 = vmatprep.mubr.f32.mxu0 %v948
        %3384 = vmatmul.mubr.f32.gmra.mxu0 %v947
        %v3385 = vpop.f32.mrf.mxu0
        %v3386 = vadd.f32 %v3001, %v3385
        %v3387 = vpop.f32.mrf.mxu0
        %3388 = vmatprep.mubr.f32.mxu0 %v964
        %3389 = vmatmul.mubr.f32.gmra.mxu0 %v963
        %v3390 = vpop.f32.mrf.mxu0
        %v3391 = vadd.f32 %v3006, %v3390
        %v3392 = vpop.f32.mrf.mxu0
        %3393 = vmatprep.mubr.f32.mxu0 %v980
        %3394 = vmatmul.mubr.f32.gmra.mxu0 %v979
        %v3395 = vpop.f32.mrf.mxu0
        %v3396 = vadd.f32 %v3011, %v3395
        %v3397 = vpop.f32.mrf.mxu0
        %3398 = vmatprep.mubr.f32.mxu0 %v996
        %3399 = vmatmul.mubr.f32.gmra.mxu0 %v995
        %v3400 = vpop.f32.mrf.mxu0
        %v3401 = vadd.f32 %v3016, %v3400
        %v3402 = vpop.f32.mrf.mxu0
        %3403 = vmatprep.mubr.f32.mxu0 %v1012
        %3404 = vmatmul.mubr.f32.gmra.mxu0 %v1011
        %v3405 = vpop.f32.mrf.mxu0
        %v3406 = vadd.f32 %v3021, %v3405
        %v3407 = vpop.f32.mrf.mxu0
        %3408 = vmatprep.mubr.f32.mxu0 %v1028
        %3409 = vmatmul.mubr.f32.gmra.mxu0 %v1027
        %v3410 = vpop.f32.mrf.mxu0
        %v3411 = vadd.f32 %v3026, %v3410
        %v3412 = vpop.f32.mrf.mxu0
        %3413 = vmatprep.mubr.f32.mxu0 %v1044
        %3414 = vmatmul.mubr.f32.gmra.mxu0 %v1043
        %v3415 = vpop.f32.mrf.mxu0
        %v3416 = vadd.f32 %v3031, %v3415
        %v3417 = vpop.f32.mrf.mxu0
        %3418 = vmatprep.mubr.f32.mxu0 %v1060
        %3419 = vmatmul.mubr.f32.gmra.mxu0 %v1059
        %v3420 = vpop.f32.mrf.mxu0
        %v3421 = vadd.f32 %v3036, %v3420
        %v3422 = vpop.f32.mrf.mxu0
        %3423 = vmatprep.mubr.f32.mxu0 %v1076
        %3424 = vmatmul.mubr.f32.gmra.mxu0 %v1075
        %v3425 = vpop.f32.mrf.mxu0
        %v3426 = vadd.f32 %v3041, %v3425
        %v3427 = vpop.f32.mrf.mxu0
        %3428 = vmatprep.mubr.f32.mxu0 %v1092
        %3429 = vmatmul.mubr.f32.gmra.mxu0 %v1091
        %v3430 = vpop.f32.mrf.mxu0
        %v3431 = vadd.f32 %v3046, %v3430
        %v3432 = vpop.f32.mrf.mxu0
        %3433 = vmatprep.mubr.f32.mxu0 %v1108
        %3434 = vmatmul.mubr.f32.gmra.mxu0 %v1107
        %v3435 = vpop.f32.mrf.mxu0
        %v3436 = vadd.f32 %v3051, %v3435
        %v3437 = vpop.f32.mrf.mxu0
        %3438 = vmatprep.mubr.f32.mxu0 %v1124
        %3439 = vmatmul.mubr.f32.gmra.mxu0 %v1123
        %v3440 = vpop.f32.mrf.mxu0
        %v3441 = vadd.f32 %v3056, %v3440
        %v3442 = vpop.f32.mrf.mxu0
        %3443 = vmatprep.mubr.f32.mxu0 %v1140
        %3444 = vmatmul.mubr.f32.gmra.mxu0 %v1139
        %v3445 = vpop.f32.mrf.mxu0
        %v3446 = vadd.f32 %v3061, %v3445
        %v3447 = vpop.f32.mrf.mxu0
        %3448 = vmatprep.mubr.f32.mxu0 %v1156
        %3449 = vmatmul.mubr.f32.gmra.mxu0 %v1155
        %v3450 = vpop.f32.mrf.mxu0
        %v3451 = vadd.f32 %v3066, %v3450
        %v3452 = vpop.f32.mrf.mxu0
        %3453 = vmatprep.mubr.f32.mxu0 %v1172
        %3454 = vmatmul.mubr.f32.gmra.mxu0 %v1171
        %v3455 = vpop.f32.mrf.mxu0
        %v3456 = vadd.f32 %v3071, %v3455
        %v3457 = vpop.f32.mrf.mxu0
        %3458 = vmatprep.mubr.f32.mxu0 %v1188
        %3459 = vmatmul.mubr.f32.gmra.mxu0 %v1187
        %v3460 = vpop.f32.mrf.mxu0
        %v3461 = vadd.f32 %v3076, %v3460
        %v3462 = vpop.f32.mrf.mxu0
        %3463 = vmatprep.mubr.f32.mxu0 %v1204
        %3464 = vmatmul.mubr.f32.gmra.mxu0 %v1203
        %v3465 = vpop.f32.mrf.mxu0
        %v3466 = vadd.f32 %v3081, %v3465
        %v3467 = vpop.f32.mrf.mxu0
        %3468 = vmatprep.mubr.f32.mxu0 %v1220
        %3469 = vmatmul.mubr.f32.gmra.mxu0 %v1219
        %v3470 = vpop.f32.mrf.mxu0
        %v3471 = vadd.f32 %v3086, %v3470
        %v3472 = vpop.f32.mrf.mxu0
        %3473 = vmatprep.mubr.f32.mxu0 %v1236
        %3474 = vmatmul.mubr.f32.gmra.mxu0 %v1235
        %v3475 = vpop.f32.mrf.mxu0
        %v3476 = vadd.f32 %v3091, %v3475
        %v3477 = vpop.f32.mrf.mxu0
        %3478 = vmatprep.mubr.f32.mxu0 %v1252
        %3479 = vmatmul.mubr.f32.gmra.mxu0 %v1251
        %v3480 = vpop.f32.mrf.mxu0
        %v3481 = vadd.f32 %v3096, %v3480
        %v3482 = vpop.f32.mrf.mxu0
        %3483 = vmatprep.mubr.f32.mxu0 %v1268
        %3484 = vmatmul.mubr.f32.gmra.mxu0 %v1267
        %v3485 = vpop.f32.mrf.mxu0
        %v3486 = vadd.f32 %v3101, %v3485
        %v3487 = vpop.f32.mrf.mxu0
        %3488 = vmatprep.mubr.f32.mxu0 %v1284
        %3489 = vmatmul.mubr.f32.gmra.mxu0 %v1283
        %v3490 = vpop.f32.mrf.mxu0
        %v3491 = vadd.f32 %v3106, %v3490
        %v3492 = vpop.f32.mrf.mxu0
        %3493 = vmatprep.mubr.f32.mxu0 %v1300
        %3494 = vmatmul.mubr.f32.gmra.mxu0 %v1299
        %v3495 = vpop.f32.mrf.mxu0
        %v3496 = vadd.f32 %v3111, %v3495
        %v3497 = vpop.f32.mrf.mxu0
        %3498 = vmatprep.mubr.f32.mxu0 %v1316
        %3499 = vmatmul.mubr.f32.gmra.mxu0 %v1315
        %v3500 = vpop.f32.mrf.mxu0
        %v3501 = vadd.f32 %v3116, %v3500
        %v3502 = vpop.f32.mrf.mxu0
        %3503 = vdwg.mxu0
        %3504 = vmatprep.subr.mxu0 0.0
        %3505 = vmatpush1.msra.mxu0 %v1498
        %3506 = vmatprep.subr.mxu0 0.0
        %3507 = vmatpush1.msra.mxu0 %v1497
        %3508 = vmatprep.subr.mxu0 0.0
        %3509 = vmatpush1.msra.mxu0 %v1496
        %3510 = vmatprep.subr.mxu0 0.0
        %3511 = vmatpush1.msra.mxu0 %v1495
        %3512 = vmatprep.subr.mxu0 0.0
        %3513 = vmatpush1.msra.mxu0 %v1494
        %3514 = vmatprep.subr.mxu0 0.0
        %3515 = vmatpush1.msra.mxu0 %v1493
        %3516 = vmatprep.subr.mxu0 0.0
        %3517 = vmatpush1.msra.mxu0 %v1492
        %3518 = vmatprep.subr.mxu0 0.0
        %3519 = vmatpush1.msra.mxu0 %v1491
        %3520 = vmatprep.subr.mxu0 0.0
        %3521 = vmatpush1.msra.mxu0 %v1490
        %3522 = vmatprep.subr.mxu0 0.0
        %3523 = vmatpush1.msra.mxu0 %v1489
        %3524 = vmatprep.subr.mxu0 0.0
        %3525 = vmatpush1.msra.mxu0 %v1488
        %3526 = vmatprep.subr.mxu0 0.0
        %3527 = vmatpush1.msra.mxu0 %v1487
        %3528 = vmatprep.subr.mxu0 0.0
        %3529 = vmatpush1.msra.mxu0 %v1486
        %3530 = vmatprep.subr.mxu0 0.0
        %3531 = vmatpush1.msra.mxu0 %v1485
        %3532 = vmatprep.subr.mxu0 0.0
        %3533 = vmatpush1.msra.mxu0 %v1484
        %3534 = vmatprep.subr.mxu0 0.0
        %3535 = vmatpush1.msra.mxu0 %v1483
        %3536 = vmatprep.subr.mxu0 0.0
        %3537 = vmatpush2.msra.mxu0 %v1514
        %3538 = vmatprep.subr.mxu0 0.0
        %3539 = vmatpush2.msra.mxu0 %v1513
        %3540 = vmatprep.subr.mxu0 0.0
        %3541 = vmatpush2.msra.mxu0 %v1512
        %3542 = vmatprep.subr.mxu0 0.0
        %3543 = vmatpush2.msra.mxu0 %v1511
        %3544 = vmatprep.subr.mxu0 0.0
        %3545 = vmatpush2.msra.mxu0 %v1510
        %3546 = vmatprep.subr.mxu0 0.0
        %3547 = vmatpush2.msra.mxu0 %v1509
        %3548 = vmatprep.subr.mxu0 0.0
        %3549 = vmatpush2.msra.mxu0 %v1508
        %3550 = vmatprep.subr.mxu0 0.0
        %3551 = vmatpush2.msra.mxu0 %v1507
        %3552 = vmatprep.subr.mxu0 0.0
        %3553 = vmatpush2.msra.mxu0 %v1506
        %3554 = vmatprep.subr.mxu0 0.0
        %3555 = vmatpush2.msra.mxu0 %v1505
        %3556 = vmatprep.subr.mxu0 0.0
        %3557 = vmatpush2.msra.mxu0 %v1504
        %3558 = vmatprep.subr.mxu0 0.0
        %3559 = vmatpush2.msra.mxu0 %v1503
        %3560 = vmatprep.subr.mxu0 0.0
        %3561 = vmatpush2.msra.mxu0 %v1502
        %3562 = vmatprep.subr.mxu0 0.0
        %3563 = vmatpush2.msra.mxu0 %v1501
        %3564 = vmatprep.subr.mxu0 0.0
        %3565 = vmatpush2.msra.mxu0 %v1500
        %3566 = vmatprep.subr.mxu0 0.0
        %3567 = vmatpush2.msra.mxu0 %v1499
        %3568 = vmatprep.mubr.f32.mxu0 %v310
        %3569 = vmatmul.mubr.f32.gmra.mxu0 %v309
        %v3570 = vpop.f32.mrf.mxu0
        %v3571 = vadd.f32 %v3186, %v3570
        %v3572 = vpop.f32.mrf.mxu0
        %3573 = vmatprep.mubr.f32.mxu0 %v326
        %3574 = vmatmul.mubr.f32.gmra.mxu0 %v325
        %v3575 = vpop.f32.mrf.mxu0
        %v3576 = vadd.f32 %v3191, %v3575
        %v3577 = vpop.f32.mrf.mxu0
        %3578 = vmatprep.mubr.f32.mxu0 %v342
        %3579 = vmatmul.mubr.f32.gmra.mxu0 %v341
        %v3580 = vpop.f32.mrf.mxu0
        %v3581 = vadd.f32 %v3196, %v3580
        %v3582 = vpop.f32.mrf.mxu0
        %3583 = vmatprep.mubr.f32.mxu0 %v358
        %3584 = vmatmul.mubr.f32.gmra.mxu0 %v357
        %v3585 = vpop.f32.mrf.mxu0
        %v3586 = vadd.f32 %v3201, %v3585
        %v3587 = vpop.f32.mrf.mxu0
        %3588 = vmatprep.mubr.f32.mxu0 %v374
        %3589 = vmatmul.mubr.f32.gmra.mxu0 %v373
        %v3590 = vpop.f32.mrf.mxu0
        %v3591 = vadd.f32 %v3206, %v3590
        %v3592 = vpop.f32.mrf.mxu0
        %3593 = vmatprep.mubr.f32.mxu0 %v390
        %3594 = vmatmul.mubr.f32.gmra.mxu0 %v389
        %v3595 = vpop.f32.mrf.mxu0
        %v3596 = vadd.f32 %v3211, %v3595
        %v3597 = vpop.f32.mrf.mxu0
        %3598 = vmatprep.mubr.f32.mxu0 %v406
        %3599 = vmatmul.mubr.f32.gmra.mxu0 %v405
        %v3600 = vpop.f32.mrf.mxu0
        %v3601 = vadd.f32 %v3216, %v3600
        %v3602 = vpop.f32.mrf.mxu0
        %3603 = vmatprep.mubr.f32.mxu0 %v422
        %3604 = vmatmul.mubr.f32.gmra.mxu0 %v421
        %v3605 = vpop.f32.mrf.mxu0
        %v3606 = vadd.f32 %v3221, %v3605
        %v3607 = vpop.f32.mrf.mxu0
        %3608 = vmatprep.mubr.f32.mxu0 %v438
        %3609 = vmatmul.mubr.f32.gmra.mxu0 %v437
        %v3610 = vpop.f32.mrf.mxu0
        %v3611 = vadd.f32 %v3226, %v3610
        %v3612 = vpop.f32.mrf.mxu0
        %3613 = vmatprep.mubr.f32.mxu0 %v454
        %3614 = vmatmul.mubr.f32.gmra.mxu0 %v453
        %v3615 = vpop.f32.mrf.mxu0
        %v3616 = vadd.f32 %v3231, %v3615
        %v3617 = vpop.f32.mrf.mxu0
        %3618 = vmatprep.mubr.f32.mxu0 %v470
        %3619 = vmatmul.mubr.f32.gmra.mxu0 %v469
        %v3620 = vpop.f32.mrf.mxu0
        %v3621 = vadd.f32 %v3236, %v3620
        %v3622 = vpop.f32.mrf.mxu0
        %3623 = vmatprep.mubr.f32.mxu0 %v486
        %3624 = vmatmul.mubr.f32.gmra.mxu0 %v485
        %v3625 = vpop.f32.mrf.mxu0
        %v3626 = vadd.f32 %v3241, %v3625
        %v3627 = vpop.f32.mrf.mxu0
        %3628 = vmatprep.mubr.f32.mxu0 %v502
        %3629 = vmatmul.mubr.f32.gmra.mxu0 %v501
        %v3630 = vpop.f32.mrf.mxu0
        %v3631 = vadd.f32 %v3246, %v3630
        %v3632 = vpop.f32.mrf.mxu0
        %3633 = vmatprep.mubr.f32.mxu0 %v518
        %3634 = vmatmul.mubr.f32.gmra.mxu0 %v517
        %v3635 = vpop.f32.mrf.mxu0
        %v3636 = vadd.f32 %v3251, %v3635
        %v3637 = vpop.f32.mrf.mxu0
        %3638 = vmatprep.mubr.f32.mxu0 %v534
        %3639 = vmatmul.mubr.f32.gmra.mxu0 %v533
        %v3640 = vpop.f32.mrf.mxu0
        %v3641 = vadd.f32 %v3256, %v3640
        %v3642 = vpop.f32.mrf.mxu0
        %3643 = vmatprep.mubr.f32.mxu0 %v550
        %3644 = vmatmul.mubr.f32.gmra.mxu0 %v549
        %v3645 = vpop.f32.mrf.mxu0
        %v3646 = vadd.f32 %v3261, %v3645
        %v3647 = vpop.f32.mrf.mxu0
        %3648 = vmatprep.mubr.f32.mxu0 %v566
        %3649 = vmatmul.mubr.f32.gmra.mxu0 %v565
        %v3650 = vpop.f32.mrf.mxu0
        %v3651 = vadd.f32 %v3266, %v3650
        %v3652 = vpop.f32.mrf.mxu0
        %3653 = vmatprep.mubr.f32.mxu0 %v582
        %3654 = vmatmul.mubr.f32.gmra.mxu0 %v581
        %v3655 = vpop.f32.mrf.mxu0
        %v3656 = vadd.f32 %v3271, %v3655
        %v3657 = vpop.f32.mrf.mxu0
        %3658 = vmatprep.mubr.f32.mxu0 %v598
        %3659 = vmatmul.mubr.f32.gmra.mxu0 %v597
        %v3660 = vpop.f32.mrf.mxu0
        %v3661 = vadd.f32 %v3276, %v3660
        %v3662 = vpop.f32.mrf.mxu0
        %3663 = vmatprep.mubr.f32.mxu0 %v614
        %3664 = vmatmul.mubr.f32.gmra.mxu0 %v613
        %v3665 = vpop.f32.mrf.mxu0
        %v3666 = vadd.f32 %v3281, %v3665
        %v3667 = vpop.f32.mrf.mxu0
        %3668 = vmatprep.mubr.f32.mxu0 %v630
        %3669 = vmatmul.mubr.f32.gmra.mxu0 %v629
        %v3670 = vpop.f32.mrf.mxu0
        %v3671 = vadd.f32 %v3286, %v3670
        %v3672 = vpop.f32.mrf.mxu0
        %3673 = vmatprep.mubr.f32.mxu0 %v646
        %3674 = vmatmul.mubr.f32.gmra.mxu0 %v645
        %v3675 = vpop.f32.mrf.mxu0
        %v3676 = vadd.f32 %v3291, %v3675
        %v3677 = vpop.f32.mrf.mxu0
        %3678 = vmatprep.mubr.f32.mxu0 %v662
        %3679 = vmatmul.mubr.f32.gmra.mxu0 %v661
        %v3680 = vpop.f32.mrf.mxu0
        %v3681 = vadd.f32 %v3296, %v3680
        %v3682 = vpop.f32.mrf.mxu0
        %3683 = vmatprep.mubr.f32.mxu0 %v678
        %3684 = vmatmul.mubr.f32.gmra.mxu0 %v677
        %v3685 = vpop.f32.mrf.mxu0
        %v3686 = vadd.f32 %v3301, %v3685
        %v3687 = vpop.f32.mrf.mxu0
        %3688 = vmatprep.mubr.f32.mxu0 %v694
        %3689 = vmatmul.mubr.f32.gmra.mxu0 %v693
        %v3690 = vpop.f32.mrf.mxu0
        %v3691 = vadd.f32 %v3306, %v3690
        %v3692 = vpop.f32.mrf.mxu0
        %3693 = vmatprep.mubr.f32.mxu0 %v710
        %3694 = vmatmul.mubr.f32.gmra.mxu0 %v709
        %v3695 = vpop.f32.mrf.mxu0
        %v3696 = vadd.f32 %v3311, %v3695
        %v3697 = vpop.f32.mrf.mxu0
        %3698 = vmatprep.mubr.f32.mxu0 %v726
        %3699 = vmatmul.mubr.f32.gmra.mxu0 %v725
        %v3700 = vpop.f32.mrf.mxu0
        %v3701 = vadd.f32 %v3316, %v3700
        %v3702 = vpop.f32.mrf.mxu0
        %3703 = vmatprep.mubr.f32.mxu0 %v742
        %3704 = vmatmul.mubr.f32.gmra.mxu0 %v741
        %v3705 = vpop.f32.mrf.mxu0
        %v3706 = vadd.f32 %v3321, %v3705
        %v3707 = vpop.f32.mrf.mxu0
        %3708 = vmatprep.mubr.f32.mxu0 %v758
        %3709 = vmatmul.mubr.f32.gmra.mxu0 %v757
        %v3710 = vpop.f32.mrf.mxu0
        %v3711 = vadd.f32 %v3326, %v3710
        %v3712 = vpop.f32.mrf.mxu0
        %3713 = vmatprep.mubr.f32.mxu0 %v774
        %3714 = vmatmul.mubr.f32.gmra.mxu0 %v773
        %v3715 = vpop.f32.mrf.mxu0
        %v3716 = vadd.f32 %v3331, %v3715
        %v3717 = vpop.f32.mrf.mxu0
        %3718 = vmatprep.mubr.f32.mxu0 %v790
        %3719 = vmatmul.mubr.f32.gmra.mxu0 %v789
        %v3720 = vpop.f32.mrf.mxu0
        %v3721 = vadd.f32 %v3336, %v3720
        %v3722 = vpop.f32.mrf.mxu0
        %3723 = vmatprep.mubr.f32.mxu0 %v806
        %3724 = vmatmul.mubr.f32.gmra.mxu0 %v805
        %v3725 = vpop.f32.mrf.mxu0
        %v3726 = vadd.f32 %v3341, %v3725
        %v3727 = vpop.f32.mrf.mxu0
        %3728 = vmatprep.mubr.f32.mxu0 %v822
        %3729 = vmatmul.mubr.f32.gmra.mxu0 %v821
        %v3730 = vpop.f32.mrf.mxu0
        %v3731 = vadd.f32 %v3346, %v3730
        %v3732 = vpop.f32.mrf.mxu0
        %3733 = vmatprep.mubr.f32.mxu0 %v838
        %3734 = vmatmul.mubr.f32.gmra.mxu0 %v837
        %v3735 = vpop.f32.mrf.mxu0
        %v3736 = vadd.f32 %v3351, %v3735
        %v3737 = vpop.f32.mrf.mxu0
        %3738 = vmatprep.mubr.f32.mxu0 %v854
        %3739 = vmatmul.mubr.f32.gmra.mxu0 %v853
        %v3740 = vpop.f32.mrf.mxu0
        %v3741 = vadd.f32 %v3356, %v3740
        %v3742 = vpop.f32.mrf.mxu0
        %3743 = vmatprep.mubr.f32.mxu0 %v870
        %3744 = vmatmul.mubr.f32.gmra.mxu0 %v869
        %v3745 = vpop.f32.mrf.mxu0
        %v3746 = vadd.f32 %v3361, %v3745
        %v3747 = vpop.f32.mrf.mxu0
        %3748 = vmatprep.mubr.f32.mxu0 %v886
        %3749 = vmatmul.mubr.f32.gmra.mxu0 %v885
        %v3750 = vpop.f32.mrf.mxu0
        %v3751 = vadd.f32 %v3366, %v3750
        %v3752 = vpop.f32.mrf.mxu0
        %3753 = vmatprep.mubr.f32.mxu0 %v902
        %3754 = vmatmul.mubr.f32.gmra.mxu0 %v901
        %v3755 = vpop.f32.mrf.mxu0
        %v3756 = vadd.f32 %v3371, %v3755
        %v3757 = vpop.f32.mrf.mxu0
        %3758 = vmatprep.mubr.f32.mxu0 %v918
        %3759 = vmatmul.mubr.f32.gmra.mxu0 %v917
        %v3760 = vpop.f32.mrf.mxu0
        %v3761 = vadd.f32 %v3376, %v3760
        %v3762 = vpop.f32.mrf.mxu0
        %3763 = vmatprep.mubr.f32.mxu0 %v934
        %3764 = vmatmul.mubr.f32.gmra.mxu0 %v933
        %v3765 = vpop.f32.mrf.mxu0
        %v3766 = vadd.f32 %v3381, %v3765
        %v3767 = vpop.f32.mrf.mxu0
        %3768 = vmatprep.mubr.f32.mxu0 %v950
        %3769 = vmatmul.mubr.f32.gmra.mxu0 %v949
        %v3770 = vpop.f32.mrf.mxu0
        %v3771 = vadd.f32 %v3386, %v3770
        %v3772 = vpop.f32.mrf.mxu0
        %3773 = vmatprep.mubr.f32.mxu0 %v966
        %3774 = vmatmul.mubr.f32.gmra.mxu0 %v965
        %v3775 = vpop.f32.mrf.mxu0
        %v3776 = vadd.f32 %v3391, %v3775
        %v3777 = vpop.f32.mrf.mxu0
        %3778 = vmatprep.mubr.f32.mxu0 %v982
        %3779 = vmatmul.mubr.f32.gmra.mxu0 %v981
        %v3780 = vpop.f32.mrf.mxu0
        %v3781 = vadd.f32 %v3396, %v3780
        %v3782 = vpop.f32.mrf.mxu0
        %3783 = vmatprep.mubr.f32.mxu0 %v998
        %3784 = vmatmul.mubr.f32.gmra.mxu0 %v997
        %v3785 = vpop.f32.mrf.mxu0
        %v3786 = vadd.f32 %v3401, %v3785
        %v3787 = vpop.f32.mrf.mxu0
        %3788 = vmatprep.mubr.f32.mxu0 %v1014
        %3789 = vmatmul.mubr.f32.gmra.mxu0 %v1013
        %v3790 = vpop.f32.mrf.mxu0
        %v3791 = vadd.f32 %v3406, %v3790
        %v3792 = vpop.f32.mrf.mxu0
        %3793 = vmatprep.mubr.f32.mxu0 %v1030
        %3794 = vmatmul.mubr.f32.gmra.mxu0 %v1029
        %v3795 = vpop.f32.mrf.mxu0
        %v3796 = vadd.f32 %v3411, %v3795
        %v3797 = vpop.f32.mrf.mxu0
        %3798 = vmatprep.mubr.f32.mxu0 %v1046
        %3799 = vmatmul.mubr.f32.gmra.mxu0 %v1045
        %v3800 = vpop.f32.mrf.mxu0
        %v3801 = vadd.f32 %v3416, %v3800
        %v3802 = vpop.f32.mrf.mxu0
        %3803 = vmatprep.mubr.f32.mxu0 %v1062
        %3804 = vmatmul.mubr.f32.gmra.mxu0 %v1061
        %v3805 = vpop.f32.mrf.mxu0
        %v3806 = vadd.f32 %v3421, %v3805
        %v3807 = vpop.f32.mrf.mxu0
        %3808 = vmatprep.mubr.f32.mxu0 %v1078
        %3809 = vmatmul.mubr.f32.gmra.mxu0 %v1077
        %v3810 = vpop.f32.mrf.mxu0
        %v3811 = vadd.f32 %v3426, %v3810
        %v3812 = vpop.f32.mrf.mxu0
        %3813 = vmatprep.mubr.f32.mxu0 %v1094
        %3814 = vmatmul.mubr.f32.gmra.mxu0 %v1093
        %v3815 = vpop.f32.mrf.mxu0
        %v3816 = vadd.f32 %v3431, %v3815
        %v3817 = vpop.f32.mrf.mxu0
        %3818 = vmatprep.mubr.f32.mxu0 %v1110
        %3819 = vmatmul.mubr.f32.gmra.mxu0 %v1109
        %v3820 = vpop.f32.mrf.mxu0
        %v3821 = vadd.f32 %v3436, %v3820
        %v3822 = vpop.f32.mrf.mxu0
        %3823 = vmatprep.mubr.f32.mxu0 %v1126
        %3824 = vmatmul.mubr.f32.gmra.mxu0 %v1125
        %v3825 = vpop.f32.mrf.mxu0
        %v3826 = vadd.f32 %v3441, %v3825
        %v3827 = vpop.f32.mrf.mxu0
        %3828 = vmatprep.mubr.f32.mxu0 %v1142
        %3829 = vmatmul.mubr.f32.gmra.mxu0 %v1141
        %v3830 = vpop.f32.mrf.mxu0
        %v3831 = vadd.f32 %v3446, %v3830
        %v3832 = vpop.f32.mrf.mxu0
        %3833 = vmatprep.mubr.f32.mxu0 %v1158
        %3834 = vmatmul.mubr.f32.gmra.mxu0 %v1157
        %v3835 = vpop.f32.mrf.mxu0
        %v3836 = vadd.f32 %v3451, %v3835
        %v3837 = vpop.f32.mrf.mxu0
        %3838 = vmatprep.mubr.f32.mxu0 %v1174
        %3839 = vmatmul.mubr.f32.gmra.mxu0 %v1173
        %v3840 = vpop.f32.mrf.mxu0
        %v3841 = vadd.f32 %v3456, %v3840
        %v3842 = vpop.f32.mrf.mxu0
        %3843 = vmatprep.mubr.f32.mxu0 %v1190
        %3844 = vmatmul.mubr.f32.gmra.mxu0 %v1189
        %v3845 = vpop.f32.mrf.mxu0
        %v3846 = vadd.f32 %v3461, %v3845
        %v3847 = vpop.f32.mrf.mxu0
        %3848 = vmatprep.mubr.f32.mxu0 %v1206
        %3849 = vmatmul.mubr.f32.gmra.mxu0 %v1205
        %v3850 = vpop.f32.mrf.mxu0
        %v3851 = vadd.f32 %v3466, %v3850
        %v3852 = vpop.f32.mrf.mxu0
        %3853 = vmatprep.mubr.f32.mxu0 %v1222
        %3854 = vmatmul.mubr.f32.gmra.mxu0 %v1221
        %v3855 = vpop.f32.mrf.mxu0
        %v3856 = vadd.f32 %v3471, %v3855
        %v3857 = vpop.f32.mrf.mxu0
        %3858 = vmatprep.mubr.f32.mxu0 %v1238
        %3859 = vmatmul.mubr.f32.gmra.mxu0 %v1237
        %v3860 = vpop.f32.mrf.mxu0
        %v3861 = vadd.f32 %v3476, %v3860
        %v3862 = vpop.f32.mrf.mxu0
        %3863 = vmatprep.mubr.f32.mxu0 %v1254
        %3864 = vmatmul.mubr.f32.gmra.mxu0 %v1253
        %v3865 = vpop.f32.mrf.mxu0
        %v3866 = vadd.f32 %v3481, %v3865
        %v3867 = vpop.f32.mrf.mxu0
        %3868 = vmatprep.mubr.f32.mxu0 %v1270
        %3869 = vmatmul.mubr.f32.gmra.mxu0 %v1269
        %v3870 = vpop.f32.mrf.mxu0
        %v3871 = vadd.f32 %v3486, %v3870
        %v3872 = vpop.f32.mrf.mxu0
        %3873 = vmatprep.mubr.f32.mxu0 %v1286
        %3874 = vmatmul.mubr.f32.gmra.mxu0 %v1285
        %v3875 = vpop.f32.mrf.mxu0
        %v3876 = vadd.f32 %v3491, %v3875
        %v3877 = vpop.f32.mrf.mxu0
        %3878 = vmatprep.mubr.f32.mxu0 %v1302
        %3879 = vmatmul.mubr.f32.gmra.mxu0 %v1301
        %v3880 = vpop.f32.mrf.mxu0
        %v3881 = vadd.f32 %v3496, %v3880
        %v3882 = vpop.f32.mrf.mxu0
        %3883 = vmatprep.mubr.f32.mxu0 %v1318
        %3884 = vmatmul.mubr.f32.gmra.mxu0 %v1317
        %v3885 = vpop.f32.mrf.mxu0
        %v3886 = vadd.f32 %v3501, %v3885
        %v3887 = vpop.f32.mrf.mxu0
        %3888 = vdwg.mxu0
        %3889 = vmatprep.subr.mxu0 0.0
        %3890 = vmatpush1.msra.mxu0 %v1530
        %3891 = vmatprep.subr.mxu0 0.0
        %3892 = vmatpush1.msra.mxu0 %v1529
        %3893 = vmatprep.subr.mxu0 0.0
        %3894 = vmatpush1.msra.mxu0 %v1528
        %3895 = vmatprep.subr.mxu0 0.0
        %3896 = vmatpush1.msra.mxu0 %v1527
        %3897 = vmatprep.subr.mxu0 0.0
        %3898 = vmatpush1.msra.mxu0 %v1526
        %3899 = vmatprep.subr.mxu0 0.0
        %3900 = vmatpush1.msra.mxu0 %v1525
        %3901 = vmatprep.subr.mxu0 0.0
        %3902 = vmatpush1.msra.mxu0 %v1524
        %3903 = vmatprep.subr.mxu0 0.0
        %3904 = vmatpush1.msra.mxu0 %v1523
        %3905 = vmatprep.subr.mxu0 0.0
        %3906 = vmatpush1.msra.mxu0 %v1522
        %3907 = vmatprep.subr.mxu0 0.0
        %3908 = vmatpush1.msra.mxu0 %v1521
        %3909 = vmatprep.subr.mxu0 0.0
        %3910 = vmatpush1.msra.mxu0 %v1520
        %3911 = vmatprep.subr.mxu0 0.0
        %3912 = vmatpush1.msra.mxu0 %v1519
        %3913 = vmatprep.subr.mxu0 0.0
        %3914 = vmatpush1.msra.mxu0 %v1518
        %3915 = vmatprep.subr.mxu0 0.0
        %3916 = vmatpush1.msra.mxu0 %v1517
        %3917 = vmatprep.subr.mxu0 0.0
        %3918 = vmatpush1.msra.mxu0 %v1516
        %3919 = vmatprep.subr.mxu0 0.0
        %3920 = vmatpush1.msra.mxu0 %v1515
        %3921 = vmatprep.subr.mxu0 0.0
        %3922 = vmatpush2.msra.mxu0 %v1546
        %3923 = vmatprep.subr.mxu0 0.0
        %3924 = vmatpush2.msra.mxu0 %v1545
        %3925 = vmatprep.subr.mxu0 0.0
        %3926 = vmatpush2.msra.mxu0 %v1544
        %3927 = vmatprep.subr.mxu0 0.0
        %3928 = vmatpush2.msra.mxu0 %v1543
        %3929 = vmatprep.subr.mxu0 0.0
        %3930 = vmatpush2.msra.mxu0 %v1542
        %3931 = vmatprep.subr.mxu0 0.0
        %3932 = vmatpush2.msra.mxu0 %v1541
        %3933 = vmatprep.subr.mxu0 0.0
        %3934 = vmatpush2.msra.mxu0 %v1540
        %3935 = vmatprep.subr.mxu0 0.0
        %3936 = vmatpush2.msra.mxu0 %v1539
        %3937 = vmatprep.subr.mxu0 0.0
        %3938 = vmatpush2.msra.mxu0 %v1538
        %3939 = vmatprep.subr.mxu0 0.0
        %3940 = vmatpush2.msra.mxu0 %v1537
        %3941 = vmatprep.subr.mxu0 0.0
        %3942 = vmatpush2.msra.mxu0 %v1536
        %3943 = vmatprep.subr.mxu0 0.0
        %3944 = vmatpush2.msra.mxu0 %v1535
        %3945 = vmatprep.subr.mxu0 0.0
        %3946 = vmatpush2.msra.mxu0 %v1534
        %3947 = vmatprep.subr.mxu0 0.0
        %3948 = vmatpush2.msra.mxu0 %v1533
        %3949 = vmatprep.subr.mxu0 0.0
        %3950 = vmatpush2.msra.mxu0 %v1532
        %3951 = vmatprep.subr.mxu0 0.0
        %3952 = vmatpush2.msra.mxu0 %v1531
        %3953 = vmatprep.mubr.f32.mxu0 %v312
        %3954 = vmatmul.mubr.f32.gmra.mxu0 %v311
        %v3955 = vpop.f32.mrf.mxu0
        %v3956 = vadd.f32 %v3571, %v3955
        %v3957 = vpop.f32.mrf.mxu0
        %3958 = vmatprep.mubr.f32.mxu0 %v328
        %3959 = vmatmul.mubr.f32.gmra.mxu0 %v327
        %v3960 = vpop.f32.mrf.mxu0
        %v3961 = vadd.f32 %v3576, %v3960
        %v3962 = vpop.f32.mrf.mxu0
        %3963 = vmatprep.mubr.f32.mxu0 %v344
        %3964 = vmatmul.mubr.f32.gmra.mxu0 %v343
        %v3965 = vpop.f32.mrf.mxu0
        %v3966 = vadd.f32 %v3581, %v3965
        %v3967 = vpop.f32.mrf.mxu0
        %3968 = vmatprep.mubr.f32.mxu0 %v360
        %3969 = vmatmul.mubr.f32.gmra.mxu0 %v359
        %v3970 = vpop.f32.mrf.mxu0
        %v3971 = vadd.f32 %v3586, %v3970
        %v3972 = vpop.f32.mrf.mxu0
        %3973 = vmatprep.mubr.f32.mxu0 %v376
        %3974 = vmatmul.mubr.f32.gmra.mxu0 %v375
        %v3975 = vpop.f32.mrf.mxu0
        %v3976 = vadd.f32 %v3591, %v3975
        %v3977 = vpop.f32.mrf.mxu0
        %3978 = vmatprep.mubr.f32.mxu0 %v392
        %3979 = vmatmul.mubr.f32.gmra.mxu0 %v391
        %v3980 = vpop.f32.mrf.mxu0
        %v3981 = vadd.f32 %v3596, %v3980
        %v3982 = vpop.f32.mrf.mxu0
        %3983 = vmatprep.mubr.f32.mxu0 %v408
        %3984 = vmatmul.mubr.f32.gmra.mxu0 %v407
        %v3985 = vpop.f32.mrf.mxu0
        %v3986 = vadd.f32 %v3601, %v3985
        %v3987 = vpop.f32.mrf.mxu0
        %3988 = vmatprep.mubr.f32.mxu0 %v424
        %3989 = vmatmul.mubr.f32.gmra.mxu0 %v423
        %v3990 = vpop.f32.mrf.mxu0
        %v3991 = vadd.f32 %v3606, %v3990
        %v3992 = vpop.f32.mrf.mxu0
        %3993 = vmatprep.mubr.f32.mxu0 %v440
        %3994 = vmatmul.mubr.f32.gmra.mxu0 %v439
        %v3995 = vpop.f32.mrf.mxu0
        %v3996 = vadd.f32 %v3611, %v3995
        %v3997 = vpop.f32.mrf.mxu0
        %3998 = vmatprep.mubr.f32.mxu0 %v456
        %3999 = vmatmul.mubr.f32.gmra.mxu0 %v455
        %v4000 = vpop.f32.mrf.mxu0
        %v4001 = vadd.f32 %v3616, %v4000
        %v4002 = vpop.f32.mrf.mxu0
        %4003 = vmatprep.mubr.f32.mxu0 %v472
        %4004 = vmatmul.mubr.f32.gmra.mxu0 %v471
        %v4005 = vpop.f32.mrf.mxu0
        %v4006 = vadd.f32 %v3621, %v4005
        %v4007 = vpop.f32.mrf.mxu0
        %4008 = vmatprep.mubr.f32.mxu0 %v488
        %4009 = vmatmul.mubr.f32.gmra.mxu0 %v487
        %v4010 = vpop.f32.mrf.mxu0
        %v4011 = vadd.f32 %v3626, %v4010
        %v4012 = vpop.f32.mrf.mxu0
        %4013 = vmatprep.mubr.f32.mxu0 %v504
        %4014 = vmatmul.mubr.f32.gmra.mxu0 %v503
        %v4015 = vpop.f32.mrf.mxu0
        %v4016 = vadd.f32 %v3631, %v4015
        %v4017 = vpop.f32.mrf.mxu0
        %4018 = vmatprep.mubr.f32.mxu0 %v520
        %4019 = vmatmul.mubr.f32.gmra.mxu0 %v519
        %v4020 = vpop.f32.mrf.mxu0
        %v4021 = vadd.f32 %v3636, %v4020
        %v4022 = vpop.f32.mrf.mxu0
        %4023 = vmatprep.mubr.f32.mxu0 %v536
        %4024 = vmatmul.mubr.f32.gmra.mxu0 %v535
        %v4025 = vpop.f32.mrf.mxu0
        %v4026 = vadd.f32 %v3641, %v4025
        %v4027 = vpop.f32.mrf.mxu0
        %4028 = vmatprep.mubr.f32.mxu0 %v552
        %4029 = vmatmul.mubr.f32.gmra.mxu0 %v551
        %v4030 = vpop.f32.mrf.mxu0
        %v4031 = vadd.f32 %v3646, %v4030
        %v4032 = vpop.f32.mrf.mxu0
        %4033 = vmatprep.mubr.f32.mxu0 %v568
        %4034 = vmatmul.mubr.f32.gmra.mxu0 %v567
        %v4035 = vpop.f32.mrf.mxu0
        %v4036 = vadd.f32 %v3651, %v4035
        %v4037 = vpop.f32.mrf.mxu0
        %4038 = vmatprep.mubr.f32.mxu0 %v584
        %4039 = vmatmul.mubr.f32.gmra.mxu0 %v583
        %v4040 = vpop.f32.mrf.mxu0
        %v4041 = vadd.f32 %v3656, %v4040
        %v4042 = vpop.f32.mrf.mxu0
        %4043 = vmatprep.mubr.f32.mxu0 %v600
        %4044 = vmatmul.mubr.f32.gmra.mxu0 %v599
        %v4045 = vpop.f32.mrf.mxu0
        %v4046 = vadd.f32 %v3661, %v4045
        %v4047 = vpop.f32.mrf.mxu0
        %4048 = vmatprep.mubr.f32.mxu0 %v616
        %4049 = vmatmul.mubr.f32.gmra.mxu0 %v615
        %v4050 = vpop.f32.mrf.mxu0
        %v4051 = vadd.f32 %v3666, %v4050
        %v4052 = vpop.f32.mrf.mxu0
        %4053 = vmatprep.mubr.f32.mxu0 %v632
        %4054 = vmatmul.mubr.f32.gmra.mxu0 %v631
        %v4055 = vpop.f32.mrf.mxu0
        %v4056 = vadd.f32 %v3671, %v4055
        %v4057 = vpop.f32.mrf.mxu0
        %4058 = vmatprep.mubr.f32.mxu0 %v648
        %4059 = vmatmul.mubr.f32.gmra.mxu0 %v647
        %v4060 = vpop.f32.mrf.mxu0
        %v4061 = vadd.f32 %v3676, %v4060
        %v4062 = vpop.f32.mrf.mxu0
        %4063 = vmatprep.mubr.f32.mxu0 %v664
        %4064 = vmatmul.mubr.f32.gmra.mxu0 %v663
        %v4065 = vpop.f32.mrf.mxu0
        %v4066 = vadd.f32 %v3681, %v4065
        %v4067 = vpop.f32.mrf.mxu0
        %4068 = vmatprep.mubr.f32.mxu0 %v680
        %4069 = vmatmul.mubr.f32.gmra.mxu0 %v679
        %v4070 = vpop.f32.mrf.mxu0
        %v4071 = vadd.f32 %v3686, %v4070
        %v4072 = vpop.f32.mrf.mxu0
        %4073 = vmatprep.mubr.f32.mxu0 %v696
        %4074 = vmatmul.mubr.f32.gmra.mxu0 %v695
        %v4075 = vpop.f32.mrf.mxu0
        %v4076 = vadd.f32 %v3691, %v4075
        %v4077 = vpop.f32.mrf.mxu0
        %4078 = vmatprep.mubr.f32.mxu0 %v712
        %4079 = vmatmul.mubr.f32.gmra.mxu0 %v711
        %v4080 = vpop.f32.mrf.mxu0
        %v4081 = vadd.f32 %v3696, %v4080
        %v4082 = vpop.f32.mrf.mxu0
        %4083 = vmatprep.mubr.f32.mxu0 %v728
        %4084 = vmatmul.mubr.f32.gmra.mxu0 %v727
        %v4085 = vpop.f32.mrf.mxu0
        %v4086 = vadd.f32 %v3701, %v4085
        %v4087 = vpop.f32.mrf.mxu0
        %4088 = vmatprep.mubr.f32.mxu0 %v744
        %4089 = vmatmul.mubr.f32.gmra.mxu0 %v743
        %v4090 = vpop.f32.mrf.mxu0
        %v4091 = vadd.f32 %v3706, %v4090
        %v4092 = vpop.f32.mrf.mxu0
        %4093 = vmatprep.mubr.f32.mxu0 %v760
        %4094 = vmatmul.mubr.f32.gmra.mxu0 %v759
        %v4095 = vpop.f32.mrf.mxu0
        %v4096 = vadd.f32 %v3711, %v4095
        %v4097 = vpop.f32.mrf.mxu0
        %4098 = vmatprep.mubr.f32.mxu0 %v776
        %4099 = vmatmul.mubr.f32.gmra.mxu0 %v775
        %v4100 = vpop.f32.mrf.mxu0
        %v4101 = vadd.f32 %v3716, %v4100
        %v4102 = vpop.f32.mrf.mxu0
        %4103 = vmatprep.mubr.f32.mxu0 %v792
        %4104 = vmatmul.mubr.f32.gmra.mxu0 %v791
        %v4105 = vpop.f32.mrf.mxu0
        %v4106 = vadd.f32 %v3721, %v4105
        %v4107 = vpop.f32.mrf.mxu0
        %4108 = vmatprep.mubr.f32.mxu0 %v808
        %4109 = vmatmul.mubr.f32.gmra.mxu0 %v807
        %v4110 = vpop.f32.mrf.mxu0
        %v4111 = vadd.f32 %v3726, %v4110
        %v4112 = vpop.f32.mrf.mxu0
        %4113 = vmatprep.mubr.f32.mxu0 %v824
        %4114 = vmatmul.mubr.f32.gmra.mxu0 %v823
        %v4115 = vpop.f32.mrf.mxu0
        %v4116 = vadd.f32 %v3731, %v4115
        %v4117 = vpop.f32.mrf.mxu0
        %4118 = vmatprep.mubr.f32.mxu0 %v840
        %4119 = vmatmul.mubr.f32.gmra.mxu0 %v839
        %v4120 = vpop.f32.mrf.mxu0
        %v4121 = vadd.f32 %v3736, %v4120
        %v4122 = vpop.f32.mrf.mxu0
        %4123 = vmatprep.mubr.f32.mxu0 %v856
        %4124 = vmatmul.mubr.f32.gmra.mxu0 %v855
        %v4125 = vpop.f32.mrf.mxu0
        %v4126 = vadd.f32 %v3741, %v4125
        %v4127 = vpop.f32.mrf.mxu0
        %4128 = vmatprep.mubr.f32.mxu0 %v872
        %4129 = vmatmul.mubr.f32.gmra.mxu0 %v871
        %v4130 = vpop.f32.mrf.mxu0
        %v4131 = vadd.f32 %v3746, %v4130
        %v4132 = vpop.f32.mrf.mxu0
        %4133 = vmatprep.mubr.f32.mxu0 %v888
        %4134 = vmatmul.mubr.f32.gmra.mxu0 %v887
        %v4135 = vpop.f32.mrf.mxu0
        %v4136 = vadd.f32 %v3751, %v4135
        %v4137 = vpop.f32.mrf.mxu0
        %4138 = vmatprep.mubr.f32.mxu0 %v904
        %4139 = vmatmul.mubr.f32.gmra.mxu0 %v903
        %v4140 = vpop.f32.mrf.mxu0
        %v4141 = vadd.f32 %v3756, %v4140
        %v4142 = vpop.f32.mrf.mxu0
        %4143 = vmatprep.mubr.f32.mxu0 %v920
        %4144 = vmatmul.mubr.f32.gmra.mxu0 %v919
        %v4145 = vpop.f32.mrf.mxu0
        %v4146 = vadd.f32 %v3761, %v4145
        %v4147 = vpop.f32.mrf.mxu0
        %4148 = vmatprep.mubr.f32.mxu0 %v936
        %4149 = vmatmul.mubr.f32.gmra.mxu0 %v935
        %v4150 = vpop.f32.mrf.mxu0
        %v4151 = vadd.f32 %v3766, %v4150
        %v4152 = vpop.f32.mrf.mxu0
        %4153 = vmatprep.mubr.f32.mxu0 %v952
        %4154 = vmatmul.mubr.f32.gmra.mxu0 %v951
        %v4155 = vpop.f32.mrf.mxu0
        %v4156 = vadd.f32 %v3771, %v4155
        %v4157 = vpop.f32.mrf.mxu0
        %4158 = vmatprep.mubr.f32.mxu0 %v968
        %4159 = vmatmul.mubr.f32.gmra.mxu0 %v967
        %v4160 = vpop.f32.mrf.mxu0
        %v4161 = vadd.f32 %v3776, %v4160
        %v4162 = vpop.f32.mrf.mxu0
        %4163 = vmatprep.mubr.f32.mxu0 %v984
        %4164 = vmatmul.mubr.f32.gmra.mxu0 %v983
        %v4165 = vpop.f32.mrf.mxu0
        %v4166 = vadd.f32 %v3781, %v4165
        %v4167 = vpop.f32.mrf.mxu0
        %4168 = vmatprep.mubr.f32.mxu0 %v1000
        %4169 = vmatmul.mubr.f32.gmra.mxu0 %v999
        %v4170 = vpop.f32.mrf.mxu0
        %v4171 = vadd.f32 %v3786, %v4170
        %v4172 = vpop.f32.mrf.mxu0
        %4173 = vmatprep.mubr.f32.mxu0 %v1016
        %4174 = vmatmul.mubr.f32.gmra.mxu0 %v1015
        %v4175 = vpop.f32.mrf.mxu0
        %v4176 = vadd.f32 %v3791, %v4175
        %v4177 = vpop.f32.mrf.mxu0
        %4178 = vmatprep.mubr.f32.mxu0 %v1032
        %4179 = vmatmul.mubr.f32.gmra.mxu0 %v1031
        %v4180 = vpop.f32.mrf.mxu0
        %v4181 = vadd.f32 %v3796, %v4180
        %v4182 = vpop.f32.mrf.mxu0
        %4183 = vmatprep.mubr.f32.mxu0 %v1048
        %4184 = vmatmul.mubr.f32.gmra.mxu0 %v1047
        %v4185 = vpop.f32.mrf.mxu0
        %v4186 = vadd.f32 %v3801, %v4185
        %v4187 = vpop.f32.mrf.mxu0
        %4188 = vmatprep.mubr.f32.mxu0 %v1064
        %4189 = vmatmul.mubr.f32.gmra.mxu0 %v1063
        %v4190 = vpop.f32.mrf.mxu0
        %v4191 = vadd.f32 %v3806, %v4190
        %v4192 = vpop.f32.mrf.mxu0
        %4193 = vmatprep.mubr.f32.mxu0 %v1080
        %4194 = vmatmul.mubr.f32.gmra.mxu0 %v1079
        %v4195 = vpop.f32.mrf.mxu0
        %v4196 = vadd.f32 %v3811, %v4195
        %v4197 = vpop.f32.mrf.mxu0
        %4198 = vmatprep.mubr.f32.mxu0 %v1096
        %4199 = vmatmul.mubr.f32.gmra.mxu0 %v1095
        %v4200 = vpop.f32.mrf.mxu0
        %v4201 = vadd.f32 %v3816, %v4200
        %v4202 = vpop.f32.mrf.mxu0
        %4203 = vmatprep.mubr.f32.mxu0 %v1112
        %4204 = vmatmul.mubr.f32.gmra.mxu0 %v1111
        %v4205 = vpop.f32.mrf.mxu0
        %v4206 = vadd.f32 %v3821, %v4205
        %v4207 = vpop.f32.mrf.mxu0
        %4208 = vmatprep.mubr.f32.mxu0 %v1128
        %4209 = vmatmul.mubr.f32.gmra.mxu0 %v1127
        %v4210 = vpop.f32.mrf.mxu0
        %v4211 = vadd.f32 %v3826, %v4210
        %v4212 = vpop.f32.mrf.mxu0
        %4213 = vmatprep.mubr.f32.mxu0 %v1144
        %4214 = vmatmul.mubr.f32.gmra.mxu0 %v1143
        %v4215 = vpop.f32.mrf.mxu0
        %v4216 = vadd.f32 %v3831, %v4215
        %v4217 = vpop.f32.mrf.mxu0
        %4218 = vmatprep.mubr.f32.mxu0 %v1160
        %4219 = vmatmul.mubr.f32.gmra.mxu0 %v1159
        %v4220 = vpop.f32.mrf.mxu0
        %v4221 = vadd.f32 %v3836, %v4220
        %v4222 = vpop.f32.mrf.mxu0
        %4223 = vmatprep.mubr.f32.mxu0 %v1176
        %4224 = vmatmul.mubr.f32.gmra.mxu0 %v1175
        %v4225 = vpop.f32.mrf.mxu0
        %v4226 = vadd.f32 %v3841, %v4225
        %v4227 = vpop.f32.mrf.mxu0
        %4228 = vmatprep.mubr.f32.mxu0 %v1192
        %4229 = vmatmul.mubr.f32.gmra.mxu0 %v1191
        %v4230 = vpop.f32.mrf.mxu0
        %v4231 = vadd.f32 %v3846, %v4230
        %v4232 = vpop.f32.mrf.mxu0
        %4233 = vmatprep.mubr.f32.mxu0 %v1208
        %4234 = vmatmul.mubr.f32.gmra.mxu0 %v1207
        %v4235 = vpop.f32.mrf.mxu0
        %v4236 = vadd.f32 %v3851, %v4235
        %v4237 = vpop.f32.mrf.mxu0
        %4238 = vmatprep.mubr.f32.mxu0 %v1224
        %4239 = vmatmul.mubr.f32.gmra.mxu0 %v1223
        %v4240 = vpop.f32.mrf.mxu0
        %v4241 = vadd.f32 %v3856, %v4240
        %v4242 = vpop.f32.mrf.mxu0
        %4243 = vmatprep.mubr.f32.mxu0 %v1240
        %4244 = vmatmul.mubr.f32.gmra.mxu0 %v1239
        %v4245 = vpop.f32.mrf.mxu0
        %v4246 = vadd.f32 %v3861, %v4245
        %v4247 = vpop.f32.mrf.mxu0
        %4248 = vmatprep.mubr.f32.mxu0 %v1256
        %4249 = vmatmul.mubr.f32.gmra.mxu0 %v1255
        %v4250 = vpop.f32.mrf.mxu0
        %v4251 = vadd.f32 %v3866, %v4250
        %v4252 = vpop.f32.mrf.mxu0
        %4253 = vmatprep.mubr.f32.mxu0 %v1272
        %4254 = vmatmul.mubr.f32.gmra.mxu0 %v1271
        %v4255 = vpop.f32.mrf.mxu0
        %v4256 = vadd.f32 %v3871, %v4255
        %v4257 = vpop.f32.mrf.mxu0
        %4258 = vmatprep.mubr.f32.mxu0 %v1288
        %4259 = vmatmul.mubr.f32.gmra.mxu0 %v1287
        %v4260 = vpop.f32.mrf.mxu0
        %v4261 = vadd.f32 %v3876, %v4260
        %v4262 = vpop.f32.mrf.mxu0
        %4263 = vmatprep.mubr.f32.mxu0 %v1304
        %4264 = vmatmul.mubr.f32.gmra.mxu0 %v1303
        %v4265 = vpop.f32.mrf.mxu0
        %v4266 = vadd.f32 %v3881, %v4265
        %v4267 = vpop.f32.mrf.mxu0
        %4268 = vmatprep.mubr.f32.mxu0 %v1320
        %4269 = vmatmul.mubr.f32.gmra.mxu0 %v1319
        %v4270 = vpop.f32.mrf.mxu0
        %v4271 = vadd.f32 %v3886, %v4270
        %v4272 = vpop.f32.mrf.mxu0
        %4273 = vdwg.mxu0
        %4274 = vmatprep.subr.mxu0 0.0
        %4275 = vmatpush1.msra.mxu0 %v1562
        %4276 = vmatprep.subr.mxu0 0.0
        %4277 = vmatpush1.msra.mxu0 %v1561
        %4278 = vmatprep.subr.mxu0 0.0
        %4279 = vmatpush1.msra.mxu0 %v1560
        %4280 = vmatprep.subr.mxu0 0.0
        %4281 = vmatpush1.msra.mxu0 %v1559
        %4282 = vmatprep.subr.mxu0 0.0
        %4283 = vmatpush1.msra.mxu0 %v1558
        %4284 = vmatprep.subr.mxu0 0.0
        %4285 = vmatpush1.msra.mxu0 %v1557
        %4286 = vmatprep.subr.mxu0 0.0
        %4287 = vmatpush1.msra.mxu0 %v1556
        %4288 = vmatprep.subr.mxu0 0.0
        %4289 = vmatpush1.msra.mxu0 %v1555
        %4290 = vmatprep.subr.mxu0 0.0
        %4291 = vmatpush1.msra.mxu0 %v1554
        %4292 = vmatprep.subr.mxu0 0.0
        %4293 = vmatpush1.msra.mxu0 %v1553
        %4294 = vmatprep.subr.mxu0 0.0
        %4295 = vmatpush1.msra.mxu0 %v1552
        %4296 = vmatprep.subr.mxu0 0.0
        %4297 = vmatpush1.msra.mxu0 %v1551
        %4298 = vmatprep.subr.mxu0 0.0
        %4299 = vmatpush1.msra.mxu0 %v1550
        %4300 = vmatprep.subr.mxu0 0.0
        %4301 = vmatpush1.msra.mxu0 %v1549
        %4302 = vmatprep.subr.mxu0 0.0
        %4303 = vmatpush1.msra.mxu0 %v1548
        %4304 = vmatprep.subr.mxu0 0.0
        %4305 = vmatpush1.msra.mxu0 %v1547
        %4306 = vmatprep.subr.mxu0 0.0
        %4307 = vmatpush2.msra.mxu0 %v1578
        %4308 = vmatprep.subr.mxu0 0.0
        %4309 = vmatpush2.msra.mxu0 %v1577
        %4310 = vmatprep.subr.mxu0 0.0
        %4311 = vmatpush2.msra.mxu0 %v1576
        %4312 = vmatprep.subr.mxu0 0.0
        %4313 = vmatpush2.msra.mxu0 %v1575
        %4314 = vmatprep.subr.mxu0 0.0
        %4315 = vmatpush2.msra.mxu0 %v1574
        %4316 = vmatprep.subr.mxu0 0.0
        %4317 = vmatpush2.msra.mxu0 %v1573
        %4318 = vmatprep.subr.mxu0 0.0
        %4319 = vmatpush2.msra.mxu0 %v1572
        %4320 = vmatprep.subr.mxu0 0.0
        %4321 = vmatpush2.msra.mxu0 %v1571
        %4322 = vmatprep.subr.mxu0 0.0
        %4323 = vmatpush2.msra.mxu0 %v1570
        %4324 = vmatprep.subr.mxu0 0.0
        %4325 = vmatpush2.msra.mxu0 %v1569
        %4326 = vmatprep.subr.mxu0 0.0
        %4327 = vmatpush2.msra.mxu0 %v1568
        %4328 = vmatprep.subr.mxu0 0.0
        %4329 = vmatpush2.msra.mxu0 %v1567
        %4330 = vmatprep.subr.mxu0 0.0
        %4331 = vmatpush2.msra.mxu0 %v1566
        %4332 = vmatprep.subr.mxu0 0.0
        %4333 = vmatpush2.msra.mxu0 %v1565
        %4334 = vmatprep.subr.mxu0 0.0
        %4335 = vmatpush2.msra.mxu0 %v1564
        %4336 = vmatprep.subr.mxu0 0.0
        %4337 = vmatpush2.msra.mxu0 %v1563
        %4338 = vmatprep.mubr.f32.mxu0 %v314
        %4339 = vmatmul.mubr.f32.gmra.mxu0 %v313
        %v4340 = vpop.f32.mrf.mxu0
        %v4341 = vadd.f32 %v3956, %v4340
        %v4342 = vpop.f32.mrf.mxu0
        %4343 = vmatprep.mubr.f32.mxu0 %v330
        %4344 = vmatmul.mubr.f32.gmra.mxu0 %v329
        %v4345 = vpop.f32.mrf.mxu0
        %v4346 = vadd.f32 %v3961, %v4345
        %v4347 = vpop.f32.mrf.mxu0
        %4348 = vmatprep.mubr.f32.mxu0 %v346
        %4349 = vmatmul.mubr.f32.gmra.mxu0 %v345
        %v4350 = vpop.f32.mrf.mxu0
        %v4351 = vadd.f32 %v3966, %v4350
        %v4352 = vpop.f32.mrf.mxu0
        %4353 = vmatprep.mubr.f32.mxu0 %v362
        %4354 = vmatmul.mubr.f32.gmra.mxu0 %v361
        %v4355 = vpop.f32.mrf.mxu0
        %v4356 = vadd.f32 %v3971, %v4355
        %v4357 = vpop.f32.mrf.mxu0
        %4358 = vmatprep.mubr.f32.mxu0 %v378
        %4359 = vmatmul.mubr.f32.gmra.mxu0 %v377
        %v4360 = vpop.f32.mrf.mxu0
        %v4361 = vadd.f32 %v3976, %v4360
        %v4362 = vpop.f32.mrf.mxu0
        %4363 = vmatprep.mubr.f32.mxu0 %v394
        %4364 = vmatmul.mubr.f32.gmra.mxu0 %v393
        %v4365 = vpop.f32.mrf.mxu0
        %v4366 = vadd.f32 %v3981, %v4365
        %v4367 = vpop.f32.mrf.mxu0
        %4368 = vmatprep.mubr.f32.mxu0 %v410
        %4369 = vmatmul.mubr.f32.gmra.mxu0 %v409
        %v4370 = vpop.f32.mrf.mxu0
        %v4371 = vadd.f32 %v3986, %v4370
        %v4372 = vpop.f32.mrf.mxu0
        %4373 = vmatprep.mubr.f32.mxu0 %v426
        %4374 = vmatmul.mubr.f32.gmra.mxu0 %v425
        %v4375 = vpop.f32.mrf.mxu0
        %v4376 = vadd.f32 %v3991, %v4375
        %v4377 = vpop.f32.mrf.mxu0
        %4378 = vmatprep.mubr.f32.mxu0 %v442
        %4379 = vmatmul.mubr.f32.gmra.mxu0 %v441
        %v4380 = vpop.f32.mrf.mxu0
        %v4381 = vadd.f32 %v3996, %v4380
        %v4382 = vpop.f32.mrf.mxu0
        %4383 = vmatprep.mubr.f32.mxu0 %v458
        %4384 = vmatmul.mubr.f32.gmra.mxu0 %v457
        %v4385 = vpop.f32.mrf.mxu0
        %v4386 = vadd.f32 %v4001, %v4385
        %v4387 = vpop.f32.mrf.mxu0
        %4388 = vmatprep.mubr.f32.mxu0 %v474
        %4389 = vmatmul.mubr.f32.gmra.mxu0 %v473
        %v4390 = vpop.f32.mrf.mxu0
        %v4391 = vadd.f32 %v4006, %v4390
        %v4392 = vpop.f32.mrf.mxu0
        %4393 = vmatprep.mubr.f32.mxu0 %v490
        %4394 = vmatmul.mubr.f32.gmra.mxu0 %v489
        %v4395 = vpop.f32.mrf.mxu0
        %v4396 = vadd.f32 %v4011, %v4395
        %v4397 = vpop.f32.mrf.mxu0
        %4398 = vmatprep.mubr.f32.mxu0 %v506
        %4399 = vmatmul.mubr.f32.gmra.mxu0 %v505
        %v4400 = vpop.f32.mrf.mxu0
        %v4401 = vadd.f32 %v4016, %v4400
        %v4402 = vpop.f32.mrf.mxu0
        %4403 = vmatprep.mubr.f32.mxu0 %v522
        %4404 = vmatmul.mubr.f32.gmra.mxu0 %v521
        %v4405 = vpop.f32.mrf.mxu0
        %v4406 = vadd.f32 %v4021, %v4405
        %v4407 = vpop.f32.mrf.mxu0
        %4408 = vmatprep.mubr.f32.mxu0 %v538
        %4409 = vmatmul.mubr.f32.gmra.mxu0 %v537
        %v4410 = vpop.f32.mrf.mxu0
        %v4411 = vadd.f32 %v4026, %v4410
        %v4412 = vpop.f32.mrf.mxu0
        %4413 = vmatprep.mubr.f32.mxu0 %v554
        %4414 = vmatmul.mubr.f32.gmra.mxu0 %v553
        %v4415 = vpop.f32.mrf.mxu0
        %v4416 = vadd.f32 %v4031, %v4415
        %v4417 = vpop.f32.mrf.mxu0
        %4418 = vmatprep.mubr.f32.mxu0 %v570
        %4419 = vmatmul.mubr.f32.gmra.mxu0 %v569
        %v4420 = vpop.f32.mrf.mxu0
        %v4421 = vadd.f32 %v4036, %v4420
        %v4422 = vpop.f32.mrf.mxu0
        %4423 = vmatprep.mubr.f32.mxu0 %v586
        %4424 = vmatmul.mubr.f32.gmra.mxu0 %v585
        %v4425 = vpop.f32.mrf.mxu0
        %v4426 = vadd.f32 %v4041, %v4425
        %v4427 = vpop.f32.mrf.mxu0
        %4428 = vmatprep.mubr.f32.mxu0 %v602
        %4429 = vmatmul.mubr.f32.gmra.mxu0 %v601
        %v4430 = vpop.f32.mrf.mxu0
        %v4431 = vadd.f32 %v4046, %v4430
        %v4432 = vpop.f32.mrf.mxu0
        %4433 = vmatprep.mubr.f32.mxu0 %v618
        %4434 = vmatmul.mubr.f32.gmra.mxu0 %v617
        %v4435 = vpop.f32.mrf.mxu0
        %v4436 = vadd.f32 %v4051, %v4435
        %v4437 = vpop.f32.mrf.mxu0
        %4438 = vmatprep.mubr.f32.mxu0 %v634
        %4439 = vmatmul.mubr.f32.gmra.mxu0 %v633
        %v4440 = vpop.f32.mrf.mxu0
        %v4441 = vadd.f32 %v4056, %v4440
        %v4442 = vpop.f32.mrf.mxu0
        %4443 = vmatprep.mubr.f32.mxu0 %v650
        %4444 = vmatmul.mubr.f32.gmra.mxu0 %v649
        %v4445 = vpop.f32.mrf.mxu0
        %v4446 = vadd.f32 %v4061, %v4445
        %v4447 = vpop.f32.mrf.mxu0
        %4448 = vmatprep.mubr.f32.mxu0 %v666
        %4449 = vmatmul.mubr.f32.gmra.mxu0 %v665
        %v4450 = vpop.f32.mrf.mxu0
        %v4451 = vadd.f32 %v4066, %v4450
        %v4452 = vpop.f32.mrf.mxu0
        %4453 = vmatprep.mubr.f32.mxu0 %v682
        %4454 = vmatmul.mubr.f32.gmra.mxu0 %v681
        %v4455 = vpop.f32.mrf.mxu0
        %v4456 = vadd.f32 %v4071, %v4455
        %v4457 = vpop.f32.mrf.mxu0
        %4458 = vmatprep.mubr.f32.mxu0 %v698
        %4459 = vmatmul.mubr.f32.gmra.mxu0 %v697
        %v4460 = vpop.f32.mrf.mxu0
        %v4461 = vadd.f32 %v4076, %v4460
        %v4462 = vpop.f32.mrf.mxu0
        %4463 = vmatprep.mubr.f32.mxu0 %v714
        %4464 = vmatmul.mubr.f32.gmra.mxu0 %v713
        %v4465 = vpop.f32.mrf.mxu0
        %v4466 = vadd.f32 %v4081, %v4465
        %v4467 = vpop.f32.mrf.mxu0
        %4468 = vmatprep.mubr.f32.mxu0 %v730
        %4469 = vmatmul.mubr.f32.gmra.mxu0 %v729
        %v4470 = vpop.f32.mrf.mxu0
        %v4471 = vadd.f32 %v4086, %v4470
        %v4472 = vpop.f32.mrf.mxu0
        %4473 = vmatprep.mubr.f32.mxu0 %v746
        %4474 = vmatmul.mubr.f32.gmra.mxu0 %v745
        %v4475 = vpop.f32.mrf.mxu0
        %v4476 = vadd.f32 %v4091, %v4475
        %v4477 = vpop.f32.mrf.mxu0
        %4478 = vmatprep.mubr.f32.mxu0 %v762
        %4479 = vmatmul.mubr.f32.gmra.mxu0 %v761
        %v4480 = vpop.f32.mrf.mxu0
        %v4481 = vadd.f32 %v4096, %v4480
        %v4482 = vpop.f32.mrf.mxu0
        %4483 = vmatprep.mubr.f32.mxu0 %v778
        %4484 = vmatmul.mubr.f32.gmra.mxu0 %v777
        %v4485 = vpop.f32.mrf.mxu0
        %v4486 = vadd.f32 %v4101, %v4485
        %v4487 = vpop.f32.mrf.mxu0
        %4488 = vmatprep.mubr.f32.mxu0 %v794
        %4489 = vmatmul.mubr.f32.gmra.mxu0 %v793
        %v4490 = vpop.f32.mrf.mxu0
        %v4491 = vadd.f32 %v4106, %v4490
        %v4492 = vpop.f32.mrf.mxu0
        %4493 = vmatprep.mubr.f32.mxu0 %v810
        %4494 = vmatmul.mubr.f32.gmra.mxu0 %v809
        %v4495 = vpop.f32.mrf.mxu0
        %v4496 = vadd.f32 %v4111, %v4495
        %v4497 = vpop.f32.mrf.mxu0
        %4498 = vmatprep.mubr.f32.mxu0 %v826
        %4499 = vmatmul.mubr.f32.gmra.mxu0 %v825
        %v4500 = vpop.f32.mrf.mxu0
        %v4501 = vadd.f32 %v4116, %v4500
        %v4502 = vpop.f32.mrf.mxu0
        %4503 = vmatprep.mubr.f32.mxu0 %v842
        %4504 = vmatmul.mubr.f32.gmra.mxu0 %v841
        %v4505 = vpop.f32.mrf.mxu0
        %v4506 = vadd.f32 %v4121, %v4505
        %v4507 = vpop.f32.mrf.mxu0
        %4508 = vmatprep.mubr.f32.mxu0 %v858
        %4509 = vmatmul.mubr.f32.gmra.mxu0 %v857
        %v4510 = vpop.f32.mrf.mxu0
        %v4511 = vadd.f32 %v4126, %v4510
        %v4512 = vpop.f32.mrf.mxu0
        %4513 = vmatprep.mubr.f32.mxu0 %v874
        %4514 = vmatmul.mubr.f32.gmra.mxu0 %v873
        %v4515 = vpop.f32.mrf.mxu0
        %v4516 = vadd.f32 %v4131, %v4515
        %v4517 = vpop.f32.mrf.mxu0
        %4518 = vmatprep.mubr.f32.mxu0 %v890
        %4519 = vmatmul.mubr.f32.gmra.mxu0 %v889
        %v4520 = vpop.f32.mrf.mxu0
        %v4521 = vadd.f32 %v4136, %v4520
        %v4522 = vpop.f32.mrf.mxu0
        %4523 = vmatprep.mubr.f32.mxu0 %v906
        %4524 = vmatmul.mubr.f32.gmra.mxu0 %v905
        %v4525 = vpop.f32.mrf.mxu0
        %v4526 = vadd.f32 %v4141, %v4525
        %v4527 = vpop.f32.mrf.mxu0
        %4528 = vmatprep.mubr.f32.mxu0 %v922
        %4529 = vmatmul.mubr.f32.gmra.mxu0 %v921
        %v4530 = vpop.f32.mrf.mxu0
        %v4531 = vadd.f32 %v4146, %v4530
        %v4532 = vpop.f32.mrf.mxu0
        %4533 = vmatprep.mubr.f32.mxu0 %v938
        %4534 = vmatmul.mubr.f32.gmra.mxu0 %v937
        %v4535 = vpop.f32.mrf.mxu0
        %v4536 = vadd.f32 %v4151, %v4535
        %v4537 = vpop.f32.mrf.mxu0
        %4538 = vmatprep.mubr.f32.mxu0 %v954
        %4539 = vmatmul.mubr.f32.gmra.mxu0 %v953
        %v4540 = vpop.f32.mrf.mxu0
        %v4541 = vadd.f32 %v4156, %v4540
        %v4542 = vpop.f32.mrf.mxu0
        %4543 = vmatprep.mubr.f32.mxu0 %v970
        %4544 = vmatmul.mubr.f32.gmra.mxu0 %v969
        %v4545 = vpop.f32.mrf.mxu0
        %v4546 = vadd.f32 %v4161, %v4545
        %v4547 = vpop.f32.mrf.mxu0
        %4548 = vmatprep.mubr.f32.mxu0 %v986
        %4549 = vmatmul.mubr.f32.gmra.mxu0 %v985
        %v4550 = vpop.f32.mrf.mxu0
        %v4551 = vadd.f32 %v4166, %v4550
        %v4552 = vpop.f32.mrf.mxu0
        %4553 = vmatprep.mubr.f32.mxu0 %v1002
        %4554 = vmatmul.mubr.f32.gmra.mxu0 %v1001
        %v4555 = vpop.f32.mrf.mxu0
        %v4556 = vadd.f32 %v4171, %v4555
        %v4557 = vpop.f32.mrf.mxu0
        %4558 = vmatprep.mubr.f32.mxu0 %v1018
        %4559 = vmatmul.mubr.f32.gmra.mxu0 %v1017
        %v4560 = vpop.f32.mrf.mxu0
        %v4561 = vadd.f32 %v4176, %v4560
        %v4562 = vpop.f32.mrf.mxu0
        %4563 = vmatprep.mubr.f32.mxu0 %v1034
        %4564 = vmatmul.mubr.f32.gmra.mxu0 %v1033
        %v4565 = vpop.f32.mrf.mxu0
        %v4566 = vadd.f32 %v4181, %v4565
        %v4567 = vpop.f32.mrf.mxu0
        %4568 = vmatprep.mubr.f32.mxu0 %v1050
        %4569 = vmatmul.mubr.f32.gmra.mxu0 %v1049
        %v4570 = vpop.f32.mrf.mxu0
        %v4571 = vadd.f32 %v4186, %v4570
        %v4572 = vpop.f32.mrf.mxu0
        %4573 = vmatprep.mubr.f32.mxu0 %v1066
        %4574 = vmatmul.mubr.f32.gmra.mxu0 %v1065
        %v4575 = vpop.f32.mrf.mxu0
        %v4576 = vadd.f32 %v4191, %v4575
        %v4577 = vpop.f32.mrf.mxu0
        %4578 = vmatprep.mubr.f32.mxu0 %v1082
        %4579 = vmatmul.mubr.f32.gmra.mxu0 %v1081
        %v4580 = vpop.f32.mrf.mxu0
        %v4581 = vadd.f32 %v4196, %v4580
        %v4582 = vpop.f32.mrf.mxu0
        %4583 = vmatprep.mubr.f32.mxu0 %v1098
        %4584 = vmatmul.mubr.f32.gmra.mxu0 %v1097
        %v4585 = vpop.f32.mrf.mxu0
        %v4586 = vadd.f32 %v4201, %v4585
        %v4587 = vpop.f32.mrf.mxu0
        %4588 = vmatprep.mubr.f32.mxu0 %v1114
        %4589 = vmatmul.mubr.f32.gmra.mxu0 %v1113
        %v4590 = vpop.f32.mrf.mxu0
        %v4591 = vadd.f32 %v4206, %v4590
        %v4592 = vpop.f32.mrf.mxu0
        %4593 = vmatprep.mubr.f32.mxu0 %v1130
        %4594 = vmatmul.mubr.f32.gmra.mxu0 %v1129
        %v4595 = vpop.f32.mrf.mxu0
        %v4596 = vadd.f32 %v4211, %v4595
        %v4597 = vpop.f32.mrf.mxu0
        %4598 = vmatprep.mubr.f32.mxu0 %v1146
        %4599 = vmatmul.mubr.f32.gmra.mxu0 %v1145
        %v4600 = vpop.f32.mrf.mxu0
        %v4601 = vadd.f32 %v4216, %v4600
        %v4602 = vpop.f32.mrf.mxu0
        %4603 = vmatprep.mubr.f32.mxu0 %v1162
        %4604 = vmatmul.mubr.f32.gmra.mxu0 %v1161
        %v4605 = vpop.f32.mrf.mxu0
        %v4606 = vadd.f32 %v4221, %v4605
        %v4607 = vpop.f32.mrf.mxu0
        %4608 = vmatprep.mubr.f32.mxu0 %v1178
        %4609 = vmatmul.mubr.f32.gmra.mxu0 %v1177
        %v4610 = vpop.f32.mrf.mxu0
        %v4611 = vadd.f32 %v4226, %v4610
        %v4612 = vpop.f32.mrf.mxu0
        %4613 = vmatprep.mubr.f32.mxu0 %v1194
        %4614 = vmatmul.mubr.f32.gmra.mxu0 %v1193
        %v4615 = vpop.f32.mrf.mxu0
        %v4616 = vadd.f32 %v4231, %v4615
        %v4617 = vpop.f32.mrf.mxu0
        %4618 = vmatprep.mubr.f32.mxu0 %v1210
        %4619 = vmatmul.mubr.f32.gmra.mxu0 %v1209
        %v4620 = vpop.f32.mrf.mxu0
        %v4621 = vadd.f32 %v4236, %v4620
        %v4622 = vpop.f32.mrf.mxu0
        %4623 = vmatprep.mubr.f32.mxu0 %v1226
        %4624 = vmatmul.mubr.f32.gmra.mxu0 %v1225
        %v4625 = vpop.f32.mrf.mxu0
        %v4626 = vadd.f32 %v4241, %v4625
        %v4627 = vpop.f32.mrf.mxu0
        %4628 = vmatprep.mubr.f32.mxu0 %v1242
        %4629 = vmatmul.mubr.f32.gmra.mxu0 %v1241
        %v4630 = vpop.f32.mrf.mxu0
        %v4631 = vadd.f32 %v4246, %v4630
        %v4632 = vpop.f32.mrf.mxu0
        %4633 = vmatprep.mubr.f32.mxu0 %v1258
        %4634 = vmatmul.mubr.f32.gmra.mxu0 %v1257
        %v4635 = vpop.f32.mrf.mxu0
        %v4636 = vadd.f32 %v4251, %v4635
        %v4637 = vpop.f32.mrf.mxu0
        %4638 = vmatprep.mubr.f32.mxu0 %v1274
        %4639 = vmatmul.mubr.f32.gmra.mxu0 %v1273
        %v4640 = vpop.f32.mrf.mxu0
        %v4641 = vadd.f32 %v4256, %v4640
        %v4642 = vpop.f32.mrf.mxu0
        %4643 = vmatprep.mubr.f32.mxu0 %v1290
        %4644 = vmatmul.mubr.f32.gmra.mxu0 %v1289
        %v4645 = vpop.f32.mrf.mxu0
        %v4646 = vadd.f32 %v4261, %v4645
        %v4647 = vpop.f32.mrf.mxu0
        %4648 = vmatprep.mubr.f32.mxu0 %v1306
        %4649 = vmatmul.mubr.f32.gmra.mxu0 %v1305
        %v4650 = vpop.f32.mrf.mxu0
        %v4651 = vadd.f32 %v4266, %v4650
        %v4652 = vpop.f32.mrf.mxu0
        %4653 = vmatprep.mubr.f32.mxu0 %v1322
        %4654 = vmatmul.mubr.f32.gmra.mxu0 %v1321
        %v4655 = vpop.f32.mrf.mxu0
        %v4656 = vadd.f32 %v4271, %v4655
        %v4657 = vpop.f32.mrf.mxu0
        %4658 = vdwg.mxu0
        %v4659 = vld [vmem:[#allocation7] sm:$0xff]
        %v4660 = vld [vmem:[#allocation7 + $0x8] sm:$0xff]
        %v4661 = vld [vmem:[#allocation7 + $0x10] sm:$0xff]
        %v4662 = vld [vmem:[#allocation7 + $0x18] sm:$0xff]
        %v4663 = vld [vmem:[#allocation7 + $0x20] sm:$0xff]
        %v4664 = vld [vmem:[#allocation7 + $0x28] sm:$0xff]
        %v4665 = vld [vmem:[#allocation7 + $0x30] sm:$0xff]
        %v4666 = vld [vmem:[#allocation7 + $0x38] sm:$0xff]
        %v4667 = vld [vmem:[#allocation7 + $0x40] sm:$0xff]
        %v4668 = vld [vmem:[#allocation7 + $0x48] sm:$0xff]
        %v4669 = vld [vmem:[#allocation7 + $0x50] sm:$0xff]
        %v4670 = vld [vmem:[#allocation7 + $0x58] sm:$0xff]
        %v4671 = vld [vmem:[#allocation7 + $0x60] sm:$0xff]
        %v4672 = vld [vmem:[#allocation7 + $0x68] sm:$0xff]
        %v4673 = vld [vmem:[#allocation7 + $0x70] sm:$0xff]
        %v4674 = vld [vmem:[#allocation7 + $0x78] sm:$0xff]
        %v4675 = vld [vmem:[#allocation7 + $0x80] sm:$0xff]
        %v4676 = vld [vmem:[#allocation7 + $0x88] sm:$0xff]
        %v4677 = vld [vmem:[#allocation7 + $0x90] sm:$0xff]
        %v4678 = vld [vmem:[#allocation7 + $0x98] sm:$0xff]
        %v4679 = vld [vmem:[#allocation7 + $0xa0] sm:$0xff]
        %v4680 = vld [vmem:[#allocation7 + $0xa8] sm:$0xff]
        %v4681 = vld [vmem:[#allocation7 + $0xb0] sm:$0xff]
        %v4682 = vld [vmem:[#allocation7 + $0xb8] sm:$0xff]
        %v4683 = vld [vmem:[#allocation7 + $0xc0] sm:$0xff]
        %v4684 = vld [vmem:[#allocation7 + $0xc8] sm:$0xff]
        %v4685 = vld [vmem:[#allocation7 + $0xd0] sm:$0xff]
        %v4686 = vld [vmem:[#allocation7 + $0xd8] sm:$0xff]
        %v4687 = vld [vmem:[#allocation7 + $0xe0] sm:$0xff]
        %v4688 = vld [vmem:[#allocation7 + $0xe8] sm:$0xff]
        %v4689 = vld [vmem:[#allocation7 + $0xf0] sm:$0xff]
        %v4690 = vld [vmem:[#allocation7 + $0xf8] sm:$0xff]
        %v4691 = vld [vmem:[#allocation7 + $0x100] sm:$0xff]
        %v4692 = vld [vmem:[#allocation7 + $0x108] sm:$0xff]
        %v4693 = vld [vmem:[#allocation7 + $0x110] sm:$0xff]
        %v4694 = vld [vmem:[#allocation7 + $0x118] sm:$0xff]
        %v4695 = vld [vmem:[#allocation7 + $0x120] sm:$0xff]
        %v4696 = vld [vmem:[#allocation7 + $0x128] sm:$0xff]
        %v4697 = vld [vmem:[#allocation7 + $0x130] sm:$0xff]
        %v4698 = vld [vmem:[#allocation7 + $0x138] sm:$0xff]
        %v4699 = vld [vmem:[#allocation7 + $0x140] sm:$0xff]
        %v4700 = vld [vmem:[#allocation7 + $0x148] sm:$0xff]
        %v4701 = vld [vmem:[#allocation7 + $0x150] sm:$0xff]
        %v4702 = vld [vmem:[#allocation7 + $0x158] sm:$0xff]
        %v4703 = vld [vmem:[#allocation7 + $0x160] sm:$0xff]
        %v4704 = vld [vmem:[#allocation7 + $0x168] sm:$0xff]
        %v4705 = vld [vmem:[#allocation7 + $0x170] sm:$0xff]
        %v4706 = vld [vmem:[#allocation7 + $0x178] sm:$0xff]
        %v4707 = vld [vmem:[#allocation7 + $0x180] sm:$0xff]
        %v4708 = vld [vmem:[#allocation7 + $0x188] sm:$0xff]
        %v4709 = vld [vmem:[#allocation7 + $0x190] sm:$0xff]
        %v4710 = vld [vmem:[#allocation7 + $0x198] sm:$0xff]
        %v4711 = vld [vmem:[#allocation7 + $0x1a0] sm:$0xff]
        %v4712 = vld [vmem:[#allocation7 + $0x1a8] sm:$0xff]
        %v4713 = vld [vmem:[#allocation7 + $0x1b0] sm:$0xff]
        %v4714 = vld [vmem:[#allocation7 + $0x1b8] sm:$0xff]
        %v4715 = vld [vmem:[#allocation7 + $0x1c0] sm:$0xff]
        %v4716 = vld [vmem:[#allocation7 + $0x1c8] sm:$0xff]
        %v4717 = vld [vmem:[#allocation7 + $0x1d0] sm:$0xff]
        %v4718 = vld [vmem:[#allocation7 + $0x1d8] sm:$0xff]
        %v4719 = vld [vmem:[#allocation7 + $0x1e0] sm:$0xff]
        %v4720 = vld [vmem:[#allocation7 + $0x1e8] sm:$0xff]
        %v4721 = vld [vmem:[#allocation7 + $0x1f0] sm:$0xff]
        %v4722 = vld [vmem:[#allocation7 + $0x1f8] sm:$0xff]
        %v4723 = vmul.f32 %v4341, %v4659
        %v4724 = vmul.f32 %v4346, %v4660
        %v4725 = vmul.f32 %v4351, %v4661
        %v4726 = vmul.f32 %v4356, %v4662
        %v4727 = vmul.f32 %v4361, %v4663
        %v4728 = vmul.f32 %v4366, %v4664
        %v4729 = vmul.f32 %v4371, %v4665
        %v4730 = vmul.f32 %v4376, %v4666
        %v4731 = vmul.f32 %v4381, %v4667
        %v4732 = vmul.f32 %v4386, %v4668
        %v4733 = vmul.f32 %v4391, %v4669
        %v4734 = vmul.f32 %v4396, %v4670
        %v4735 = vmul.f32 %v4401, %v4671
        %v4736 = vmul.f32 %v4406, %v4672
        %v4737 = vmul.f32 %v4411, %v4673
        %v4738 = vmul.f32 %v4416, %v4674
        %v4739 = vmul.f32 %v4421, %v4675
        %v4740 = vmul.f32 %v4426, %v4676
        %v4741 = vmul.f32 %v4431, %v4677
        %v4742 = vmul.f32 %v4436, %v4678
        %v4743 = vmul.f32 %v4441, %v4679
        %v4744 = vmul.f32 %v4446, %v4680
        %v4745 = vmul.f32 %v4451, %v4681
        %v4746 = vmul.f32 %v4456, %v4682
        %v4747 = vmul.f32 %v4461, %v4683
        %v4748 = vmul.f32 %v4466, %v4684
        %v4749 = vmul.f32 %v4471, %v4685
        %v4750 = vmul.f32 %v4476, %v4686
        %v4751 = vmul.f32 %v4481, %v4687
        %v4752 = vmul.f32 %v4486, %v4688
        %v4753 = vmul.f32 %v4491, %v4689
        %v4754 = vmul.f32 %v4496, %v4690
        %v4755 = vmul.f32 %v4501, %v4691
        %v4756 = vmul.f32 %v4506, %v4692
        %v4757 = vmul.f32 %v4511, %v4693
        %v4758 = vmul.f32 %v4516, %v4694
        %v4759 = vmul.f32 %v4521, %v4695
        %v4760 = vmul.f32 %v4526, %v4696
        %v4761 = vmul.f32 %v4531, %v4697
        %v4762 = vmul.f32 %v4536, %v4698
        %v4763 = vmul.f32 %v4541, %v4699
        %v4764 = vmul.f32 %v4546, %v4700
        %v4765 = vmul.f32 %v4551, %v4701
        %v4766 = vmul.f32 %v4556, %v4702
        %v4767 = vmul.f32 %v4561, %v4703
        %v4768 = vmul.f32 %v4566, %v4704
        %v4769 = vmul.f32 %v4571, %v4705
        %v4770 = vmul.f32 %v4576, %v4706
        %v4771 = vmul.f32 %v4581, %v4707
        %v4772 = vmul.f32 %v4586, %v4708
        %v4773 = vmul.f32 %v4591, %v4709
        %v4774 = vmul.f32 %v4596, %v4710
        %v4775 = vmul.f32 %v4601, %v4711
        %v4776 = vmul.f32 %v4606, %v4712
        %v4777 = vmul.f32 %v4611, %v4713
        %v4778 = vmul.f32 %v4616, %v4714
        %v4779 = vmul.f32 %v4621, %v4715
        %v4780 = vmul.f32 %v4626, %v4716
        %v4781 = vmul.f32 %v4631, %v4717
        %v4782 = vmul.f32 %v4636, %v4718
        %v4783 = vmul.f32 %v4641, %v4719
        %v4784 = vmul.f32 %v4646, %v4720
        %v4785 = vmul.f32 %v4651, %v4721
        %v4786 = vmul.f32 %v4656, %v4722
        %v4787 = vld [vmem:[#allocation8] sm:$0xff]
        %v4788 = vld [vmem:[#allocation8 + $0x8] sm:$0xff]
        %v4789 = vld [vmem:[#allocation8 + $0x10] sm:$0xff]
        %v4790 = vld [vmem:[#allocation8 + $0x18] sm:$0xff]
        %4791 = vmatprep.subr.mxu0 0.0
        %4792 = vmatpush1.msra.mxu0 %v4738
        %4793 = vmatprep.subr.mxu0 0.0
        %4794 = vmatpush1.msra.mxu0 %v4737
        %4795 = vmatprep.subr.mxu0 0.0
        %4796 = vmatpush1.msra.mxu0 %v4736
        %4797 = vmatprep.subr.mxu0 0.0
        %4798 = vmatpush1.msra.mxu0 %v4735
        %4799 = vmatprep.subr.mxu0 0.0
        %4800 = vmatpush1.msra.mxu0 %v4734
        %4801 = vmatprep.subr.mxu0 0.0
        %4802 = vmatpush1.msra.mxu0 %v4733
        %4803 = vmatprep.subr.mxu0 0.0
        %4804 = vmatpush1.msra.mxu0 %v4732
        %4805 = vmatprep.subr.mxu0 0.0
        %4806 = vmatpush1.msra.mxu0 %v4731
        %4807 = vmatprep.subr.mxu0 0.0
        %4808 = vmatpush1.msra.mxu0 %v4730
        %4809 = vmatprep.subr.mxu0 0.0
        %4810 = vmatpush1.msra.mxu0 %v4729
        %4811 = vmatprep.subr.mxu0 0.0
        %4812 = vmatpush1.msra.mxu0 %v4728
        %4813 = vmatprep.subr.mxu0 0.0
        %4814 = vmatpush1.msra.mxu0 %v4727
        %4815 = vmatprep.subr.mxu0 0.0
        %4816 = vmatpush1.msra.mxu0 %v4726
        %4817 = vmatprep.subr.mxu0 0.0
        %4818 = vmatpush1.msra.mxu0 %v4725
        %4819 = vmatprep.subr.mxu0 0.0
        %4820 = vmatpush1.msra.mxu0 %v4724
        %4821 = vmatprep.subr.mxu0 0.0
        %4822 = vmatpush1.msra.mxu0 %v4723
        %4823 = vmatprep.subr.mxu0 0.0
        %4824 = vmatpush2.msra.mxu0 %v4754
        %4825 = vmatprep.subr.mxu0 0.0
        %4826 = vmatpush2.msra.mxu0 %v4753
        %4827 = vmatprep.subr.mxu0 0.0
        %4828 = vmatpush2.msra.mxu0 %v4752
        %4829 = vmatprep.subr.mxu0 0.0
        %4830 = vmatpush2.msra.mxu0 %v4751
        %4831 = vmatprep.subr.mxu0 0.0
        %4832 = vmatpush2.msra.mxu0 %v4750
        %4833 = vmatprep.subr.mxu0 0.0
        %4834 = vmatpush2.msra.mxu0 %v4749
        %4835 = vmatprep.subr.mxu0 0.0
        %4836 = vmatpush2.msra.mxu0 %v4748
        %4837 = vmatprep.subr.mxu0 0.0
        %4838 = vmatpush2.msra.mxu0 %v4747
        %4839 = vmatprep.subr.mxu0 0.0
        %4840 = vmatpush2.msra.mxu0 %v4746
        %4841 = vmatprep.subr.mxu0 0.0
        %4842 = vmatpush2.msra.mxu0 %v4745
        %4843 = vmatprep.subr.mxu0 0.0
        %4844 = vmatpush2.msra.mxu0 %v4744
        %4845 = vmatprep.subr.mxu0 0.0
        %4846 = vmatpush2.msra.mxu0 %v4743
        %4847 = vmatprep.subr.mxu0 0.0
        %4848 = vmatpush2.msra.mxu0 %v4742
        %4849 = vmatprep.subr.mxu0 0.0
        %4850 = vmatpush2.msra.mxu0 %v4741
        %4851 = vmatprep.subr.mxu0 0.0
        %4852 = vmatpush2.msra.mxu0 %v4740
        %4853 = vmatprep.subr.mxu0 0.0
        %4854 = vmatpush2.msra.mxu0 %v4739
        %4855 = vmatprep.mubr.f32.mxu0 %v4788
        %4856 = vmatmul.mubr.f32.gmra.mxu0 %v4787
        %v4857 = vpop.f32.mrf.mxu0
        %v4858 = vadd.f32 0.0, %v4857
        %v4859 = vpop.f32.mrf.mxu0
        %4860 = vdwg.mxu0
        %4861 = vmatprep.subr.mxu0 0.0
        %4862 = vmatpush1.msra.mxu0 %v4770
        %4863 = vmatprep.subr.mxu0 0.0
        %4864 = vmatpush1.msra.mxu0 %v4769
        %4865 = vmatprep.subr.mxu0 0.0
        %4866 = vmatpush1.msra.mxu0 %v4768
        %4867 = vmatprep.subr.mxu0 0.0
        %4868 = vmatpush1.msra.mxu0 %v4767
        %4869 = vmatprep.subr.mxu0 0.0
        %4870 = vmatpush1.msra.mxu0 %v4766
        %4871 = vmatprep.subr.mxu0 0.0
        %4872 = vmatpush1.msra.mxu0 %v4765
        %4873 = vmatprep.subr.mxu0 0.0
        %4874 = vmatpush1.msra.mxu0 %v4764
        %4875 = vmatprep.subr.mxu0 0.0
        %4876 = vmatpush1.msra.mxu0 %v4763
        %4877 = vmatprep.subr.mxu0 0.0
        %4878 = vmatpush1.msra.mxu0 %v4762
        %4879 = vmatprep.subr.mxu0 0.0
        %4880 = vmatpush1.msra.mxu0 %v4761
        %4881 = vmatprep.subr.mxu0 0.0
        %4882 = vmatpush1.msra.mxu0 %v4760
        %4883 = vmatprep.subr.mxu0 0.0
        %4884 = vmatpush1.msra.mxu0 %v4759
        %4885 = vmatprep.subr.mxu0 0.0
        %4886 = vmatpush1.msra.mxu0 %v4758
        %4887 = vmatprep.subr.mxu0 0.0
        %4888 = vmatpush1.msra.mxu0 %v4757
        %4889 = vmatprep.subr.mxu0 0.0
        %4890 = vmatpush1.msra.mxu0 %v4756
        %4891 = vmatprep.subr.mxu0 0.0
        %4892 = vmatpush1.msra.mxu0 %v4755
        %4893 = vmatprep.subr.mxu0 0.0
        %4894 = vmatpush2.msra.mxu0 %v4786
        %4895 = vmatprep.subr.mxu0 0.0
        %4896 = vmatpush2.msra.mxu0 %v4785
        %4897 = vmatprep.subr.mxu0 0.0
        %4898 = vmatpush2.msra.mxu0 %v4784
        %4899 = vmatprep.subr.mxu0 0.0
        %4900 = vmatpush2.msra.mxu0 %v4783
        %4901 = vmatprep.subr.mxu0 0.0
        %4902 = vmatpush2.msra.mxu0 %v4782
        %4903 = vmatprep.subr.mxu0 0.0
        %4904 = vmatpush2.msra.mxu0 %v4781
        %4905 = vmatprep.subr.mxu0 0.0
        %4906 = vmatpush2.msra.mxu0 %v4780
        %4907 = vmatprep.subr.mxu0 0.0
        %4908 = vmatpush2.msra.mxu0 %v4779
        %4909 = vmatprep.subr.mxu0 0.0
        %4910 = vmatpush2.msra.mxu0 %v4778
        %4911 = vmatprep.subr.mxu0 0.0
        %4912 = vmatpush2.msra.mxu0 %v4777
        %4913 = vmatprep.subr.mxu0 0.0
        %4914 = vmatpush2.msra.mxu0 %v4776
        %4915 = vmatprep.subr.mxu0 0.0
        %4916 = vmatpush2.msra.mxu0 %v4775
        %4917 = vmatprep.subr.mxu0 0.0
        %4918 = vmatpush2.msra.mxu0 %v4774
        %4919 = vmatprep.subr.mxu0 0.0
        %4920 = vmatpush2.msra.mxu0 %v4773
        %4921 = vmatprep.subr.mxu0 0.0
        %4922 = vmatpush2.msra.mxu0 %v4772
        %4923 = vmatprep.subr.mxu0 0.0
        %4924 = vmatpush2.msra.mxu0 %v4771
        %4925 = vmatprep.mubr.f32.mxu0 %v4790
        %4926 = vmatmul.mubr.f32.gmra.mxu0 %v4789
        %v4927 = vpop.f32.mrf.mxu0
        %v4928 = vadd.f32 %v4858, %v4927
        %v4929 = vpop.f32.mrf.mxu0
        %4930 = vdwg.mxu0
        %v4931 = vlaneseq
        %v4932 = vand.u32 %v4931, 127
        %vm4933 = vcmp.ge.s32.totalorder %v4932, 12
        %vm4934 = vcmp.lt.s32.totalorder %v4932, 28
        %vm4935 = vmand %vm4933, %vm4934
        %v4936 = vld [vmem:[#allocation10] sm:$0x1]
        %v4938 = vlaneseq
        %v4939 = vshrl.u32 %v4938, 7
        %v4940 = vsub.s32 0, %v4939
        %v4941 = vrot.slane %v4936, %v4940
        %v4943 = vadd.f32 %v4928, %v4941
        %v4944 = vtanh.pop %v4943
        %v4945 = vsel %vm4935, %v4944, %v4928
        %4946 = vst [vmem:[%s297] sm:$0xff] %v4945
        %s4947 = sand.u32 %s142, 1
        %s4948 = scalar_lea.sflag [#allocation4], %s4947
        %s4949 = sand.u32 %s142, 1
        %s4950 = smul.addr %s4949, 8
        %s4951 = scalar_lea.vmem [#allocation11], %s4950
        // Predicated region
        $region61: #{tpu_custom_call.1} parent=39 // pred_check
          %p4952 = pneg %p152
        $region62: #{tpu_custom_call.1} parent=39 // pred_check_branch
          %4954 = sbr.rel (%p4952) target = $region64
        $region63: #{tpu_custom_call.1} parent=39 // pred_region
          %s4956 = ssub.s32 128, 128
          %4957 = vsyncadd %s4948, %s4956
          %s4958 = smul.addr %s24, 128
          %s4959 = scalar_lea.hbm %s5, %s4958
          %s4961 = sshll.u32 %s4951, 4
          %s4962 = int_to_ptr.vmem [resolvable:$true] %s4961
          %4964 = dma.vmem_to_hbm [thread:$0]  %s4962, 128, %s4959, %s4948
        $region64: #{tpu_custom_call.1} parent=39 // pred_fallthru
          _
      $region40: #{tpu_custom_call.1} parent=5 // pred_fallthru
        _
      %p4965 = scmp.le.s32.totalorder 2, %s19
      // Predicated region
      $region65: #{tpu_custom_call.1} parent=5 // pred_check
        %p4966 = pneg %p4965
      $region66: #{tpu_custom_call.1} parent=5 // pred_check_branch
        %4968 = sbr.rel (%p4966) target = $region68
      $region67: #{tpu_custom_call.1} parent=5 // pred_region
        %s4969 = ssub.s32 %s19, 2
        // Predicated region
        $region69: #{tpu_custom_call.1} parent=67 // pred_check
          %p4970 = pneg %p158
        $region70: #{tpu_custom_call.1} parent=67 // pred_check_branch
          %4972 = sbr.rel (%p4970) target = $region72
        $region71: #{tpu_custom_call.1} parent=67 // pred_region
          %s4973 = sand.u32 %s143, 1
          %s4974 = scalar_lea.sflag [#allocation4], %s4973
          %s4975 = sand.u32 %s143, 1
          %s4976 = smul.addr %s4975, 8
          %s4977 = scalar_lea.vmem [#allocation11], %s4976
          %4978 = dma.done %s4974, 128
        $region72: #{tpu_custom_call.1} parent=67 // pred_fallthru
          _
      $region68: #{tpu_custom_call.1} parent=5 // pred_fallthru
        _
    $region6: #{tpu_custom_call.1} parent=1 // loop_footer
      %s23 = sadd.s32 1, %s19
    $region7: #{tpu_custom_call.1} parent=1 // loop_footer_branch
      %18 = sbr.rel target = $region3
    $region8: #{tpu_custom_call.1} parent=1 // loop_exit
      _
    %4979 = vsyncpa [#allocation3], 1
    %s4980 = scalar_lea.sflag [#allocation3], 1
    %4981 = vsyncpa %s4980, 1
    %4982 = vsyncpa [#allocation6], 1
    %4983 = vsyncpa [#allocation9], 1
    %4984 = vsyncpa [#allocation4], 1
    %s4985 = scalar_lea.sflag [#allocation4], 1
    %4986 = vsyncpa %s4985, 1

</llo_original>
